<compile_context>
chip_gen: v7x
topology: tpu7x:2x2x1
jax: 0.10.0
libtpu: 0.0.40
codegen_flags: <defaults>
</compile_context>

<pallas_src>
import functools

import jax
import jax.numpy as jnp
from jax import lax
from jax.experimental import pallas as pl
from jax.experimental.pallas import tpu as pltpu

LRELU_SLOPE = 0.2
BN_EPS = 1e-5
KW = 4
PADW = 1

_VMEM_LIMIT_CACHE = [None]


def _vmem_limit_bytes():
    """Generation-aware scoped-VMEM limit (v7x: 64 MiB physical, v5e/v6e: 128 MiB)."""
    if _VMEM_LIMIT_CACHE[0] is None:
        try:
            cap = int(pltpu.get_tpu_info().vmem_capacity_bytes)
        except Exception:
            cap = 64 << 20
        _VMEM_LIMIT_CACHE[0] = max(32 << 20, min((cap * 3) // 4, 96 << 20))
    return _VMEM_LIMIT_CACHE[0]


# ------------------------------- Pallas kernels -------------------------------

def _lrelu(x):
    return jnp.where(x >= 0, x, LRELU_SLOPE * x)


def _matmul_bias_kernel(wt_ref, p_ref, b_ref, o_ref, *, apply_lrelu):
    # (Cout_p, K)bf16 @ (K, TP)bf16 -> f32 acc, + bias, optional LeakyReLU.
    acc = jnp.dot(wt_ref[...], p_ref[...], preferred_element_type=jnp.float32)
    acc = acc + b_ref[...]                       # (Cout_p, 1) broadcast along lanes
    if apply_lrelu:
        acc = _lrelu(acc)
    o_ref[...] = acc.astype(o_ref.dtype)


def _matmul_bn_lrelu_kernel(wt_ref, p_ref, g_ref, beta_ref, o_ref, *, inv_p):
    # Single-tile path: conv + BatchNorm (training-mode batch stats) + LeakyReLU.
    # Padded patch columns are exactly zero, so they contribute nothing to the
    # unmasked sums; dividing by the valid count gives exact batch statistics
    # (no iota/mask vregs -> no spills).  var = E[x^2] - mean^2.
    acc = jnp.dot(wt_ref[...], p_ref[...], preferred_element_type=jnp.float32)
    mean = jnp.sum(acc, axis=1, keepdims=True) * inv_p
    ex2 = jnp.sum(acc * acc, axis=1, keepdims=True) * inv_p
    var = jnp.maximum(ex2 - mean * mean, 0.0)
    scale = lax.rsqrt(var + BN_EPS) * g_ref[...]
    shift = beta_ref[...] - mean * scale
    o_ref[...] = _lrelu(acc * scale + shift).astype(o_ref.dtype)


def _conv_stats_kernel(wt_ref, p_ref, z_ref, s_ref, ss_ref):
    # Tiled-P path: conv output (bf16) + per-channel partial sum / sum-of-squares
    # accumulated across the grid (stats blocks stay resident: constant index map).
    acc = jnp.dot(wt_ref[...], p_ref[...], preferred_element_type=jnp.float32)
    z_ref[...] = acc.astype(z_ref.dtype)

    @pl.when(pl.program_id(0) == 0)
    def _():
        s_ref[...] = jnp.zeros_like(s_ref)
        ss_ref[...] = jnp.zeros_like(ss_ref)

    s_ref[...] += jnp.sum(acc, axis=1, keepdims=True)
    ss_ref[...] += jnp.sum(acc * acc, axis=1, keepdims=True)


def _bn_lrelu_apply_kernel(z_ref, scale_ref, shift_ref, o_ref):
    # Elementwise finalize for the tiled-P path: affine (folded BN) + LeakyReLU.
    y = z_ref[...].astype(jnp.float32) * scale_ref[...] + shift_ref[...]
    o_ref[...] = _lrelu(y).astype(o_ref.dtype)


# --------------------------------- glue (JAX) ---------------------------------

def _round_up(x, m):
    return ((x + m - 1) // m) * m


def _pick_tile_p(p, k_dim, cout_p, budget_bytes, force_max_tile_p=None):
    """Choose the lane tile over P.

    Prefer a single tile covering all of round_up(P,128) whenever the
    double-buffered bf16 patch tile + output tile + weights fit the VMEM budget
    (so BN can be fused in one kernel).  Otherwise pick the largest fitting
    divisor of round_up(P,128) (<=127 padded columns), preferring an even tile
    count for balanced megacore sharding on v7x.
    """
    p_pad = _round_up(p, 128)
    if force_max_tile_p is None:
        cap = p_pad
    else:
        cap = min(max(int(force_max_tile_p), 128), p_pad)

    def fits(tp):
        patch = k_dim * tp * 2 * 2          # bf16 patch tile, double buffered
        outb = cout_p * tp * 4 * 2          # worst-case f32 output tile, double buffered
        wb = cout_p * k_dim * 2 * 2         # resident bf16 weights
        return patch + outb + wb <= budget_bytes

    units = p_pad // 128
    best = 128
    best_even = None
    for d in range(1, units + 1):
        if units % d:
            continue
        tp = d * 128
        if tp > cap or not fits(tp):
            continue
        best = max(best, tp)
        if (units // d) % 2 == 0:
            best_even = tp if best_even is None else max(best_even, tp)

    if best != p_pad and best_even is not None and best_even * 2 >= best:
        tile_p = best_even                  # even n_tiles (v7x megacore balance)
    else:
        tile_p = best
    return tile_p, p_pad // tile_p, p_pad


def _im2col_T(x_cnhw, k, stride, pad):
    """(C, N, H, W) -> transposed im2col patches (K, P) in bf16, K order (kh, kw, cin),
    P order (n, ho, wo).  Channel-major keeps P on the lane axis downstream."""
    x = x_cnhw.astype(jnp.bfloat16)
    c, n, h, w = x.shape
    xp = jnp.pad(x, ((0, 0), (0, 0), (pad, pad), (pad, pad)))
    ho = (h + 2 * pad - k) // stride + 1
    wo = (w + 2 * pad - k) // stride + 1
    cols = []
    for i in range(k):
        for j in range(k):
            cols.append(xp[:, :, i:i + stride * (ho - 1) + 1:stride,
                              j:j + stride * (wo - 1) + 1:stride])
    pat = jnp.stack(cols, axis=0)                    # (k*k, C, N, Ho, Wo)
    return pat.reshape(k * k * c, n * ho * wo), (n, ho, wo)


def _pallas_matmul(kernel_fn, wt, patT, extras, out_dtype, tile_p, n_tiles, p_pad,
                   vmem_limit):
    cout_p, k_dim = wt.shape
    in_specs = [
        pl.BlockSpec((cout_p, k_dim), lambda i: (0, 0)),   # weights stay resident
        pl.BlockSpec((k_dim, tile_p), lambda i: (0, i)),   # patch tile streams over P
    ]
    in_specs += [pl.BlockSpec(e.shape, lambda i: (0, 0)) for e in extras]
    return pl.pallas_call(
        kernel_fn,
        out_shape=jax.ShapeDtypeStruct((cout_p, p_pad), out_dtype),
        grid=(n_tiles,),
        in_specs=in_specs,
        out_specs=pl.BlockSpec((cout_p, tile_p), lambda i: (0, i)),
        compiler_params=pltpu.CompilerParams(
            dimension_semantics=("parallel",),
            vmem_limit_bytes=vmem_limit),
    )(wt, patT, *extras)


def _pallas_conv_stats(wt, patT, tile_p, n_tiles, p_pad, vmem_limit):
    cout_p, k_dim = wt.shape
    return pl.pallas_call(
        _conv_stats_kernel,
        out_shape=(jax.ShapeDtypeStruct((cout_p, p_pad), jnp.bfloat16),
                   jax.ShapeDtypeStruct((cout_p, 1), jnp.float32),
                   jax.ShapeDtypeStruct((cout_p, 1), jnp.float32)),
        grid=(n_tiles,),
        in_specs=[pl.BlockSpec((cout_p, k_dim), lambda i: (0, 0)),
                  pl.BlockSpec((k_dim, tile_p), lambda i: (0, i))],
        out_specs=(pl.BlockSpec((cout_p, tile_p), lambda i: (0, i)),
                   pl.BlockSpec((cout_p, 1), lambda i: (0, 0)),
                   pl.BlockSpec((cout_p, 1), lambda i: (0, 0))),
        compiler_params=pltpu.CompilerParams(
            dimension_semantics=("arbitrary",),      # stats accumulate over the grid
            vmem_limit_bytes=vmem_limit),
    )(wt, patT)


def _pallas_bn_apply(z, scale, shift, tile_p, n_tiles, vmem_limit):
    cout_p, p_pad = z.shape
    return pl.pallas_call(
        _bn_lrelu_apply_kernel,
        out_shape=jax.ShapeDtypeStruct((cout_p, p_pad), jnp.bfloat16),
        grid=(n_tiles,),
        in_specs=[pl.BlockSpec((cout_p, tile_p), lambda i: (0, i)),
                  pl.BlockSpec((cout_p, 1), lambda i: (0, 0)),
                  pl.BlockSpec((cout_p, 1), lambda i: (0, 0))],
        out_specs=pl.BlockSpec((cout_p, tile_p), lambda i: (0, i)),
        compiler_params=pltpu.CompilerParams(
            dimension_semantics=("parallel",),
            vmem_limit_bytes=vmem_limit),
    )(z, scale, shift)


def _conv_block(x_cnhw, layer, vmem_limit, force_max_tile_p=None):
    w = layer["w"]
    cout, cin, kh, _ = w.shape
    stride = layer["stride"]
    kind = layer["kind"]

    patT, (n, ho, wo) = _im2col_T(x_cnhw, kh, stride, PADW)      # (K, P) bf16
    k_dim, p = patT.shape
    cout_p = _round_up(cout, 8)

    budget = (vmem_limit * 3) // 5
    tile_p, n_tiles, p_pad = _pick_tile_p(p, k_dim, cout_p, budget, force_max_tile_p)
    if p_pad != p:
        patT = jnp.pad(patT, ((0, 0), (0, p_pad - p)))           # zero cols, sliced off

    w_mat = jnp.transpose(w, (2, 3, 1, 0)).reshape(k_dim, cout)  # K order (kh, kw, cin)
    if cout_p != cout:
        w_mat = jnp.pad(w_mat, ((0, 0), (0, cout_p - cout)))
    wt = w_mat.T.astype(jnp.bfloat16)                            # (Cout_p, K)

    def pad_vec(v):
        return jnp.pad(v.astype(jnp.float32), (0, cout_p - cout)).reshape(cout_p, 1)

    if kind in ("bias_lrelu", "bias"):
        kfn = functools.partial(_matmul_bias_kernel,
                                apply_lrelu=(kind == "bias_lrelu"))
        out_dtype = jnp.bfloat16 if kind == "bias_lrelu" else jnp.float32
        y = _pallas_matmul(kfn, wt, patT, (pad_vec(layer["b"]),),
                           out_dtype, tile_p, n_tiles, p_pad, vmem_limit)
    elif n_tiles == 1:
        # Whole P in one lane tile -> conv + BN(batch stats) + LeakyReLU fused.
        kfn = functools.partial(_matmul_bn_lrelu_kernel, inv_p=1.0 / p)
        y = _pallas_matmul(kfn, wt, patT,
                           (pad_vec(layer["gamma"]), pad_vec(layer["beta"])),
                           jnp.bfloat16, tile_p, n_tiles, p_pad, vmem_limit)
    else:
        # Tiled over P (large inputs): conv emits bf16 z + in-kernel partial stats,
        # tiny XLA finalize, then a cheap elementwise Pallas pass applies BN+LReLU.
        z, s, ss = _pallas_conv_stats(wt, patT, tile_p, n_tiles, p_pad, vmem_limit)
        mean = s[:cout, 0] / p
        var = jnp.maximum(ss[:cout, 0] / p - mean * mean, 0.0)
        scale = layer["gamma"] * lax.rsqrt(var + BN_EPS)
        shift = layer["beta"] - mean * scale
        y = _pallas_bn_apply(z, pad_vec(scale), pad_vec(shift),
                             tile_p, n_tiles, vmem_limit)

    return y[:cout, :p].reshape(cout, n, ho, wo)                 # next layer's CNHW


def d_nlayers_forward(x_nchw, params, *, force_max_tile_p=None):
    vmem_limit = _vmem_limit_bytes()
    # bf16 before the relayout: halves the entry-transpose HBM bytes.
    x = jnp.transpose(x_nchw.astype(jnp.bfloat16), (1, 0, 2, 3))  # NCHW -> CNHW
    for layer in params["layers"]:
        x = _conv_block(x, layer, vmem_limit, force_max_tile_p)
    return jnp.transpose(x, (1, 0, 2, 3)).astype(jnp.float32)     # -> NCHW


# ------------------------------ parameter setup -------------------------------

def init_params(key, input_nc, ndf=8, n_layers=3):
    """Deterministic synthetic init mirroring D_NLayers.__init__ layer structure."""
    cfgs = [dict(cin=input_nc, cout=ndf, stride=2, kind="bias_lrelu")]
    nf_mult = 1
    for n in range(1, n_layers):
        nf_mult_prev, nf_mult = nf_mult, min(2 ** n, 8)
        cfgs.append(dict(cin=ndf * nf_mult_prev, cout=ndf * nf_mult,
                         stride=2, kind="bn_lrelu"))
    nf_mult_prev, nf_mult = nf_mult, min(2 ** n_layers, 8)
    cfgs.append(dict(cin=ndf * nf_mult_prev, cout=ndf * nf_mult,
                     stride=1, kind="bn_lrelu"))
    cfgs.append(dict(cin=ndf * nf_mult, cout=1, stride=1, kind="bias"))

    layers = []
    for cfg in cfgs:
        key, kw_key, kb_key, kg_key = jax.random.split(key, 4)
        layer = dict(
            kind=cfg["kind"], stride=cfg["stride"],
            w=0.02 * jax.random.normal(kw_key, (cfg["cout"], cfg["cin"], KW, KW),
                                       jnp.float32))
        if cfg["kind"] == "bn_lrelu":
            layer["gamma"] = 1.0 + 0.02 * jax.random.normal(kg_key, (cfg["cout"],),
                                                            jnp.float32)
            layer["beta"] = jnp.zeros((cfg["cout"],), jnp.float32)
        else:
            layer["b"] = 0.01 * jax.random.normal(kb_key, (cfg["cout"],), jnp.float32)
        layers.append(layer)
    return dict(layers=layers)


# ------------------------- pure-JAX reference (check) --------------------------

def reference_forward(x_nchw, params):
    x = x_nchw.astype(jnp.float32)
    for layer in params["layers"]:
        x = lax.conv_general_dilated(
            x, layer["w"], (layer["stride"], layer["stride"]),
            padding=((PADW, PADW), (PADW, PADW)),
            dimension_numbers=("NCHW", "OIHW", "NCHW"),
            precision=lax.Precision.HIGHEST)
        if layer["kind"] in ("bias_lrelu", "bias"):
            x = x + layer["b"][None, :, None, None]
        if layer["kind"] == "bn_lrelu":
            mean = jnp.mean(x, axis=(0, 2, 3), keepdims=True)
            var = jnp.mean(jnp.square(x - mean), axis=(0, 2, 3), keepdims=True)
            x = (x - mean) * lax.rsqrt(var + BN_EPS)
            x = x * layer["gamma"][None, :, None, None] + layer["beta"][None, :, None, None]
        if layer["kind"] in ("bias_lrelu", "bn_lrelu"):
            x = jnp.where(x >= 0, x, LRELU_SLOPE * x)
    return x


# ------------------------------------ main -------------------------------------

if __name__ == "__main__":
    key = jax.random.PRNGKey(0)
    pkey, xkey = jax.random.split(key)

    input_nc, ndf, n_layers = 4, 8, 3
    params = init_params(pkey, input_nc=input_nc, ndf=ndf, n_layers=n_layers)

    # 64x64 is the smallest-ish size that keeps all five layers' spatial dims valid.
    x = jax.random.normal(xkey, (2, input_nc, 64, 64), jnp.float32)
    ref = reference_forward(x, params)

    # Default path: every BN layer hits the fused single-tile conv+BN+LReLU kernel.
    fwd = jax.jit(lambda inp: d_nlayers_forward(inp, params))
    out = jax.block_until_ready(fwd(x))
    assert out.shape == (2, 1, 6, 6), out.shape
    max_err = float(jnp.max(jnp.abs(out - ref)))
    # bf16 MXU operands + bf16 activations give ~1e-2-level deviations vs the f32
    # HIGHEST reference; 3e-2 still catches any structural/indexing bug.
    assert jnp.allclose(out, ref, rtol=3e-2, atol=3e-2), max_err

    # Forced 128-wide tiles: exercises the tiled-P path (in-kernel partial stats +
    # separate affine/LReLU pass) used for large images.  Compared against the
    # fused-path output: the only delta is one extra bf16 rounding of z.
    fwd_tiled = jax.jit(lambda inp: d_nlayers_forward(inp, params,
                                                      force_max_tile_p=128))
    out_t = jax.block_until_ready(fwd_tiled(x))
    max_err_t = float(jnp.max(jnp.abs(out_t - out)))
    assert jnp.allclose(out_t, out, rtol=2e-2, atol=2e-2), max_err_t

    print("KERNEL_OK")
</pallas_src>

<mosaic_0001>
module attributes {stable_mosaic.version = 11 : i64} {
  func.func @_matmul_bias_kernel(%arg0: i32, %arg1: memref<8x64xbf16, #tpu.memory_space<vmem>>, %arg2: memref<64x2048xbf16, #tpu.memory_space<vmem>>, %arg3: memref<8x1xf32, #tpu.memory_space<vmem>>, %arg4: memref<8x2048xbf16, #tpu.memory_space<vmem>>) attributes {dimension_semantics = [#tpu.dimension_semantics<parallel>], iteration_bounds = array<i64: 1>, scalar_prefetch = 0 : i64, scratch_operands = 0 : i64, tpu.core_type = #tpu.core_type<tc>, window_params = [{pipeline_mode = #tpu.pipeline_mode<synchronous>, transform_indices = @transform_0, window_bounds = array<i64: 8, 64>}, {transform_indices = @transform_1, window_bounds = array<i64: 64, 2048>}, {pipeline_mode = #tpu.pipeline_mode<synchronous>, transform_indices = @transform_2, window_bounds = array<i64: 8, 1>}, {transform_indices = @transform_3, window_bounds = array<i64: 8, 2048>}]} {
    %c0 = arith.constant 0 : index
    %c0_0 = arith.constant 0 : index
    %0 = vector.load %arg1[%c0, %c0_0] : memref<8x64xbf16, #tpu.memory_space<vmem>>, vector<8x64xbf16>
    %c0_1 = arith.constant 0 : index
    %c0_2 = arith.constant 0 : index
    %1 = vector.load %arg2[%c0_1, %c0_2] : memref<64x2048xbf16, #tpu.memory_space<vmem>>, vector<64x2048xbf16>
    %cst = arith.constant dense<0.000000e+00> : vector<8x2048xf32>
    %2 = tpu.matmul %0, %1, %cst {dimension_numbers = #tpu.dot_dimension_numbers<[1], [0], [0], [1], [0, 0, 1, 1], [], []>} : vector<8x64xbf16>, vector<64x2048xbf16>, vector<8x2048xf32> -> vector<8x2048xf32>
    %c0_3 = arith.constant 0 : index
    %c0_4 = arith.constant 0 : index
    %3 = vector.load %arg3[%c0_3, %c0_4] : memref<8x1xf32, #tpu.memory_space<vmem>>, vector<8x1xf32>
    %4 = vector.broadcast %3 : vector<8x1xf32> to vector<8x2048xf32>
    %5 = arith.addf %2, %4 : vector<8x2048xf32>
    %cst_5 = arith.constant 0.000000e+00 : f32
    %6 = vector.broadcast %cst_5 : f32 to vector<8x2048xf32>
    %7 = arith.cmpf oge, %5, %6 : vector<8x2048xf32>
    %cst_6 = arith.constant 2.000000e-01 : f32
    %8 = vector.broadcast %cst_6 : f32 to vector<8x2048xf32>
    %9 = arith.mulf %8, %5 : vector<8x2048xf32>
    %10 = arith.select %7, %5, %9 : vector<8x2048xi1>, vector<8x2048xf32>
    %11 = arith.truncf %10 : vector<8x2048xf32> to vector<8x2048xbf16>
    %c0_7 = arith.constant 0 : index
    %c0_8 = arith.constant 0 : index
    %12 = vector.load %arg4[%c0_7, %c0_8] : memref<8x2048xbf16, #tpu.memory_space<vmem>>, vector<8x2048xbf16>
    tpu.vector_store %arg4[%c0_7, %c0_8], %11 {strides = array<i32>} : memref<8x2048xbf16, #tpu.memory_space<vmem>>, vector<8x2048xbf16>,
    return
  }
  func.func @transform_0(%arg0: i32) -> (i32, i32) {
    %c0_i32 = arith.constant 0 : i32
    %c0_i32_0 = arith.constant 0 : i32
    %c0_i32_1 = arith.constant 0 : i32
    return %c0_i32, %c0_i32_0 : i32, i32
  }
  func.func @transform_1(%arg0: i32) -> (i32, i32) {
    %c0_i32 = arith.constant 0 : i32
    %c0_i32_0 = arith.constant 0 : i32
    return %c0_i32, %arg0 : i32, i32
  }
  func.func @transform_2(%arg0: i32) -> (i32, i32) {
    %c0_i32 = arith.constant 0 : i32
    %c0_i32_0 = arith.constant 0 : i32
    %c0_i32_1 = arith.constant 0 : i32
    return %c0_i32, %c0_i32_0 : i32, i32
  }
  func.func @transform_3(%arg0: i32) -> (i32, i32) {
    %c0_i32 = arith.constant 0 : i32
    %c0_i32_0 = arith.constant 0 : i32
    return %c0_i32, %arg0 : i32, i32
  }
}

module attributes {stable_mosaic.version = 11 : i64} {
  func.func @_matmul_bn_lrelu_kernel(%arg0: i32, %arg1: memref<16x128xbf16, #tpu.memory_space<vmem>>, %arg2: memref<128x512xbf16, #tpu.memory_space<vmem>>, %arg3: memref<16x1xf32, #tpu.memory_space<vmem>>, %arg4: memref<16x1xf32, #tpu.memory_space<vmem>>, %arg5: memref<16x512xbf16, #tpu.memory_space<vmem>>) attributes {dimension_semantics = [#tpu.dimension_semantics<parallel>], iteration_bounds = array<i64: 1>, scalar_prefetch = 0 : i64, scratch_operands = 0 : i64, tpu.core_type = #tpu.core_type<tc>, window_params = [{pipeline_mode = #tpu.pipeline_mode<synchronous>, transform_indices = @transform_0, window_bounds = array<i64: 16, 128>}, {transform_indices = @transform_1, window_bounds = array<i64: 128, 512>}, {pipeline_mode = #tpu.pipeline_mode<synchronous>, transform_indices = @transform_2, window_bounds = array<i64: 16, 1>}, {pipeline_mode = #tpu.pipeline_mode<synchronous>, transform_indices = @transform_3, window_bounds = array<i64: 16, 1>}, {transform_indices = @transform_4, window_bounds = array<i64: 16, 512>}]} {
    %c0 = arith.constant 0 : index
    %c0_0 = arith.constant 0 : index
    %0 = vector.load %arg1[%c0, %c0_0] : memref<16x128xbf16, #tpu.memory_space<vmem>>, vector<16x128xbf16>
    %c0_1 = arith.constant 0 : index
    %c0_2 = arith.constant 0 : index
    %1 = vector.load %arg2[%c0_1, %c0_2] : memref<128x512xbf16, #tpu.memory_space<vmem>>, vector<128x512xbf16>
    %cst = arith.constant dense<0.000000e+00> : vector<16x512xf32>
    %2 = tpu.matmul %0, %1, %cst {dimension_numbers = #tpu.dot_dimension_numbers<[1], [0], [0], [1], [0, 0, 1, 1], [], []>} : vector<16x128xbf16>, vector<128x512xbf16>, vector<16x512xf32> -> vector<16x512xf32>
    %cst_3 = arith.constant dense<0.000000e+00> : vector<16xf32>
    %3 = vector.multi_reduction <add>, %2, %cst_3 [1] : vector<16x512xf32> to vector<16xf32>
    %4 = vector.shape_cast %3 : vector<16xf32> to vector<16x1xf32>
    %cst_4 = arith.constant 0.001953125 : f32
    %5 = vector.broadcast %cst_4 : f32 to vector<16x1xf32>
    %6 = arith.mulf %4, %5 : vector<16x1xf32>
    %7 = arith.mulf %2, %2 : vector<16x512xf32>
    %cst_5 = arith.constant dense<0.000000e+00> : vector<16xf32>
    %8 = vector.multi_reduction <add>, %7, %cst_5 [1] : vector<16x512xf32> to vector<16xf32>
    %9 = vector.shape_cast %8 : vector<16xf32> to vector<16x1xf32>
    %cst_6 = arith.constant 0.001953125 : f32
    %10 = vector.broadcast %cst_6 : f32 to vector<16x1xf32>
    %11 = arith.mulf %9, %10 : vector<16x1xf32>
    %12 = arith.mulf %6, %6 : vector<16x1xf32>
    %13 = arith.subf %11, %12 : vector<16x1xf32>
    %cst_7 = arith.constant 0.000000e+00 : f32
    %14 = vector.broadcast %cst_7 : f32 to vector<16x1xf32>
    %15 = arith.maximumf %13, %14 : vector<16x1xf32>
    %cst_8 = arith.constant 9.99999974E-6 : f32
    %16 = vector.broadcast %cst_8 : f32 to vector<16x1xf32>
    %17 = arith.addf %15, %16 : vector<16x1xf32>
    %18 = math.rsqrt %17 : vector<16x1xf32>
    %c0_9 = arith.constant 0 : index
    %c0_10 = arith.constant 0 : index
    %19 = vector.load %arg3[%c0_9, %c0_10] : memref<16x1xf32, #tpu.memory_space<vmem>>, vector<16x1xf32>
    %20 = arith.mulf %18, %19 : vector<16x1xf32>
    %c0_11 = arith.constant 0 : index
    %c0_12 = arith.constant 0 : index
    %21 = vector.load %arg4[%c0_11, %c0_12] : memref<16x1xf32, #tpu.memory_space<vmem>>, vector<16x1xf32>
    %22 = arith.mulf %6, %20 : vector<16x1xf32>
    %23 = arith.subf %21, %22 : vector<16x1xf32>
    %24 = vector.broadcast %20 : vector<16x1xf32> to vector<16x512xf32>
    %25 = arith.mulf %2, %24 : vector<16x512xf32>
    %26 = vector.broadcast %23 : vector<16x1xf32> to vector<16x512xf32>
    %27 = arith.addf %25, %26 : vector<16x512xf32>
    %cst_13 = arith.constant 0.000000e+00 : f32
    %28 = vector.broadcast %cst_13 : f32 to vector<16x512xf32>
    %29 = arith.cmpf oge, %27, %28 : vector<16x512xf32>
    %cst_14 = arith.constant 2.000000e-01 : f32
    %30 = vector.broadcast %cst_14 : f32 to vector<16x512xf32>
    %31 = arith.mulf %30, %27 : vector<16x512xf32>
    %32 = arith.select %29, %27, %31 : vector<16x512xi1>, vector<16x512xf32>
    %33 = arith.truncf %32 : vector<16x512xf32> to vector<16x512xbf16>
    %c0_15 = arith.constant 0 : index
    %c0_16 = arith.constant 0 : index
    %34 = vector.load %arg5[%c0_15, %c0_16] : memref<16x512xbf16, #tpu.memory_space<vmem>>, vector<16x512xbf16>
    tpu.vector_store %arg5[%c0_15, %c0_16], %33 {strides = array<i32>} : memref<16x512xbf16, #tpu.memory_space<vmem>>, vector<16x512xbf16>,
    return
  }
  func.func @transform_0(%arg0: i32) -> (i32, i32) {
    %c0_i32 = arith.constant 0 : i32
    %c0_i32_0 = arith.constant 0 : i32
    %c0_i32_1 = arith.constant 0 : i32
    return %c0_i32, %c0_i32_0 : i32, i32
  }
  func.func @transform_1(%arg0: i32) -> (i32, i32) {
    %c0_i32 = arith.constant 0 : i32
    %c0_i32_0 = arith.constant 0 : i32
    return %c0_i32, %arg0 : i32, i32
  }
  func.func @transform_2(%arg0: i32) -> (i32, i32) {
    %c0_i32 = arith.constant 0 : i32
    %c0_i32_0 = arith.constant 0 : i32
    %c0_i32_1 = arith.constant 0 : i32
    return %c0_i32, %c0_i32_0 : i32, i32
  }
  func.func @transform_3(%arg0: i32) -> (i32, i32) {
    %c0_i32 = arith.constant 0 : i32
    %c0_i32_0 = arith.constant 0 : i32
    %c0_i32_1 = arith.constant 0 : i32
    return %c0_i32, %c0_i32_0 : i32, i32
  }
  func.func @transform_4(%arg0: i32) -> (i32, i32) {
    %c0_i32 = arith.constant 0 : i32
    %c0_i32_0 = arith.constant 0 : i32
    return %c0_i32, %arg0 : i32, i32
  }
}

module attributes {stable_mosaic.version = 11 : i64} {
  func.func @_matmul_bn_lrelu_kernel(%arg0: i32, %arg1: memref<32x256xbf16, #tpu.memory_space<vmem>>, %arg2: memref<256x128xbf16, #tpu.memory_space<vmem>>, %arg3: memref<32x1xf32, #tpu.memory_space<vmem>>, %arg4: memref<32x1xf32, #tpu.memory_space<vmem>>, %arg5: memref<32x128xbf16, #tpu.memory_space<vmem>>) attributes {dimension_semantics = [#tpu.dimension_semantics<parallel>], iteration_bounds = array<i64: 1>, scalar_prefetch = 0 : i64, scratch_operands = 0 : i64, tpu.core_type = #tpu.core_type<tc>, window_params = [{pipeline_mode = #tpu.pipeline_mode<synchronous>, transform_indices = @transform_0, window_bounds = array<i64: 32, 256>}, {transform_indices = @transform_1, window_bounds = array<i64: 256, 128>}, {pipeline_mode = #tpu.pipeline_mode<synchronous>, transform_indices = @transform_2, window_bounds = array<i64: 32, 1>}, {pipeline_mode = #tpu.pipeline_mode<synchronous>, transform_indices = @transform_3, window_bounds = array<i64: 32, 1>}, {transform_indices = @transform_4, window_bounds = array<i64: 32, 128>}]} {
    %c0 = arith.constant 0 : index
    %c0_0 = arith.constant 0 : index
    %0 = vector.load %arg1[%c0, %c0_0] : memref<32x256xbf16, #tpu.memory_space<vmem>>, vector<32x256xbf16>
    %c0_1 = arith.constant 0 : index
    %c0_2 = arith.constant 0 : index
    %1 = vector.load %arg2[%c0_1, %c0_2] : memref<256x128xbf16, #tpu.memory_space<vmem>>, vector<256x128xbf16>
    %cst = arith.constant dense<0.000000e+00> : vector<32x128xf32>
    %2 = tpu.matmul %0, %1, %cst {dimension_numbers = #tpu.dot_dimension_numbers<[1], [0], [0], [1], [0, 0, 1, 1], [], []>} : vector<32x256xbf16>, vector<256x128xbf16>, vector<32x128xf32> -> vector<32x128xf32>
    %cst_3 = arith.constant dense<0.000000e+00> : vector<32xf32>
    %3 = vector.multi_reduction <add>, %2, %cst_3 [1] : vector<32x128xf32> to vector<32xf32>
    %4 = vector.shape_cast %3 : vector<32xf32> to vector<32x1xf32>
    %cst_4 = arith.constant 7.812500e-03 : f32
    %5 = vector.broadcast %cst_4 : f32 to vector<32x1xf32>
    %6 = arith.mulf %4, %5 : vector<32x1xf32>
    %7 = arith.mulf %2, %2 : vector<32x128xf32>
    %cst_5 = arith.constant dense<0.000000e+00> : vector<32xf32>
    %8 = vector.multi_reduction <add>, %7, %cst_5 [1] : vector<32x128xf32> to vector<32xf32>
    %9 = vector.shape_cast %8 : vector<32xf32> to vector<32x1xf32>
    %cst_6 = arith.constant 7.812500e-03 : f32
    %10 = vector.broadcast %cst_6 : f32 to vector<32x1xf32>
    %11 = arith.mulf %9, %10 : vector<32x1xf32>
    %12 = arith.mulf %6, %6 : vector<32x1xf32>
    %13 = arith.subf %11, %12 : vector<32x1xf32>
    %cst_7 = arith.constant 0.000000e+00 : f32
    %14 = vector.broadcast %cst_7 : f32 to vector<32x1xf32>
    %15 = arith.maximumf %13, %14 : vector<32x1xf32>
    %cst_8 = arith.constant 9.99999974E-6 : f32
    %16 = vector.broadcast %cst_8 : f32 to vector<32x1xf32>
    %17 = arith.addf %15, %16 : vector<32x1xf32>
    %18 = math.rsqrt %17 : vector<32x1xf32>
    %c0_9 = arith.constant 0 : index
    %c0_10 = arith.constant 0 : index
    %19 = vector.load %arg3[%c0_9, %c0_10] : memref<32x1xf32, #tpu.memory_space<vmem>>, vector<32x1xf32>
    %20 = arith.mulf %18, %19 : vector<32x1xf32>
    %c0_11 = arith.constant 0 : index
    %c0_12 = arith.constant 0 : index
    %21 = vector.load %arg4[%c0_11, %c0_12] : memref<32x1xf32, #tpu.memory_space<vmem>>, vector<32x1xf32>
    %22 = arith.mulf %6, %20 : vector<32x1xf32>
    %23 = arith.subf %21, %22 : vector<32x1xf32>
    %24 = vector.broadcast %20 : vector<32x1xf32> to vector<32x128xf32>
    %25 = arith.mulf %2, %24 : vector<32x128xf32>
    %26 = vector.broadcast %23 : vector<32x1xf32> to vector<32x128xf32>
    %27 = arith.addf %25, %26 : vector<32x128xf32>
    %cst_13 = arith.constant 0.000000e+00 : f32
    %28 = vector.broadcast %cst_13 : f32 to vector<32x128xf32>
    %29 = arith.cmpf oge, %27, %28 : vector<32x128xf32>
    %cst_14 = arith.constant 2.000000e-01 : f32
    %30 = vector.broadcast %cst_14 : f32 to vector<32x128xf32>
    %31 = arith.mulf %30, %27 : vector<32x128xf32>
    %32 = arith.select %29, %27, %31 : vector<32x128xi1>, vector<32x128xf32>
    %33 = arith.truncf %32 : vector<32x128xf32> to vector<32x128xbf16>
    %c0_15 = arith.constant 0 : index
    %c0_16 = arith.constant 0 : index
    %34 = vector.load %arg5[%c0_15, %c0_16] : memref<32x128xbf16, #tpu.memory_space<vmem>>, vector<32x128xbf16>
    tpu.vector_store %arg5[%c0_15, %c0_16], %33 {strides = array<i32>} : memref<32x128xbf16, #tpu.memory_space<vmem>>, vector<32x128xbf16>,
    return
  }
  func.func @transform_0(%arg0: i32) -> (i32, i32) {
    %c0_i32 = arith.constant 0 : i32
    %c0_i32_0 = arith.constant 0 : i32
    %c0_i32_1 = arith.constant 0 : i32
    return %c0_i32, %c0_i32_0 : i32, i32
  }
  func.func @transform_1(%arg0: i32) -> (i32, i32) {
    %c0_i32 = arith.constant 0 : i32
    %c0_i32_0 = arith.constant 0 : i32
    return %c0_i32, %arg0 : i32, i32
  }
  func.func @transform_2(%arg0: i32) -> (i32, i32) {
    %c0_i32 = arith.constant 0 : i32
    %c0_i32_0 = arith.constant 0 : i32
    %c0_i32_1 = arith.constant 0 : i32
    return %c0_i32, %c0_i32_0 : i32, i32
  }
  func.func @transform_3(%arg0: i32) -> (i32, i32) {
    %c0_i32 = arith.constant 0 : i32
    %c0_i32_0 = arith.constant 0 : i32
    %c0_i32_1 = arith.constant 0 : i32
    return %c0_i32, %c0_i32_0 : i32, i32
  }
  func.func @transform_4(%arg0: i32) -> (i32, i32) {
    %c0_i32 = arith.constant 0 : i32
    %c0_i32_0 = arith.constant 0 : i32
    return %c0_i32, %arg0 : i32, i32
  }
}

module attributes {stable_mosaic.version = 11 : i64} {
  func.func @_matmul_bn_lrelu_kernel(%arg0: i32, %arg1: memref<64x512xbf16, #tpu.memory_space<vmem>>, %arg2: memref<512x128xbf16, #tpu.memory_space<vmem>>, %arg3: memref<64x1xf32, #tpu.memory_space<vmem>>, %arg4: memref<64x1xf32, #tpu.memory_space<vmem>>, %arg5: memref<64x128xbf16, #tpu.memory_space<vmem>>) attributes {dimension_semantics = [#tpu.dimension_semantics<parallel>], iteration_bounds = array<i64: 1>, scalar_prefetch = 0 : i64, scratch_operands = 0 : i64, tpu.core_type = #tpu.core_type<tc>, window_params = [{pipeline_mode = #tpu.pipeline_mode<synchronous>, transform_indices = @transform_0, window_bounds = array<i64: 64, 512>}, {transform_indices = @transform_1, window_bounds = array<i64: 512, 128>}, {pipeline_mode = #tpu.pipeline_mode<synchronous>, transform_indices = @transform_2, window_bounds = array<i64: 64, 1>}, {pipeline_mode = #tpu.pipeline_mode<synchronous>, transform_indices = @transform_3, window_bounds = array<i64: 64, 1>}, {transform_indices = @transform_4, window_bounds = array<i64: 64, 128>}]} {
    %c0 = arith.constant 0 : index
    %c0_0 = arith.constant 0 : index
    %0 = vector.load %arg1[%c0, %c0_0] : memref<64x512xbf16, #tpu.memory_space<vmem>>, vector<64x512xbf16>
    %c0_1 = arith.constant 0 : index
    %c0_2 = arith.constant 0 : index
    %1 = vector.load %arg2[%c0_1, %c0_2] : memref<512x128xbf16, #tpu.memory_space<vmem>>, vector<512x128xbf16>
    %cst = arith.constant dense<0.000000e+00> : vector<64x128xf32>
    %2 = tpu.matmul %0, %1, %cst {dimension_numbers = #tpu.dot_dimension_numbers<[1], [0], [0], [1], [0, 0, 1, 1], [], []>} : vector<64x512xbf16>, vector<512x128xbf16>, vector<64x128xf32> -> vector<64x128xf32>
    %cst_3 = arith.constant dense<0.000000e+00> : vector<64xf32>
    %3 = vector.multi_reduction <add>, %2, %cst_3 [1] : vector<64x128xf32> to vector<64xf32>
    %4 = vector.shape_cast %3 : vector<64xf32> to vector<64x1xf32>
    %cst_4 = arith.constant 0.0102040814 : f32
    %5 = vector.broadcast %cst_4 : f32 to vector<64x1xf32>
    %6 = arith.mulf %4, %5 : vector<64x1xf32>
    %7 = arith.mulf %2, %2 : vector<64x128xf32>
    %cst_5 = arith.constant dense<0.000000e+00> : vector<64xf32>
    %8 = vector.multi_reduction <add>, %7, %cst_5 [1] : vector<64x128xf32> to vector<64xf32>
    %9 = vector.shape_cast %8 : vector<64xf32> to vector<64x1xf32>
    %cst_6 = arith.constant 0.0102040814 : f32
    %10 = vector.broadcast %cst_6 : f32 to vector<64x1xf32>
    %11 = arith.mulf %9, %10 : vector<64x1xf32>
    %12 = arith.mulf %6, %6 : vector<64x1xf32>
    %13 = arith.subf %11, %12 : vector<64x1xf32>
    %cst_7 = arith.constant 0.000000e+00 : f32
    %14 = vector.broadcast %cst_7 : f32 to vector<64x1xf32>
    %15 = arith.maximumf %13, %14 : vector<64x1xf32>
    %cst_8 = arith.constant 9.99999974E-6 : f32
    %16 = vector.broadcast %cst_8 : f32 to vector<64x1xf32>
    %17 = arith.addf %15, %16 : vector<64x1xf32>
    %18 = math.rsqrt %17 : vector<64x1xf32>
    %c0_9 = arith.constant 0 : index
    %c0_10 = arith.constant 0 : index
    %19 = vector.load %arg3[%c0_9, %c0_10] : memref<64x1xf32, #tpu.memory_space<vmem>>, vector<64x1xf32>
    %20 = arith.mulf %18, %19 : vector<64x1xf32>
    %c0_11 = arith.constant 0 : index
    %c0_12 = arith.constant 0 : index
    %21 = vector.load %arg4[%c0_11, %c0_12] : memref<64x1xf32, #tpu.memory_space<vmem>>, vector<64x1xf32>
    %22 = arith.mulf %6, %20 : vector<64x1xf32>
    %23 = arith.subf %21, %22 : vector<64x1xf32>
    %24 = vector.broadcast %20 : vector<64x1xf32> to vector<64x128xf32>
    %25 = arith.mulf %2, %24 : vector<64x128xf32>
    %26 = vector.broadcast %23 : vector<64x1xf32> to vector<64x128xf32>
    %27 = arith.addf %25, %26 : vector<64x128xf32>
    %cst_13 = arith.constant 0.000000e+00 : f32
    %28 = vector.broadcast %cst_13 : f32 to vector<64x128xf32>
    %29 = arith.cmpf oge, %27, %28 : vector<64x128xf32>
    %cst_14 = arith.constant 2.000000e-01 : f32
    %30 = vector.broadcast %cst_14 : f32 to vector<64x128xf32>
    %31 = arith.mulf %30, %27 : vector<64x128xf32>
    %32 = arith.select %29, %27, %31 : vector<64x128xi1>, vector<64x128xf32>
    %33 = arith.truncf %32 : vector<64x128xf32> to vector<64x128xbf16>
    %c0_15 = arith.constant 0 : index
    %c0_16 = arith.constant 0 : index
    %34 = vector.load %arg5[%c0_15, %c0_16] : memref<64x128xbf16, #tpu.memory_space<vmem>>, vector<64x128xbf16>
    tpu.vector_store %arg5[%c0_15, %c0_16], %33 {strides = array<i32>} : memref<64x128xbf16, #tpu.memory_space<vmem>>, vector<64x128xbf16>,
    return
  }
  func.func @transform_0(%arg0: i32) -> (i32, i32) {
    %c0_i32 = arith.constant 0 : i32
    %c0_i32_0 = arith.constant 0 : i32
    %c0_i32_1 = arith.constant 0 : i32
    return %c0_i32, %c0_i32_0 : i32, i32
  }
  func.func @transform_1(%arg0: i32) -> (i32, i32) {
    %c0_i32 = arith.constant 0 : i32
    %c0_i32_0 = arith.constant 0 : i32
    return %c0_i32, %arg0 : i32, i32
  }
  func.func @transform_2(%arg0: i32) -> (i32, i32) {
    %c0_i32 = arith.constant 0 : i32
    %c0_i32_0 = arith.constant 0 : i32
    %c0_i32_1 = arith.constant 0 : i32
    return %c0_i32, %c0_i32_0 : i32, i32
  }
  func.func @transform_3(%arg0: i32) -> (i32, i32) {
    %c0_i32 = arith.constant 0 : i32
    %c0_i32_0 = arith.constant 0 : i32
    %c0_i32_1 = arith.constant 0 : i32
    return %c0_i32, %c0_i32_0 : i32, i32
  }
  func.func @transform_4(%arg0: i32) -> (i32, i32) {
    %c0_i32 = arith.constant 0 : i32
    %c0_i32_0 = arith.constant 0 : i32
    return %c0_i32, %arg0 : i32, i32
  }
}

module attributes {stable_mosaic.version = 11 : i64} {
  func.func @_matmul_bias_kernel(%arg0: i32, %arg1: memref<8x1024xbf16, #tpu.memory_space<vmem>>, %arg2: memref<1024x128xbf16, #tpu.memory_space<vmem>>, %arg3: memref<8x1xf32, #tpu.memory_space<vmem>>, %arg4: memref<8x128xf32, #tpu.memory_space<vmem>>) attributes {dimension_semantics = [#tpu.dimension_semantics<parallel>], iteration_bounds = array<i64: 1>, scalar_prefetch = 0 : i64, scratch_operands = 0 : i64, tpu.core_type = #tpu.core_type<tc>, window_params = [{pipeline_mode = #tpu.pipeline_mode<synchronous>, transform_indices = @transform_0, window_bounds = array<i64: 8, 1024>}, {transform_indices = @transform_1, window_bounds = array<i64: 1024, 128>}, {pipeline_mode = #tpu.pipeline_mode<synchronous>, transform_indices = @transform_2, window_bounds = array<i64: 8, 1>}, {transform_indices = @transform_3, window_bounds = array<i64: 8, 128>}]} {
    %c0 = arith.constant 0 : index
    %c0_0 = arith.constant 0 : index
    %0 = vector.load %arg1[%c0, %c0_0] : memref<8x1024xbf16, #tpu.memory_space<vmem>>, vector<8x1024xbf16>
    %c0_1 = arith.constant 0 : index
    %c0_2 = arith.constant 0 : index
    %1 = vector.load %arg2[%c0_1, %c0_2] : memref<1024x128xbf16, #tpu.memory_space<vmem>>, vector<1024x128xbf16>
    %cst = arith.constant dense<0.000000e+00> : vector<8x128xf32>
    %2 = tpu.matmul %0, %1, %cst {dimension_numbers = #tpu.dot_dimension_numbers<[1], [0], [0], [1], [0, 0, 1, 1], [], []>} : vector<8x1024xbf16>, vector<1024x128xbf16>, vector<8x128xf32> -> vector<8x128xf32>
    %c0_3 = arith.constant 0 : index
    %c0_4 = arith.constant 0 : index
    %3 = vector.load %arg3[%c0_3, %c0_4] : memref<8x1xf32, #tpu.memory_space<vmem>>, vector<8x1xf32>
    %4 = vector.broadcast %3 : vector<8x1xf32> to vector<8x128xf32>
    %5 = arith.addf %2, %4 : vector<8x128xf32>
    %c0_5 = arith.constant 0 : index
    %c0_6 = arith.constant 0 : index
    %6 = vector.load %arg4[%c0_5, %c0_6] : memref<8x128xf32, #tpu.memory_space<vmem>>, vector<8x128xf32>
    tpu.vector_store %arg4[%c0_5, %c0_6], %5 {strides = array<i32>} : memref<8x128xf32, #tpu.memory_space<vmem>>, vector<8x128xf32>,
    return
  }
  func.func @transform_0(%arg0: i32) -> (i32, i32) {
    %c0_i32 = arith.constant 0 : i32
    %c0_i32_0 = arith.constant 0 : i32
    %c0_i32_1 = arith.constant 0 : i32
    return %c0_i32, %c0_i32_0 : i32, i32
  }
  func.func @transform_1(%arg0: i32) -> (i32, i32) {
    %c0_i32 = arith.constant 0 : i32
    %c0_i32_0 = arith.constant 0 : i32
    return %c0_i32, %arg0 : i32, i32
  }
  func.func @transform_2(%arg0: i32) -> (i32, i32) {
    %c0_i32 = arith.constant 0 : i32
    %c0_i32_0 = arith.constant 0 : i32
    %c0_i32_1 = arith.constant 0 : i32
    return %c0_i32, %c0_i32_0 : i32, i32
  }
  func.func @transform_3(%arg0: i32) -> (i32, i32) {
    %c0_i32 = arith.constant 0 : i32
    %c0_i32_0 = arith.constant 0 : i32
    return %c0_i32, %arg0 : i32, i32
  }
}

</mosaic_0001>

<llo_original>
// kernel: _lambda_.5
$region0: #{_lambda_.5}
  #allocation0 [shape = 'u32[]', space=smem, size = 0x4, offset = 0x4, fixed_abs, tag = 'smem constant byte address 0x4 - core index']
  #allocation1 [shape = 'u32[144,128]{1,0:T(1,128)}', space=vmem, size = 0x12000, scoped, tag = 'internal scratch']
  %s0 = inlined_call_operand.vmem [shape: bf16[8,64], index: 0, kind: input, shape index: {}]
  %s1 = inlined_call_operand.vmem [shape: bf16[64,2048], index: 1, kind: input, shape index: {}]
  %s2 = inlined_call_operand.vmem [shape: f32[8,1], index: 2, kind: input, shape index: {}]
  %s3 = inlined_call_operand.vmem [shape: bf16[8,2048], index: 3, kind: output, shape index: {}]
  %s4 = sld [smem:[#allocation0]]
  $region22: #{_lambda_.5} parent=0
    _
  %s6 = ssub.s32 1, %s4
  %s7 = scalar_select 0, %s6, %s4
  // Predicated region
  $region2: #{_lambda_.5} parent=0 // pred_check
    _
  $region3: #{_lambda_.5} parent=0 // pred_check_branch
    %9 = sbr.rel (0) target = $region5
  $region4: #{_lambda_.5} parent=0 // pred_region
    _
  $region5: #{_lambda_.5} parent=0 // pred_fallthru
    _
  // Predicated region
  $region6: #{_lambda_.5} parent=0 // pred_check
    _
  $region7: #{_lambda_.5} parent=0 // pred_check_branch
    %11 = sbr.rel (0) target = $region9
  $region8: #{_lambda_.5} parent=0 // pred_region
    _
  $region9: #{_lambda_.5} parent=0 // pred_fallthru
    _
  // Predicated region
  $region10: #{_lambda_.5} parent=0 // pred_check
    _
  $region11: #{_lambda_.5} parent=0 // pred_check_branch
    %13 = sbr.rel (0) target = $region13
  $region12: #{_lambda_.5} parent=0 // pred_region
    _
  $region13: #{_lambda_.5} parent=0 // pred_fallthru
    _
  %v15 = vld [vmem:[%s0] sm:$0xf]
  %v16 = vld [vmem:[%s1] sm:$0xff]
  %v17 = vld [vmem:[%s1 + $0x8] sm:$0xff]
  %v18 = vld [vmem:[%s1 + $0x10] sm:$0xff]
  %v19 = vld [vmem:[%s1 + $0x18] sm:$0xff]
  %v20 = vld [vmem:[%s1 + $0x20] sm:$0xff]
  %v21 = vld [vmem:[%s1 + $0x28] sm:$0xff]
  %v22 = vld [vmem:[%s1 + $0x30] sm:$0xff]
  %v23 = vld [vmem:[%s1 + $0x38] sm:$0xff]
  %v24 = vld [vmem:[%s1 + $0x40] sm:$0xff]
  %v25 = vld [vmem:[%s1 + $0x48] sm:$0xff]
  %v26 = vld [vmem:[%s1 + $0x50] sm:$0xff]
  %v27 = vld [vmem:[%s1 + $0x58] sm:$0xff]
  %v28 = vld [vmem:[%s1 + $0x60] sm:$0xff]
  %v29 = vld [vmem:[%s1 + $0x68] sm:$0xff]
  %v30 = vld [vmem:[%s1 + $0x70] sm:$0xff]
  %v31 = vld [vmem:[%s1 + $0x78] sm:$0xff]
  %v32 = vld [vmem:[%s1 + $0x80] sm:$0xff]
  %v33 = vld [vmem:[%s1 + $0x88] sm:$0xff]
  %v34 = vld [vmem:[%s1 + $0x90] sm:$0xff]
  %v35 = vld [vmem:[%s1 + $0x98] sm:$0xff]
  %v36 = vld [vmem:[%s1 + $0xa0] sm:$0xff]
  %v37 = vld [vmem:[%s1 + $0xa8] sm:$0xff]
  %v38 = vld [vmem:[%s1 + $0xb0] sm:$0xff]
  %v39 = vld [vmem:[%s1 + $0xb8] sm:$0xff]
  %v40 = vld [vmem:[%s1 + $0xc0] sm:$0xff]
  %v41 = vld [vmem:[%s1 + $0xc8] sm:$0xff]
  %v42 = vld [vmem:[%s1 + $0xd0] sm:$0xff]
  %v43 = vld [vmem:[%s1 + $0xd8] sm:$0xff]
  %v44 = vld [vmem:[%s1 + $0xe0] sm:$0xff]
  %v45 = vld [vmem:[%s1 + $0xe8] sm:$0xff]
  %v46 = vld [vmem:[%s1 + $0xf0] sm:$0xff]
  %v47 = vld [vmem:[%s1 + $0xf8] sm:$0xff]
  %v48 = vld [vmem:[%s1 + $0x100] sm:$0xff]
  %v49 = vld [vmem:[%s1 + $0x108] sm:$0xff]
  %v50 = vld [vmem:[%s1 + $0x110] sm:$0xff]
  %v51 = vld [vmem:[%s1 + $0x118] sm:$0xff]
  %v52 = vld [vmem:[%s1 + $0x120] sm:$0xff]
  %v53 = vld [vmem:[%s1 + $0x128] sm:$0xff]
  %v54 = vld [vmem:[%s1 + $0x130] sm:$0xff]
  %v55 = vld [vmem:[%s1 + $0x138] sm:$0xff]
  %v56 = vld [vmem:[%s1 + $0x140] sm:$0xff]
  %v57 = vld [vmem:[%s1 + $0x148] sm:$0xff]
  %v58 = vld [vmem:[%s1 + $0x150] sm:$0xff]
  %v59 = vld [vmem:[%s1 + $0x158] sm:$0xff]
  %v60 = vld [vmem:[%s1 + $0x160] sm:$0xff]
  %v61 = vld [vmem:[%s1 + $0x168] sm:$0xff]
  %v62 = vld [vmem:[%s1 + $0x170] sm:$0xff]
  %v63 = vld [vmem:[%s1 + $0x178] sm:$0xff]
  %v64 = vld [vmem:[%s1 + $0x180] sm:$0xff]
  %v65 = vld [vmem:[%s1 + $0x188] sm:$0xff]
  %v66 = vld [vmem:[%s1 + $0x190] sm:$0xff]
  %v67 = vld [vmem:[%s1 + $0x198] sm:$0xff]
  %v68 = vld [vmem:[%s1 + $0x1a0] sm:$0xff]
  %v69 = vld [vmem:[%s1 + $0x1a8] sm:$0xff]
  %v70 = vld [vmem:[%s1 + $0x1b0] sm:$0xff]
  %v71 = vld [vmem:[%s1 + $0x1b8] sm:$0xff]
  %v72 = vld [vmem:[%s1 + $0x1c0] sm:$0xff]
  %v73 = vld [vmem:[%s1 + $0x1c8] sm:$0xff]
  %v74 = vld [vmem:[%s1 + $0x1d0] sm:$0xff]
  %v75 = vld [vmem:[%s1 + $0x1d8] sm:$0xff]
  %v76 = vld [vmem:[%s1 + $0x1e0] sm:$0xff]
  %v77 = vld [vmem:[%s1 + $0x1e8] sm:$0xff]
  %v78 = vld [vmem:[%s1 + $0x1f0] sm:$0xff]
  %v79 = vld [vmem:[%s1 + $0x1f8] sm:$0xff]
  %v80 = vld [vmem:[%s2] sm:$0xff]
  %82 = vset.pattern.permute.xlu0 0
  %83 = vperm.xlu0 %82, %v80
  %v84 = vpop.permute.xlu0 %83
  %v150 = vunpack.c.l.b16 %v16
  %v151 = vunpack.c.h.b16 %v16
  %v152 = vunpack.c.l.b16 %v17
  %v153 = vunpack.c.h.b16 %v17
  %v154 = vunpack.c.l.b16 %v18
  %v155 = vunpack.c.h.b16 %v18
  %v156 = vunpack.c.l.b16 %v19
  %v157 = vunpack.c.h.b16 %v19
  %v158 = vunpack.c.l.b16 %v20
  %v159 = vunpack.c.h.b16 %v20
  %v160 = vunpack.c.l.b16 %v21
  %v161 = vunpack.c.h.b16 %v21
  %v162 = vunpack.c.l.b16 %v22
  %v163 = vunpack.c.h.b16 %v22
  %v164 = vunpack.c.l.b16 %v23
  %v165 = vunpack.c.h.b16 %v23
  %v166 = vunpack.c.l.b16 %v24
  %v167 = vunpack.c.h.b16 %v24
  %v168 = vunpack.c.l.b16 %v25
  %v169 = vunpack.c.h.b16 %v25
  %v170 = vunpack.c.l.b16 %v26
  %v171 = vunpack.c.h.b16 %v26
  %v172 = vunpack.c.l.b16 %v27
  %v173 = vunpack.c.h.b16 %v27
  %v174 = vunpack.c.l.b16 %v28
  %v175 = vunpack.c.h.b16 %v28
  %v176 = vunpack.c.l.b16 %v29
  %v177 = vunpack.c.h.b16 %v29
  %v178 = vunpack.c.l.b16 %v30
  %v179 = vunpack.c.h.b16 %v30
  %v180 = vunpack.c.l.b16 %v31
  %v181 = vunpack.c.h.b16 %v31
  %v182 = vunpack.c.l.b16 %v32
  %v183 = vunpack.c.h.b16 %v32
  %v184 = vunpack.c.l.b16 %v33
  %v185 = vunpack.c.h.b16 %v33
  %v186 = vunpack.c.l.b16 %v34
  %v187 = vunpack.c.h.b16 %v34
  %v188 = vunpack.c.l.b16 %v35
  %v189 = vunpack.c.h.b16 %v35
  %v190 = vunpack.c.l.b16 %v36
  %v191 = vunpack.c.h.b16 %v36
  %v192 = vunpack.c.l.b16 %v37
  %v193 = vunpack.c.h.b16 %v37
  %v194 = vunpack.c.l.b16 %v38
  %v195 = vunpack.c.h.b16 %v38
  %v196 = vunpack.c.l.b16 %v39
  %v197 = vunpack.c.h.b16 %v39
  %v198 = vunpack.c.l.b16 %v40
  %v199 = vunpack.c.h.b16 %v40
  %v200 = vunpack.c.l.b16 %v41
  %v201 = vunpack.c.h.b16 %v41
  %v202 = vunpack.c.l.b16 %v42
  %v203 = vunpack.c.h.b16 %v42
  %v204 = vunpack.c.l.b16 %v43
  %v205 = vunpack.c.h.b16 %v43
  %v206 = vunpack.c.l.b16 %v44
  %v207 = vunpack.c.h.b16 %v44
  %v208 = vunpack.c.l.b16 %v45
  %v209 = vunpack.c.h.b16 %v45
  %v210 = vunpack.c.l.b16 %v46
  %v211 = vunpack.c.h.b16 %v46
  %v212 = vunpack.c.l.b16 %v47
  %v213 = vunpack.c.h.b16 %v47
  %v214 = vunpack.c.l.b16 %v48
  %v215 = vunpack.c.h.b16 %v48
  %v216 = vunpack.c.l.b16 %v49
  %v217 = vunpack.c.h.b16 %v49
  %v218 = vunpack.c.l.b16 %v50
  %v219 = vunpack.c.h.b16 %v50
  %v220 = vunpack.c.l.b16 %v51
  %v221 = vunpack.c.h.b16 %v51
  %v222 = vunpack.c.l.b16 %v52
  %v223 = vunpack.c.h.b16 %v52
  %v224 = vunpack.c.l.b16 %v53
  %v225 = vunpack.c.h.b16 %v53
  %v226 = vunpack.c.l.b16 %v54
  %v227 = vunpack.c.h.b16 %v54
  %v228 = vunpack.c.l.b16 %v55
  %v229 = vunpack.c.h.b16 %v55
  %v230 = vunpack.c.l.b16 %v56
  %v231 = vunpack.c.h.b16 %v56
  %v232 = vunpack.c.l.b16 %v57
  %v233 = vunpack.c.h.b16 %v57
  %v234 = vunpack.c.l.b16 %v58
  %v235 = vunpack.c.h.b16 %v58
  %v236 = vunpack.c.l.b16 %v59
  %v237 = vunpack.c.h.b16 %v59
  %v238 = vunpack.c.l.b16 %v60
  %v239 = vunpack.c.h.b16 %v60
  %v240 = vunpack.c.l.b16 %v61
  %v241 = vunpack.c.h.b16 %v61
  %v242 = vunpack.c.l.b16 %v62
  %v243 = vunpack.c.h.b16 %v62
  %v244 = vunpack.c.l.b16 %v63
  %v245 = vunpack.c.h.b16 %v63
  %v246 = vunpack.c.l.b16 %v64
  %v247 = vunpack.c.h.b16 %v64
  %v248 = vunpack.c.l.b16 %v65
  %v249 = vunpack.c.h.b16 %v65
  %v250 = vunpack.c.l.b16 %v66
  %v251 = vunpack.c.h.b16 %v66
  %v252 = vunpack.c.l.b16 %v67
  %v253 = vunpack.c.h.b16 %v67
  %v254 = vunpack.c.l.b16 %v68
  %v255 = vunpack.c.h.b16 %v68
  %v256 = vunpack.c.l.b16 %v69
  %v257 = vunpack.c.h.b16 %v69
  %v258 = vunpack.c.l.b16 %v70
  %v259 = vunpack.c.h.b16 %v70
  %v260 = vunpack.c.l.b16 %v71
  %v261 = vunpack.c.h.b16 %v71
  %v262 = vunpack.c.l.b16 %v72
  %v263 = vunpack.c.h.b16 %v72
  %v264 = vunpack.c.l.b16 %v73
  %v265 = vunpack.c.h.b16 %v73
  %v266 = vunpack.c.l.b16 %v74
  %v267 = vunpack.c.h.b16 %v74
  %v268 = vunpack.c.l.b16 %v75
  %v269 = vunpack.c.h.b16 %v75
  %v270 = vunpack.c.l.b16 %v76
  %v271 = vunpack.c.h.b16 %v76
  %v272 = vunpack.c.l.b16 %v77
  %v273 = vunpack.c.h.b16 %v77
  %v274 = vunpack.c.l.b16 %v78
  %v275 = vunpack.c.h.b16 %v78
  %v276 = vunpack.c.l.b16 %v79
  %v277 = vunpack.c.h.b16 %v79
  %v278 = vpack.c.b16 %v166, %v150
  %v279 = vpack.c.b16 %v167, %v151
  %v280 = vpack.c.b16 %v168, %v152
  %v281 = vpack.c.b16 %v169, %v153
  %v282 = vpack.c.b16 %v170, %v154
  %v283 = vpack.c.b16 %v171, %v155
  %v284 = vpack.c.b16 %v172, %v156
  %v285 = vpack.c.b16 %v173, %v157
  %v286 = vpack.c.b16 %v174, %v158
  %v287 = vpack.c.b16 %v175, %v159
  %v288 = vpack.c.b16 %v176, %v160
  %v289 = vpack.c.b16 %v177, %v161
  %v290 = vpack.c.b16 %v178, %v162
  %v291 = vpack.c.b16 %v179, %v163
  %v292 = vpack.c.b16 %v180, %v164
  %v293 = vpack.c.b16 %v181, %v165
  %v294 = vpack.c.b16 %v198, %v182
  %v295 = vpack.c.b16 %v199, %v183
  %v296 = vpack.c.b16 %v200, %v184
  %v297 = vpack.c.b16 %v201, %v185
  %v298 = vpack.c.b16 %v202, %v186
  %v299 = vpack.c.b16 %v203, %v187
  %v300 = vpack.c.b16 %v204, %v188
  %v301 = vpack.c.b16 %v205, %v189
  %v302 = vpack.c.b16 %v206, %v190
  %v303 = vpack.c.b16 %v207, %v191
  %v304 = vpack.c.b16 %v208, %v192
  %v305 = vpack.c.b16 %v209, %v193
  %v306 = vpack.c.b16 %v210, %v194
  %v307 = vpack.c.b16 %v211, %v195
  %v308 = vpack.c.b16 %v212, %v196
  %v309 = vpack.c.b16 %v213, %v197
  %v310 = vpack.c.b16 %v230, %v214
  %v311 = vpack.c.b16 %v231, %v215
  %v312 = vpack.c.b16 %v232, %v216
  %v313 = vpack.c.b16 %v233, %v217
  %v314 = vpack.c.b16 %v234, %v218
  %v315 = vpack.c.b16 %v235, %v219
  %v316 = vpack.c.b16 %v236, %v220
  %v317 = vpack.c.b16 %v237, %v221
  %v318 = vpack.c.b16 %v238, %v222
  %v319 = vpack.c.b16 %v239, %v223
  %v320 = vpack.c.b16 %v240, %v224
  %v321 = vpack.c.b16 %v241, %v225
  %v322 = vpack.c.b16 %v242, %v226
  %v323 = vpack.c.b16 %v243, %v227
  %v324 = vpack.c.b16 %v244, %v228
  %v325 = vpack.c.b16 %v245, %v229
  %v326 = vpack.c.b16 %v262, %v246
  %v327 = vpack.c.b16 %v263, %v247
  %v328 = vpack.c.b16 %v264, %v248
  %v329 = vpack.c.b16 %v265, %v249
  %v330 = vpack.c.b16 %v266, %v250
  %v331 = vpack.c.b16 %v267, %v251
  %v332 = vpack.c.b16 %v268, %v252
  %v333 = vpack.c.b16 %v269, %v253
  %v334 = vpack.c.b16 %v270, %v254
  %v335 = vpack.c.b16 %v271, %v255
  %v336 = vpack.c.b16 %v272, %v256
  %v337 = vpack.c.b16 %v273, %v257
  %v338 = vpack.c.b16 %v274, %v258
  %v339 = vpack.c.b16 %v275, %v259
  %v340 = vpack.c.b16 %v276, %v260
  %v341 = vpack.c.b16 %v277, %v261
  %vm406 = vcmask 523264
  %v408 = vsel %vm406, %v15, 0
  %410 = vmatprep.subr.bf16.mxu0 %v279
  %411 = vmatpush1.bf16.msra.mxu0 %v278
  %412 = vmatprep.subr.bf16.mxu0 %v295
  %413 = vmatpush1.bf16.msra.mxu0 %v294
  %414 = vmatprep.subr.bf16.mxu0 %v311
  %415 = vmatpush1.bf16.msra.mxu0 %v310
  %416 = vmatprep.subr.bf16.mxu0 %v327
  %417 = vmatpush1.bf16.msra.mxu0 %v326
  %418 = vmatprep.subr.bf16.mxu0 0
  %419 = vmatpush1.bf16.msra.mxu0 0
  %420 = vmatprep.subr.bf16.mxu0 0
  %421 = vmatpush1.bf16.msra.mxu0 0
  %422 = vmatprep.subr.bf16.mxu0 0
  %423 = vmatpush1.bf16.msra.mxu0 0
  %424 = vmatprep.subr.bf16.mxu0 0
  %425 = vmatpush1.bf16.msra.mxu0 0
  %426 = vmatprep.subr.bf16.mxu0 0
  %427 = vmatpush1.bf16.msra.mxu0 0
  %428 = vmatprep.subr.bf16.mxu0 0
  %429 = vmatpush1.bf16.msra.mxu0 0
  %430 = vmatprep.subr.bf16.mxu0 0
  %431 = vmatpush1.bf16.msra.mxu0 0
  %432 = vmatprep.subr.bf16.mxu0 0
  %433 = vmatpush1.bf16.msra.mxu0 0
  %434 = vmatprep.subr.bf16.mxu0 0
  %435 = vmatpush1.bf16.msra.mxu0 0
  %436 = vmatprep.subr.bf16.mxu0 0
  %437 = vmatpush1.bf16.msra.mxu0 0
  %438 = vmatprep.subr.bf16.mxu0 0
  %439 = vmatpush1.bf16.msra.mxu0 0
  %440 = vmatprep.subr.bf16.mxu0 0
  %441 = vmatpush1.bf16.msra.mxu0 0
  %442 = vmatprep.mubr.bf16.mxu0 0
  %443 = vmatmul.mubr.bf16.gmra.mrb[0].mxu0 %v408
  %v444 = vpop.f32.mrb[0].mxu0
  %v445 = vadd.f32 %v84, %v444
  %v446 = vpop.f32.mrb[0].mxu0
  %v447 = vadd.f32 %v84, %v446
  %v448 = vpop.f32.mrb[0].mxu0
  %v449 = vpop.f32.mrb[0].mxu0
  %450 = vdwg.mxu0
  %451 = vmatprep.subr.bf16.mxu0 %v281
  %452 = vmatpush1.bf16.msra.mxu0 %v280
  %453 = vmatprep.subr.bf16.mxu0 %v297
  %454 = vmatpush1.bf16.msra.mxu0 %v296
  %455 = vmatprep.subr.bf16.mxu0 %v313
  %456 = vmatpush1.bf16.msra.mxu0 %v312
  %457 = vmatprep.subr.bf16.mxu0 %v329
  %458 = vmatpush1.bf16.msra.mxu0 %v328
  %459 = vmatprep.subr.bf16.mxu0 0
  %460 = vmatpush1.bf16.msra.mxu0 0
  %461 = vmatprep.subr.bf16.mxu0 0
  %462 = vmatpush1.bf16.msra.mxu0 0
  %463 = vmatprep.subr.bf16.mxu0 0
  %464 = vmatpush1.bf16.msra.mxu0 0
  %465 = vmatprep.subr.bf16.mxu0 0
  %466 = vmatpush1.bf16.msra.mxu0 0
  %467 = vmatprep.subr.bf16.mxu0 0
  %468 = vmatpush1.bf16.msra.mxu0 0
  %469 = vmatprep.subr.bf16.mxu0 0
  %470 = vmatpush1.bf16.msra.mxu0 0
  %471 = vmatprep.subr.bf16.mxu0 0
  %472 = vmatpush1.bf16.msra.mxu0 0
  %473 = vmatprep.subr.bf16.mxu0 0
  %474 = vmatpush1.bf16.msra.mxu0 0
  %475 = vmatprep.subr.bf16.mxu0 0
  %476 = vmatpush1.bf16.msra.mxu0 0
  %477 = vmatprep.subr.bf16.mxu0 0
  %478 = vmatpush1.bf16.msra.mxu0 0
  %479 = vmatprep.subr.bf16.mxu0 0
  %480 = vmatpush1.bf16.msra.mxu0 0
  %481 = vmatprep.subr.bf16.mxu0 0
  %482 = vmatpush1.bf16.msra.mxu0 0
  %483 = vmatprep.mubr.bf16.mxu0 0
  %484 = vmatmul.mubr.bf16.gmra.mrb[0].mxu0 %v408
  %v485 = vpop.f32.mrb[0].mxu0
  %v486 = vadd.f32 %v84, %v485
  %v487 = vpop.f32.mrb[0].mxu0
  %v488 = vadd.f32 %v84, %v487
  %v489 = vpop.f32.mrb[0].mxu0
  %v490 = vpop.f32.mrb[0].mxu0
  %491 = vdwg.mxu0
  %492 = vmatprep.subr.bf16.mxu0 %v283
  %493 = vmatpush1.bf16.msra.mxu0 %v282
  %494 = vmatprep.subr.bf16.mxu0 %v299
  %495 = vmatpush1.bf16.msra.mxu0 %v298
  %496 = vmatprep.subr.bf16.mxu0 %v315
  %497 = vmatpush1.bf16.msra.mxu0 %v314
  %498 = vmatprep.subr.bf16.mxu0 %v331
  %499 = vmatpush1.bf16.msra.mxu0 %v330
  %500 = vmatprep.subr.bf16.mxu0 0
  %501 = vmatpush1.bf16.msra.mxu0 0
  %502 = vmatprep.subr.bf16.mxu0 0
  %503 = vmatpush1.bf16.msra.mxu0 0
  %504 = vmatprep.subr.bf16.mxu0 0
  %505 = vmatpush1.bf16.msra.mxu0 0
  %506 = vmatprep.subr.bf16.mxu0 0
  %507 = vmatpush1.bf16.msra.mxu0 0
  %508 = vmatprep.subr.bf16.mxu0 0
  %509 = vmatpush1.bf16.msra.mxu0 0
  %510 = vmatprep.subr.bf16.mxu0 0
  %511 = vmatpush1.bf16.msra.mxu0 0
  %512 = vmatprep.subr.bf16.mxu0 0
  %513 = vmatpush1.bf16.msra.mxu0 0
  %514 = vmatprep.subr.bf16.mxu0 0
  %515 = vmatpush1.bf16.msra.mxu0 0
  %516 = vmatprep.subr.bf16.mxu0 0
  %517 = vmatpush1.bf16.msra.mxu0 0
  %518 = vmatprep.subr.bf16.mxu0 0
  %519 = vmatpush1.bf16.msra.mxu0 0
  %520 = vmatprep.subr.bf16.mxu0 0
  %521 = vmatpush1.bf16.msra.mxu0 0
  %522 = vmatprep.subr.bf16.mxu0 0
  %523 = vmatpush1.bf16.msra.mxu0 0
  %524 = vmatprep.mubr.bf16.mxu0 0
  %525 = vmatmul.mubr.bf16.gmra.mrb[0].mxu0 %v408
  %v526 = vpop.f32.mrb[0].mxu0
  %v527 = vadd.f32 %v84, %v526
  %v528 = vpop.f32.mrb[0].mxu0
  %v529 = vadd.f32 %v84, %v528
  %v530 = vpop.f32.mrb[0].mxu0
  %v531 = vpop.f32.mrb[0].mxu0
  %532 = vdwg.mxu0
  %533 = vmatprep.subr.bf16.mxu0 %v285
  %534 = vmatpush1.bf16.msra.mxu0 %v284
  %535 = vmatprep.subr.bf16.mxu0 %v301
  %536 = vmatpush1.bf16.msra.mxu0 %v300
  %537 = vmatprep.subr.bf16.mxu0 %v317
  %538 = vmatpush1.bf16.msra.mxu0 %v316
  %539 = vmatprep.subr.bf16.mxu0 %v333
  %540 = vmatpush1.bf16.msra.mxu0 %v332
  %541 = vmatprep.subr.bf16.mxu0 0
  %542 = vmatpush1.bf16.msra.mxu0 0
  %543 = vmatprep.subr.bf16.mxu0 0
  %544 = vmatpush1.bf16.msra.mxu0 0
  %545 = vmatprep.subr.bf16.mxu0 0
  %546 = vmatpush1.bf16.msra.mxu0 0
  %547 = vmatprep.subr.bf16.mxu0 0
  %548 = vmatpush1.bf16.msra.mxu0 0
  %549 = vmatprep.subr.bf16.mxu0 0
  %550 = vmatpush1.bf16.msra.mxu0 0
  %551 = vmatprep.subr.bf16.mxu0 0
  %552 = vmatpush1.bf16.msra.mxu0 0
  %553 = vmatprep.subr.bf16.mxu0 0
  %554 = vmatpush1.bf16.msra.mxu0 0
  %555 = vmatprep.subr.bf16.mxu0 0
  %556 = vmatpush1.bf16.msra.mxu0 0
  %557 = vmatprep.subr.bf16.mxu0 0
  %558 = vmatpush1.bf16.msra.mxu0 0
  %559 = vmatprep.subr.bf16.mxu0 0
  %560 = vmatpush1.bf16.msra.mxu0 0
  %561 = vmatprep.subr.bf16.mxu0 0
  %562 = vmatpush1.bf16.msra.mxu0 0
  %563 = vmatprep.subr.bf16.mxu0 0
  %564 = vmatpush1.bf16.msra.mxu0 0
  %565 = vmatprep.mubr.bf16.mxu0 0
  %566 = vmatmul.mubr.bf16.gmra.mrb[0].mxu0 %v408
  %v567 = vpop.f32.mrb[0].mxu0
  %v568 = vadd.f32 %v84, %v567
  %v569 = vpop.f32.mrb[0].mxu0
  %v570 = vadd.f32 %v84, %v569
  %v571 = vpop.f32.mrb[0].mxu0
  %v572 = vpop.f32.mrb[0].mxu0
  %573 = vdwg.mxu0
  %574 = vmatprep.subr.bf16.mxu0 %v287
  %575 = vmatpush1.bf16.msra.mxu0 %v286
  %576 = vmatprep.subr.bf16.mxu0 %v303
  %577 = vmatpush1.bf16.msra.mxu0 %v302
  %578 = vmatprep.subr.bf16.mxu0 %v319
  %579 = vmatpush1.bf16.msra.mxu0 %v318
  %580 = vmatprep.subr.bf16.mxu0 %v335
  %581 = vmatpush1.bf16.msra.mxu0 %v334
  %582 = vmatprep.subr.bf16.mxu0 0
  %583 = vmatpush1.bf16.msra.mxu0 0
  %584 = vmatprep.subr.bf16.mxu0 0
  %585 = vmatpush1.bf16.msra.mxu0 0
  %586 = vmatprep.subr.bf16.mxu0 0
  %587 = vmatpush1.bf16.msra.mxu0 0
  %588 = vmatprep.subr.bf16.mxu0 0
  %589 = vmatpush1.bf16.msra.mxu0 0
  %590 = vmatprep.subr.bf16.mxu0 0
  %591 = vmatpush1.bf16.msra.mxu0 0
  %592 = vmatprep.subr.bf16.mxu0 0
  %593 = vmatpush1.bf16.msra.mxu0 0
  %594 = vmatprep.subr.bf16.mxu0 0
  %595 = vmatpush1.bf16.msra.mxu0 0
  %596 = vmatprep.subr.bf16.mxu0 0
  %597 = vmatpush1.bf16.msra.mxu0 0
  %598 = vmatprep.subr.bf16.mxu0 0
  %599 = vmatpush1.bf16.msra.mxu0 0
  %600 = vmatprep.subr.bf16.mxu0 0
  %601 = vmatpush1.bf16.msra.mxu0 0
  %602 = vmatprep.subr.bf16.mxu0 0
  %603 = vmatpush1.bf16.msra.mxu0 0
  %604 = vmatprep.subr.bf16.mxu0 0
  %605 = vmatpush1.bf16.msra.mxu0 0
  %606 = vmatprep.mubr.bf16.mxu0 0
  %607 = vmatmul.mubr.bf16.gmra.mrb[0].mxu0 %v408
  %v608 = vpop.f32.mrb[0].mxu0
  %v609 = vadd.f32 %v84, %v608
  %v610 = vpop.f32.mrb[0].mxu0
  %v611 = vadd.f32 %v84, %v610
  %v612 = vpop.f32.mrb[0].mxu0
  %v613 = vpop.f32.mrb[0].mxu0
  %614 = vdwg.mxu0
  %615 = vmatprep.subr.bf16.mxu0 %v289
  %616 = vmatpush1.bf16.msra.mxu0 %v288
  %617 = vmatprep.subr.bf16.mxu0 %v305
  %618 = vmatpush1.bf16.msra.mxu0 %v304
  %619 = vmatprep.subr.bf16.mxu0 %v321
  %620 = vmatpush1.bf16.msra.mxu0 %v320
  %621 = vmatprep.subr.bf16.mxu0 %v337
  %622 = vmatpush1.bf16.msra.mxu0 %v336
  %623 = vmatprep.subr.bf16.mxu0 0
  %624 = vmatpush1.bf16.msra.mxu0 0
  %625 = vmatprep.subr.bf16.mxu0 0
  %626 = vmatpush1.bf16.msra.mxu0 0
  %627 = vmatprep.subr.bf16.mxu0 0
  %628 = vmatpush1.bf16.msra.mxu0 0
  %629 = vmatprep.subr.bf16.mxu0 0
  %630 = vmatpush1.bf16.msra.mxu0 0
  %631 = vmatprep.subr.bf16.mxu0 0
  %632 = vmatpush1.bf16.msra.mxu0 0
  %633 = vmatprep.subr.bf16.mxu0 0
  %634 = vmatpush1.bf16.msra.mxu0 0
  %635 = vmatprep.subr.bf16.mxu0 0
  %636 = vmatpush1.bf16.msra.mxu0 0
  %637 = vmatprep.subr.bf16.mxu0 0
  %638 = vmatpush1.bf16.msra.mxu0 0
  %639 = vmatprep.subr.bf16.mxu0 0
  %640 = vmatpush1.bf16.msra.mxu0 0
  %641 = vmatprep.subr.bf16.mxu0 0
  %642 = vmatpush1.bf16.msra.mxu0 0
  %643 = vmatprep.subr.bf16.mxu0 0
  %644 = vmatpush1.bf16.msra.mxu0 0
  %645 = vmatprep.subr.bf16.mxu0 0
  %646 = vmatpush1.bf16.msra.mxu0 0
  %647 = vmatprep.mubr.bf16.mxu0 0
  %648 = vmatmul.mubr.bf16.gmra.mrb[0].mxu0 %v408
  %v649 = vpop.f32.mrb[0].mxu0
  %v650 = vadd.f32 %v84, %v649
  %v651 = vpop.f32.mrb[0].mxu0
  %v652 = vadd.f32 %v84, %v651
  %v653 = vpop.f32.mrb[0].mxu0
  %v654 = vpop.f32.mrb[0].mxu0
  %655 = vdwg.mxu0
  %656 = vmatprep.subr.bf16.mxu0 %v291
  %657 = vmatpush1.bf16.msra.mxu0 %v290
  %658 = vmatprep.subr.bf16.mxu0 %v307
  %659 = vmatpush1.bf16.msra.mxu0 %v306
  %660 = vmatprep.subr.bf16.mxu0 %v323
  %661 = vmatpush1.bf16.msra.mxu0 %v322
  %662 = vmatprep.subr.bf16.mxu0 %v339
  %663 = vmatpush1.bf16.msra.mxu0 %v338
  %664 = vmatprep.subr.bf16.mxu0 0
  %665 = vmatpush1.bf16.msra.mxu0 0
  %666 = vmatprep.subr.bf16.mxu0 0
  %667 = vmatpush1.bf16.msra.mxu0 0
  %668 = vmatprep.subr.bf16.mxu0 0
  %669 = vmatpush1.bf16.msra.mxu0 0
  %670 = vmatprep.subr.bf16.mxu0 0
  %671 = vmatpush1.bf16.msra.mxu0 0
  %672 = vmatprep.subr.bf16.mxu0 0
  %673 = vmatpush1.bf16.msra.mxu0 0
  %674 = vmatprep.subr.bf16.mxu0 0
  %675 = vmatpush1.bf16.msra.mxu0 0
  %676 = vmatprep.subr.bf16.mxu0 0
  %677 = vmatpush1.bf16.msra.mxu0 0
  %678 = vmatprep.subr.bf16.mxu0 0
  %679 = vmatpush1.bf16.msra.mxu0 0
  %680 = vmatprep.subr.bf16.mxu0 0
  %681 = vmatpush1.bf16.msra.mxu0 0
  %682 = vmatprep.subr.bf16.mxu0 0
  %683 = vmatpush1.bf16.msra.mxu0 0
  %684 = vmatprep.subr.bf16.mxu0 0
  %685 = vmatpush1.bf16.msra.mxu0 0
  %686 = vmatprep.subr.bf16.mxu0 0
  %687 = vmatpush1.bf16.msra.mxu0 0
  %688 = vmatprep.mubr.bf16.mxu0 0
  %689 = vmatmul.mubr.bf16.gmra.mrb[0].mxu0 %v408
  %v690 = vpop.f32.mrb[0].mxu0
  %v691 = vadd.f32 %v84, %v690
  %v692 = vpop.f32.mrb[0].mxu0
  %v693 = vadd.f32 %v84, %v692
  %v694 = vpop.f32.mrb[0].mxu0
  %v695 = vpop.f32.mrb[0].mxu0
  %696 = vdwg.mxu0
  %697 = vmatprep.subr.bf16.mxu0 %v293
  %698 = vmatpush1.bf16.msra.mxu0 %v292
  %699 = vmatprep.subr.bf16.mxu0 %v309
  %700 = vmatpush1.bf16.msra.mxu0 %v308
  %701 = vmatprep.subr.bf16.mxu0 %v325
  %702 = vmatpush1.bf16.msra.mxu0 %v324
  %703 = vmatprep.subr.bf16.mxu0 %v341
  %704 = vmatpush1.bf16.msra.mxu0 %v340
  %705 = vmatprep.subr.bf16.mxu0 0
  %706 = vmatpush1.bf16.msra.mxu0 0
  %707 = vmatprep.subr.bf16.mxu0 0
  %708 = vmatpush1.bf16.msra.mxu0 0
  %709 = vmatprep.subr.bf16.mxu0 0
  %710 = vmatpush1.bf16.msra.mxu0 0
  %711 = vmatprep.subr.bf16.mxu0 0
  %712 = vmatpush1.bf16.msra.mxu0 0
  %713 = vmatprep.subr.bf16.mxu0 0
  %714 = vmatpush1.bf16.msra.mxu0 0
  %715 = vmatprep.subr.bf16.mxu0 0
  %716 = vmatpush1.bf16.msra.mxu0 0
  %717 = vmatprep.subr.bf16.mxu0 0
  %718 = vmatpush1.bf16.msra.mxu0 0
  %719 = vmatprep.subr.bf16.mxu0 0
  %720 = vmatpush1.bf16.msra.mxu0 0
  %721 = vmatprep.subr.bf16.mxu0 0
  %722 = vmatpush1.bf16.msra.mxu0 0
  %723 = vmatprep.subr.bf16.mxu0 0
  %724 = vmatpush1.bf16.msra.mxu0 0
  %725 = vmatprep.subr.bf16.mxu0 0
  %726 = vmatpush1.bf16.msra.mxu0 0
  %727 = vmatprep.subr.bf16.mxu0 0
  %728 = vmatpush1.bf16.msra.mxu0 0
  %729 = vmatprep.mubr.bf16.mxu0 0
  %730 = vmatmul.mubr.bf16.gmra.mrb[0].mxu0 %v408
  %v731 = vpop.f32.mrb[0].mxu0
  %v732 = vadd.f32 %v84, %v731
  %v733 = vpop.f32.mrb[0].mxu0
  %v734 = vadd.f32 %v84, %v733
  %v735 = vpop.f32.mrb[0].mxu0
  %v736 = vpop.f32.mrb[0].mxu0
  %737 = vdwg.mxu0
  %vm738 = vcmp.ge.f32.partialorder %v445, 0.0
  %vm739 = vcmp.ge.f32.partialorder %v447, 0.0
  %vm740 = vcmp.ge.f32.partialorder %v486, 0.0
  %vm741 = vcmp.ge.f32.partialorder %v488, 0.0
  %vm742 = vcmp.ge.f32.partialorder %v527, 0.0
  %vm743 = vcmp.ge.f32.partialorder %v529, 0.0
  %vm744 = vcmp.ge.f32.partialorder %v568, 0.0
  %vm745 = vcmp.ge.f32.partialorder %v570, 0.0
  %vm746 = vcmp.ge.f32.partialorder %v609, 0.0
  %vm747 = vcmp.ge.f32.partialorder %v611, 0.0
  %vm748 = vcmp.ge.f32.partialorder %v650, 0.0
  %vm749 = vcmp.ge.f32.partialorder %v652, 0.0
  %vm750 = vcmp.ge.f32.partialorder %v691, 0.0
  %vm751 = vcmp.ge.f32.partialorder %v693, 0.0
  %vm752 = vcmp.ge.f32.partialorder %v732, 0.0
  %vm753 = vcmp.ge.f32.partialorder %v734, 0.0
  %v754 = vmul.f32 %v445, 0.2
  %v755 = vmul.f32 %v447, 0.2
  %v756 = vmul.f32 %v486, 0.2
  %v757 = vmul.f32 %v488, 0.2
  %v758 = vmul.f32 %v527, 0.2
  %v759 = vmul.f32 %v529, 0.2
  %v760 = vmul.f32 %v568, 0.2
  %v761 = vmul.f32 %v570, 0.2
  %v762 = vmul.f32 %v609, 0.2
  %v763 = vmul.f32 %v611, 0.2
  %v764 = vmul.f32 %v650, 0.2
  %v765 = vmul.f32 %v652, 0.2
  %v766 = vmul.f32 %v691, 0.2
  %v767 = vmul.f32 %v693, 0.2
  %v768 = vmul.f32 %v732, 0.2
  %v769 = vmul.f32 %v734, 0.2
  %v770 = vsel %vm738, %v445, %v754
  %v771 = vsel %vm739, %v447, %v755
  %v772 = vsel %vm740, %v486, %v756
  %v773 = vsel %vm741, %v488, %v757
  %v774 = vsel %vm742, %v527, %v758
  %v775 = vsel %vm743, %v529, %v759
  %v776 = vsel %vm744, %v568, %v760
  %v777 = vsel %vm745, %v570, %v761
  %v778 = vsel %vm746, %v609, %v762
  %v779 = vsel %vm747, %v611, %v763
  %v780 = vsel %vm748, %v650, %v764
  %v781 = vsel %vm749, %v652, %v765
  %v782 = vsel %vm750, %v691, %v766
  %v783 = vsel %vm751, %v693, %v767
  %v784 = vsel %vm752, %v732, %v768
  %v785 = vsel %vm753, %v734, %v769
  %v786 = vpack.c.bf16 %v770, %v770
  %v787 = vpack.c.bf16 %v771, %v771
  %v788 = vpack.c.bf16 %v772, %v772
  %v789 = vpack.c.bf16 %v773, %v773
  %v790 = vpack.c.bf16 %v774, %v774
  %v791 = vpack.c.bf16 %v775, %v775
  %v792 = vpack.c.bf16 %v776, %v776
  %v793 = vpack.c.bf16 %v777, %v777
  %v794 = vpack.c.bf16 %v778, %v778
  %v795 = vpack.c.bf16 %v779, %v779
  %v796 = vpack.c.bf16 %v780, %v780
  %v797 = vpack.c.bf16 %v781, %v781
  %v798 = vpack.c.bf16 %v782, %v782
  %v799 = vpack.c.bf16 %v783, %v783
  %v800 = vpack.c.bf16 %v784, %v784
  %v801 = vpack.c.bf16 %v785, %v785
  %v818 = vunpack.c.l.b16 %v786
  %v819 = vunpack.c.l.b16 %v787
  %v820 = vunpack.c.l.b16 %v788
  %v821 = vunpack.c.l.b16 %v789
  %v822 = vunpack.c.l.b16 %v790
  %v823 = vunpack.c.l.b16 %v791
  %v824 = vunpack.c.l.b16 %v792
  %v825 = vunpack.c.l.b16 %v793
  %v826 = vunpack.c.l.b16 %v794
  %v827 = vunpack.c.l.b16 %v795
  %v828 = vunpack.c.l.b16 %v796
  %v829 = vunpack.c.l.b16 %v797
  %v830 = vunpack.c.l.b16 %v798
  %v831 = vunpack.c.l.b16 %v799
  %v832 = vunpack.c.l.b16 %v800
  %v833 = vunpack.c.l.b16 %v801
  %v834 = vpack.c.b16 %v819, %v818
  %v835 = vpack.c.b16 %v821, %v820
  %v836 = vpack.c.b16 %v823, %v822
  %v837 = vpack.c.b16 %v825, %v824
  %v838 = vpack.c.b16 %v827, %v826
  %v839 = vpack.c.b16 %v829, %v828
  %v840 = vpack.c.b16 %v831, %v830
  %v841 = vpack.c.b16 %v833, %v832
  %850 = vst [vmem:[%s3] sm:$0xff] %v834
  %851 = vst [vmem:[%s3 + $0x8] sm:$0xff] %v835
  %852 = vst [vmem:[%s3 + $0x10] sm:$0xff] %v836
  %853 = vst [vmem:[%s3 + $0x18] sm:$0xff] %v837
  %854 = vst [vmem:[%s3 + $0x20] sm:$0xff] %v838
  %855 = vst [vmem:[%s3 + $0x28] sm:$0xff] %v839
  %856 = vst [vmem:[%s3 + $0x30] sm:$0xff] %v840
  %857 = vst [vmem:[%s3 + $0x38] sm:$0xff] %v841
  // Predicated region
  $region14: #{_lambda_.5} parent=0 // pred_check
    _
  $region15: #{_lambda_.5} parent=0 // pred_check_branch
    %859 = sbr.rel (0) target = $region17
  $region16: #{_lambda_.5} parent=0 // pred_region
    _
  $region17: #{_lambda_.5} parent=0 // pred_fallthru
    _
  // Predicated region
  $region18: #{_lambda_.5} parent=0 // pred_check
    _
  $region19: #{_lambda_.5} parent=0 // pred_check_branch
    %861 = sbr.rel (0) target = $region21
  $region20: #{_lambda_.5} parent=0 // pred_region
    _
  $region21: #{_lambda_.5} parent=0 // pred_fallthru
    _

// kernel: _lambda_.6
$region0: #{_lambda_.6}
  #allocation0 [shape = 'u32[]', space=smem, size = 0x4, offset = 0x4, fixed_abs, tag = 'smem constant byte address 0x4 - core index']
  #allocation1 [shape = 'u32[144,128]{1,0:T(1,128)}', space=vmem, size = 0x12000, scoped, tag = 'internal scratch']
  %s0 = inlined_call_operand.vmem [shape: bf16[16,128], index: 0, kind: input, shape index: {}]
  %s1 = inlined_call_operand.vmem [shape: bf16[128,512], index: 1, kind: input, shape index: {}]
  %s2 = inlined_call_operand.vmem [shape: f32[16,1], index: 2, kind: input, shape index: {}]
  %s3 = inlined_call_operand.vmem [shape: f32[16,1], index: 3, kind: input, shape index: {}]
  %s4 = inlined_call_operand.vmem [shape: bf16[16,512], index: 4, kind: output, shape index: {}]
  %s5 = sld [smem:[#allocation0]]
  $region26: #{_lambda_.6} parent=0
    _
  %s7 = ssub.s32 1, %s5
  %s8 = scalar_select 0, %s7, %s5
  // Predicated region
  $region2: #{_lambda_.6} parent=0 // pred_check
    _
  $region3: #{_lambda_.6} parent=0 // pred_check_branch
    %10 = sbr.rel (0) target = $region5
  $region4: #{_lambda_.6} parent=0 // pred_region
    _
  $region5: #{_lambda_.6} parent=0 // pred_fallthru
    _
  // Predicated region
  $region6: #{_lambda_.6} parent=0 // pred_check
    _
  $region7: #{_lambda_.6} parent=0 // pred_check_branch
    %12 = sbr.rel (0) target = $region9
  $region8: #{_lambda_.6} parent=0 // pred_region
    _
  $region9: #{_lambda_.6} parent=0 // pred_fallthru
    _
  // Predicated region
  $region10: #{_lambda_.6} parent=0 // pred_check
    _
  $region11: #{_lambda_.6} parent=0 // pred_check_branch
    %14 = sbr.rel (0) target = $region13
  $region12: #{_lambda_.6} parent=0 // pred_region
    _
  $region13: #{_lambda_.6} parent=0 // pred_fallthru
    _
  // Predicated region
  $region14: #{_lambda_.6} parent=0 // pred_check
    _
  $region15: #{_lambda_.6} parent=0 // pred_check_branch
    %16 = sbr.rel (0) target = $region17
  $region16: #{_lambda_.6} parent=0 // pred_region
    _
  $region17: #{_lambda_.6} parent=0 // pred_fallthru
    _
  %v18 = vld [vmem:[%s0] sm:$0xf]
  %v19 = vld [vmem:[%s0 + $0x4] sm:$0xf]
  %v20 = vld [vmem:[%s1] sm:$0xff]
  %v21 = vld [vmem:[%s1 + $0x8] sm:$0xff]
  %v22 = vld [vmem:[%s1 + $0x10] sm:$0xff]
  %v23 = vld [vmem:[%s1 + $0x18] sm:$0xff]
  %v24 = vld [vmem:[%s1 + $0x20] sm:$0xff]
  %v25 = vld [vmem:[%s1 + $0x28] sm:$0xff]
  %v26 = vld [vmem:[%s1 + $0x30] sm:$0xff]
  %v27 = vld [vmem:[%s1 + $0x38] sm:$0xff]
  %v28 = vld [vmem:[%s1 + $0x40] sm:$0xff]
  %v29 = vld [vmem:[%s1 + $0x48] sm:$0xff]
  %v30 = vld [vmem:[%s1 + $0x50] sm:$0xff]
  %v31 = vld [vmem:[%s1 + $0x58] sm:$0xff]
  %v32 = vld [vmem:[%s1 + $0x60] sm:$0xff]
  %v33 = vld [vmem:[%s1 + $0x68] sm:$0xff]
  %v34 = vld [vmem:[%s1 + $0x70] sm:$0xff]
  %v35 = vld [vmem:[%s1 + $0x78] sm:$0xff]
  %v36 = vld [vmem:[%s1 + $0x80] sm:$0xff]
  %v37 = vld [vmem:[%s1 + $0x88] sm:$0xff]
  %v38 = vld [vmem:[%s1 + $0x90] sm:$0xff]
  %v39 = vld [vmem:[%s1 + $0x98] sm:$0xff]
  %v40 = vld [vmem:[%s1 + $0xa0] sm:$0xff]
  %v41 = vld [vmem:[%s1 + $0xa8] sm:$0xff]
  %v42 = vld [vmem:[%s1 + $0xb0] sm:$0xff]
  %v43 = vld [vmem:[%s1 + $0xb8] sm:$0xff]
  %v44 = vld [vmem:[%s1 + $0xc0] sm:$0xff]
  %v45 = vld [vmem:[%s1 + $0xc8] sm:$0xff]
  %v46 = vld [vmem:[%s1 + $0xd0] sm:$0xff]
  %v47 = vld [vmem:[%s1 + $0xd8] sm:$0xff]
  %v48 = vld [vmem:[%s1 + $0xe0] sm:$0xff]
  %v49 = vld [vmem:[%s1 + $0xe8] sm:$0xff]
  %v50 = vld [vmem:[%s1 + $0xf0] sm:$0xff]
  %v51 = vld [vmem:[%s1 + $0xf8] sm:$0xff]
  %v54 = vunpack.c.l.b16 %v18
  %v55 = vunpack.c.l.b16 %v19
  %v56 = vpack.c.b16 %v55, %v54
  %v90 = vunpack.c.l.b16 %v20
  %v91 = vunpack.c.h.b16 %v20
  %v92 = vunpack.c.l.b16 %v21
  %v93 = vunpack.c.h.b16 %v21
  %v94 = vunpack.c.l.b16 %v22
  %v95 = vunpack.c.h.b16 %v22
  %v96 = vunpack.c.l.b16 %v23
  %v97 = vunpack.c.h.b16 %v23
  %v98 = vunpack.c.l.b16 %v24
  %v99 = vunpack.c.h.b16 %v24
  %v100 = vunpack.c.l.b16 %v25
  %v101 = vunpack.c.h.b16 %v25
  %v102 = vunpack.c.l.b16 %v26
  %v103 = vunpack.c.h.b16 %v26
  %v104 = vunpack.c.l.b16 %v27
  %v105 = vunpack.c.h.b16 %v27
  %v106 = vunpack.c.l.b16 %v28
  %v107 = vunpack.c.h.b16 %v28
  %v108 = vunpack.c.l.b16 %v29
  %v109 = vunpack.c.h.b16 %v29
  %v110 = vunpack.c.l.b16 %v30
  %v111 = vunpack.c.h.b16 %v30
  %v112 = vunpack.c.l.b16 %v31
  %v113 = vunpack.c.h.b16 %v31
  %v114 = vunpack.c.l.b16 %v32
  %v115 = vunpack.c.h.b16 %v32
  %v116 = vunpack.c.l.b16 %v33
  %v117 = vunpack.c.h.b16 %v33
  %v118 = vunpack.c.l.b16 %v34
  %v119 = vunpack.c.h.b16 %v34
  %v120 = vunpack.c.l.b16 %v35
  %v121 = vunpack.c.h.b16 %v35
  %v122 = vunpack.c.l.b16 %v36
  %v123 = vunpack.c.h.b16 %v36
  %v124 = vunpack.c.l.b16 %v37
  %v125 = vunpack.c.h.b16 %v37
  %v126 = vunpack.c.l.b16 %v38
  %v127 = vunpack.c.h.b16 %v38
  %v128 = vunpack.c.l.b16 %v39
  %v129 = vunpack.c.h.b16 %v39
  %v130 = vunpack.c.l.b16 %v40
  %v131 = vunpack.c.h.b16 %v40
  %v132 = vunpack.c.l.b16 %v41
  %v133 = vunpack.c.h.b16 %v41
  %v134 = vunpack.c.l.b16 %v42
  %v135 = vunpack.c.h.b16 %v42
  %v136 = vunpack.c.l.b16 %v43
  %v137 = vunpack.c.h.b16 %v43
  %v138 = vunpack.c.l.b16 %v44
  %v139 = vunpack.c.h.b16 %v44
  %v140 = vunpack.c.l.b16 %v45
  %v141 = vunpack.c.h.b16 %v45
  %v142 = vunpack.c.l.b16 %v46
  %v143 = vunpack.c.h.b16 %v46
  %v144 = vunpack.c.l.b16 %v47
  %v145 = vunpack.c.h.b16 %v47
  %v146 = vunpack.c.l.b16 %v48
  %v147 = vunpack.c.h.b16 %v48
  %v148 = vunpack.c.l.b16 %v49
  %v149 = vunpack.c.h.b16 %v49
  %v150 = vunpack.c.l.b16 %v50
  %v151 = vunpack.c.h.b16 %v50
  %v152 = vunpack.c.l.b16 %v51
  %v153 = vunpack.c.h.b16 %v51
  %v154 = vpack.c.b16 %v94, %v90
  %v155 = vpack.c.b16 %v95, %v91
  %v156 = vpack.c.b16 %v96, %v92
  %v157 = vpack.c.b16 %v97, %v93
  %v158 = vpack.c.b16 %v102, %v98
  %v159 = vpack.c.b16 %v103, %v99
  %v160 = vpack.c.b16 %v104, %v100
  %v161 = vpack.c.b16 %v105, %v101
  %v162 = vpack.c.b16 %v110, %v106
  %v163 = vpack.c.b16 %v111, %v107
  %v164 = vpack.c.b16 %v112, %v108
  %v165 = vpack.c.b16 %v113, %v109
  %v166 = vpack.c.b16 %v118, %v114
  %v167 = vpack.c.b16 %v119, %v115
  %v168 = vpack.c.b16 %v120, %v116
  %v169 = vpack.c.b16 %v121, %v117
  %v170 = vpack.c.b16 %v126, %v122
  %v171 = vpack.c.b16 %v127, %v123
  %v172 = vpack.c.b16 %v128, %v124
  %v173 = vpack.c.b16 %v129, %v125
  %v174 = vpack.c.b16 %v134, %v130
  %v175 = vpack.c.b16 %v135, %v131
  %v176 = vpack.c.b16 %v136, %v132
  %v177 = vpack.c.b16 %v137, %v133
  %v178 = vpack.c.b16 %v142, %v138
  %v179 = vpack.c.b16 %v143, %v139
  %v180 = vpack.c.b16 %v144, %v140
  %v181 = vpack.c.b16 %v145, %v141
  %v182 = vpack.c.b16 %v150, %v146
  %v183 = vpack.c.b16 %v151, %v147
  %v184 = vpack.c.b16 %v152, %v148
  %v185 = vpack.c.b16 %v153, %v149
  %218 = vmatprep.subr.bf16.mxu0 %v155
  %219 = vmatpush1.bf16.msra.mxu0 %v154
  %220 = vmatprep.subr.bf16.mxu0 %v159
  %221 = vmatpush1.bf16.msra.mxu0 %v158
  %222 = vmatprep.subr.bf16.mxu0 %v163
  %223 = vmatpush1.bf16.msra.mxu0 %v162
  %224 = vmatprep.subr.bf16.mxu0 %v167
  %225 = vmatpush1.bf16.msra.mxu0 %v166
  %226 = vmatprep.subr.bf16.mxu0 %v171
  %227 = vmatpush1.bf16.msra.mxu0 %v170
  %228 = vmatprep.subr.bf16.mxu0 %v175
  %229 = vmatpush1.bf16.msra.mxu0 %v174
  %230 = vmatprep.subr.bf16.mxu0 %v179
  %231 = vmatpush1.bf16.msra.mxu0 %v178
  %232 = vmatprep.subr.bf16.mxu0 %v183
  %233 = vmatpush1.bf16.msra.mxu0 %v182
  %234 = vmatprep.subr.bf16.mxu0 0
  %235 = vmatpush1.bf16.msra.mxu0 0
  %236 = vmatprep.subr.bf16.mxu0 0
  %237 = vmatpush1.bf16.msra.mxu0 0
  %238 = vmatprep.subr.bf16.mxu0 0
  %239 = vmatpush1.bf16.msra.mxu0 0
  %240 = vmatprep.subr.bf16.mxu0 0
  %241 = vmatpush1.bf16.msra.mxu0 0
  %242 = vmatprep.subr.bf16.mxu0 0
  %243 = vmatpush1.bf16.msra.mxu0 0
  %244 = vmatprep.subr.bf16.mxu0 0
  %245 = vmatpush1.bf16.msra.mxu0 0
  %246 = vmatprep.subr.bf16.mxu0 0
  %247 = vmatpush1.bf16.msra.mxu0 0
  %248 = vmatprep.subr.bf16.mxu0 0
  %249 = vmatpush1.bf16.msra.mxu0 0
  %250 = vmatprep.mubr.bf16.mxu0 0
  %251 = vmatmul.mubr.bf16.gmra.mrb[0].mxu0 %v56
  %v252 = vpop.f32.mrb[0].mxu0
  %v253 = vadd.f32 0.0, %v252
  %v254 = vpop.f32.mrb[0].mxu0
  %v255 = vadd.f32 0.0, %v254
  %v256 = vpop.f32.mrb[0].mxu0
  %v257 = vadd.f32 0.0, %v256
  %v258 = vpop.f32.mrb[0].mxu0
  %v259 = vadd.f32 0.0, %v258
  %260 = vdwg.mxu0
  %261 = vmatprep.subr.bf16.mxu0 %v157
  %262 = vmatpush1.bf16.msra.mxu0 %v156
  %263 = vmatprep.subr.bf16.mxu0 %v161
  %264 = vmatpush1.bf16.msra.mxu0 %v160
  %265 = vmatprep.subr.bf16.mxu0 %v165
  %266 = vmatpush1.bf16.msra.mxu0 %v164
  %267 = vmatprep.subr.bf16.mxu0 %v169
  %268 = vmatpush1.bf16.msra.mxu0 %v168
  %269 = vmatprep.subr.bf16.mxu0 %v173
  %270 = vmatpush1.bf16.msra.mxu0 %v172
  %271 = vmatprep.subr.bf16.mxu0 %v177
  %272 = vmatpush1.bf16.msra.mxu0 %v176
  %273 = vmatprep.subr.bf16.mxu0 %v181
  %274 = vmatpush1.bf16.msra.mxu0 %v180
  %275 = vmatprep.subr.bf16.mxu0 %v185
  %276 = vmatpush1.bf16.msra.mxu0 %v184
  %277 = vmatprep.subr.bf16.mxu0 0
  %278 = vmatpush1.bf16.msra.mxu0 0
  %279 = vmatprep.subr.bf16.mxu0 0
  %280 = vmatpush1.bf16.msra.mxu0 0
  %281 = vmatprep.subr.bf16.mxu0 0
  %282 = vmatpush1.bf16.msra.mxu0 0
  %283 = vmatprep.subr.bf16.mxu0 0
  %284 = vmatpush1.bf16.msra.mxu0 0
  %285 = vmatprep.subr.bf16.mxu0 0
  %286 = vmatpush1.bf16.msra.mxu0 0
  %287 = vmatprep.subr.bf16.mxu0 0
  %288 = vmatpush1.bf16.msra.mxu0 0
  %289 = vmatprep.subr.bf16.mxu0 0
  %290 = vmatpush1.bf16.msra.mxu0 0
  %291 = vmatprep.subr.bf16.mxu0 0
  %292 = vmatpush1.bf16.msra.mxu0 0
  %293 = vmatprep.mubr.bf16.mxu0 0
  %294 = vmatmul.mubr.bf16.gmra.mrb[0].mxu0 %v56
  %v295 = vpop.f32.mrb[0].mxu0
  %v296 = vadd.f32 0.0, %v295
  %v297 = vpop.f32.mrb[0].mxu0
  %v298 = vadd.f32 0.0, %v297
  %v299 = vpop.f32.mrb[0].mxu0
  %v300 = vadd.f32 0.0, %v299
  %v301 = vpop.f32.mrb[0].mxu0
  %v302 = vadd.f32 0.0, %v301
  %303 = vdwg.mxu0
  %v304 = vadd.f32 %v253, %v255
  %v305 = vadd.f32 %v304, %v296
  %v306 = vadd.f32 %v305, %v298
  %307 = vadd.xlane.f32.xlu0 %v306
  %v308 = vpop.xlane.xlu0 %307
  %v309 = vadd.f32 %v257, %v259
  %v310 = vadd.f32 %v309, %v300
  %v311 = vadd.f32 %v310, %v302
  %312 = vadd.xlane.f32.xlu0 %v311
  %v313 = vpop.xlane.xlu0 %312
  %v314 = vmul.f32 %v308, 0.001953125
  %v315 = vmul.f32 %v313, 0.001953125
  %v316 = vmul.f32 %v253, %v253
  %v317 = vmul.f32 %v255, %v255
  %v318 = vmul.f32 %v296, %v296
  %v319 = vmul.f32 %v298, %v298
  %v320 = vmul.f32 %v257, %v257
  %v321 = vmul.f32 %v259, %v259
  %v322 = vmul.f32 %v300, %v300
  %v323 = vmul.f32 %v302, %v302
  %v324 = vadd.f32 %v316, %v317
  %v325 = vadd.f32 %v324, %v318
  %v326 = vadd.f32 %v325, %v319
  %327 = vadd.xlane.f32.xlu0 %v326
  %v328 = vpop.xlane.xlu0 %327
  %v329 = vadd.f32 %v320, %v321
  %v330 = vadd.f32 %v329, %v322
  %v331 = vadd.f32 %v330, %v323
  %332 = vadd.xlane.f32.xlu0 %v331
  %v333 = vpop.xlane.xlu0 %332
  %v334 = vmul.f32 %v328, 0.001953125
  %v335 = vmul.f32 %v333, 0.001953125
  %v336 = vmul.f32 %v314, %v314
  %v337 = vmul.f32 %v315, %v315
  %v338 = vsub.f32 %v334, %v336
  %v339 = vsub.f32 %v335, %v337
  %v340 = vmax.f32 %v338, 0.0
  %v341 = vmax.f32 %v339, 0.0
  %v342 = vadd.f32 %v340, 1e-05
  %v343 = vadd.f32 %v341, 1e-05
  %v344 = vrsqrt.pop %v342
  %v345 = vrsqrt.pop %v343
  %v346 = vld [vmem:[%s2] sm:$0xff]
  %v347 = vld [vmem:[%s2 + $0x8] sm:$0xff]
  %v348 = vmul.f32 %v344, %v346
  %v349 = vmul.f32 %v345, %v347
  %v350 = vld [vmem:[%s3] sm:$0xff]
  %v351 = vld [vmem:[%s3 + $0x8] sm:$0xff]
  %v352 = vmul.f32 %v314, %v348
  %v353 = vmul.f32 %v315, %v349
  %v354 = vsub.f32 %v350, %v352
  %v355 = vsub.f32 %v351, %v353
  %357 = vset.pattern.permute.xlu0 0
  %358 = vperm.xlu0 %357, %v348
  %v359 = vpop.permute.xlu0 %358
  %362 = vset.pattern.permute.xlu0 0
  %363 = vperm.xlu0 %362, %v349
  %v364 = vpop.permute.xlu0 %363
  %v366 = vmul.f32 %v253, %v359
  %v367 = vmul.f32 %v255, %v359
  %v368 = vmul.f32 %v296, %v359
  %v369 = vmul.f32 %v298, %v359
  %v370 = vmul.f32 %v257, %v364
  %v371 = vmul.f32 %v259, %v364
  %v372 = vmul.f32 %v300, %v364
  %v373 = vmul.f32 %v302, %v364
  %375 = vset.pattern.permute.xlu0 0
  %376 = vperm.xlu0 %375, %v354
  %v377 = vpop.permute.xlu0 %376
  %380 = vset.pattern.permute.xlu0 0
  %381 = vperm.xlu0 %380, %v355
  %v382 = vpop.permute.xlu0 %381
  %v384 = vadd.f32 %v366, %v377
  %v385 = vadd.f32 %v367, %v377
  %v386 = vadd.f32 %v368, %v377
  %v387 = vadd.f32 %v369, %v377
  %v388 = vadd.f32 %v370, %v382
  %v389 = vadd.f32 %v371, %v382
  %v390 = vadd.f32 %v372, %v382
  %v391 = vadd.f32 %v373, %v382
  %vm392 = vcmp.ge.f32.partialorder %v384, 0.0
  %vm393 = vcmp.ge.f32.partialorder %v385, 0.0
  %vm394 = vcmp.ge.f32.partialorder %v386, 0.0
  %vm395 = vcmp.ge.f32.partialorder %v387, 0.0
  %vm396 = vcmp.ge.f32.partialorder %v388, 0.0
  %vm397 = vcmp.ge.f32.partialorder %v389, 0.0
  %vm398 = vcmp.ge.f32.partialorder %v390, 0.0
  %vm399 = vcmp.ge.f32.partialorder %v391, 0.0
  %v400 = vmul.f32 %v384, 0.2
  %v401 = vmul.f32 %v385, 0.2
  %v402 = vmul.f32 %v386, 0.2
  %v403 = vmul.f32 %v387, 0.2
  %v404 = vmul.f32 %v388, 0.2
  %v405 = vmul.f32 %v389, 0.2
  %v406 = vmul.f32 %v390, 0.2
  %v407 = vmul.f32 %v391, 0.2
  %v408 = vsel %vm392, %v384, %v400
  %v409 = vsel %vm393, %v385, %v401
  %v410 = vsel %vm394, %v386, %v402
  %v411 = vsel %vm395, %v387, %v403
  %v412 = vsel %vm396, %v388, %v404
  %v413 = vsel %vm397, %v389, %v405
  %v414 = vsel %vm398, %v390, %v406
  %v415 = vsel %vm399, %v391, %v407
  %v416 = vpack.c.bf16 %v412, %v408
  %v417 = vpack.c.bf16 %v413, %v409
  %v418 = vpack.c.bf16 %v414, %v410
  %v419 = vpack.c.bf16 %v415, %v411
  %v424 = vunpack.c.l.b16 %v416
  %v425 = vunpack.c.l.b16 %v417
  %v426 = vunpack.c.l.b16 %v418
  %v427 = vunpack.c.l.b16 %v419
  %v428 = vunpack.c.h.b16 %v416
  %v429 = vunpack.c.h.b16 %v417
  %v430 = vunpack.c.h.b16 %v418
  %v431 = vunpack.c.h.b16 %v419
  %v432 = vpack.c.b16 %v425, %v424
  %v433 = vpack.c.b16 %v427, %v426
  %v434 = vpack.c.b16 %v429, %v428
  %v435 = vpack.c.b16 %v431, %v430
  %440 = vst [vmem:[%s4] sm:$0xff] %v432
  %441 = vst [vmem:[%s4 + $0x8] sm:$0xff] %v433
  %442 = vst [vmem:[%s4 + $0x10] sm:$0xff] %v434
  %443 = vst [vmem:[%s4 + $0x18] sm:$0xff] %v435
  // Predicated region
  $region18: #{_lambda_.6} parent=0 // pred_check
    _
  $region19: #{_lambda_.6} parent=0 // pred_check_branch
    %445 = sbr.rel (0) target = $region21
  $region20: #{_lambda_.6} parent=0 // pred_region
    _
  $region21: #{_lambda_.6} parent=0 // pred_fallthru
    _
  // Predicated region
  $region22: #{_lambda_.6} parent=0 // pred_check
    _
  $region23: #{_lambda_.6} parent=0 // pred_check_branch
    %447 = sbr.rel (0) target = $region25
  $region24: #{_lambda_.6} parent=0 // pred_region
    _
  $region25: #{_lambda_.6} parent=0 // pred_fallthru
    _

// kernel: _lambda_.7
$region0: #{_lambda_.7}
  #allocation0 [shape = 'u32[]', space=smem, size = 0x4, offset = 0x4, fixed_abs, tag = 'smem constant byte address 0x4 - core index']
  #allocation1 [shape = 'u32[144,128]{1,0:T(1,128)}', space=vmem, size = 0x12000, scoped, tag = 'internal scratch']
  %s0 = inlined_call_operand.vmem [shape: bf16[32,256], index: 0, kind: input, shape index: {}]
  %s1 = inlined_call_operand.vmem [shape: bf16[256,128], index: 1, kind: input, shape index: {}]
  %s2 = inlined_call_operand.vmem [shape: f32[32,1], index: 2, kind: input, shape index: {}]
  %s3 = inlined_call_operand.vmem [shape: f32[32,1], index: 3, kind: input, shape index: {}]
  %s4 = inlined_call_operand.vmem [shape: bf16[32,128], index: 4, kind: output, shape index: {}]
  %s5 = sld [smem:[#allocation0]]
  $region26: #{_lambda_.7} parent=0
    _
  %s7 = ssub.s32 1, %s5
  %s8 = scalar_select 0, %s7, %s5
  // Predicated region
  $region2: #{_lambda_.7} parent=0 // pred_check
    _
  $region3: #{_lambda_.7} parent=0 // pred_check_branch
    %10 = sbr.rel (0) target = $region5
  $region4: #{_lambda_.7} parent=0 // pred_region
    _
  $region5: #{_lambda_.7} parent=0 // pred_fallthru
    _
  // Predicated region
  $region6: #{_lambda_.7} parent=0 // pred_check
    _
  $region7: #{_lambda_.7} parent=0 // pred_check_branch
    %12 = sbr.rel (0) target = $region9
  $region8: #{_lambda_.7} parent=0 // pred_region
    _
  $region9: #{_lambda_.7} parent=0 // pred_fallthru
    _
  // Predicated region
  $region10: #{_lambda_.7} parent=0 // pred_check
    _
  $region11: #{_lambda_.7} parent=0 // pred_check_branch
    %14 = sbr.rel (0) target = $region13
  $region12: #{_lambda_.7} parent=0 // pred_region
    _
  $region13: #{_lambda_.7} parent=0 // pred_fallthru
    _
  // Predicated region
  $region14: #{_lambda_.7} parent=0 // pred_check
    _
  $region15: #{_lambda_.7} parent=0 // pred_check_branch
    %16 = sbr.rel (0) target = $region17
  $region16: #{_lambda_.7} parent=0 // pred_region
    _
  $region17: #{_lambda_.7} parent=0 // pred_fallthru
    _
  %v18 = vld [vmem:[%s0] sm:$0xff]
  %v19 = vld [vmem:[%s0 + $0x8] sm:$0xff]
  %v20 = vld [vmem:[%s0 + $0x10] sm:$0xff]
  %v21 = vld [vmem:[%s0 + $0x18] sm:$0xff]
  %v22 = vld [vmem:[%s1] sm:$0xf]
  %v23 = vld [vmem:[%s1 + $0x4] sm:$0xf]
  %v24 = vld [vmem:[%s1 + $0x8] sm:$0xf]
  %v25 = vld [vmem:[%s1 + $0xc] sm:$0xf]
  %v26 = vld [vmem:[%s1 + $0x10] sm:$0xf]
  %v27 = vld [vmem:[%s1 + $0x14] sm:$0xf]
  %v28 = vld [vmem:[%s1 + $0x18] sm:$0xf]
  %v29 = vld [vmem:[%s1 + $0x1c] sm:$0xf]
  %v30 = vld [vmem:[%s1 + $0x20] sm:$0xf]
  %v31 = vld [vmem:[%s1 + $0x24] sm:$0xf]
  %v32 = vld [vmem:[%s1 + $0x28] sm:$0xf]
  %v33 = vld [vmem:[%s1 + $0x2c] sm:$0xf]
  %v34 = vld [vmem:[%s1 + $0x30] sm:$0xf]
  %v35 = vld [vmem:[%s1 + $0x34] sm:$0xf]
  %v36 = vld [vmem:[%s1 + $0x38] sm:$0xf]
  %v37 = vld [vmem:[%s1 + $0x3c] sm:$0xf]
  %v38 = vld [vmem:[%s1 + $0x40] sm:$0xf]
  %v39 = vld [vmem:[%s1 + $0x44] sm:$0xf]
  %v40 = vld [vmem:[%s1 + $0x48] sm:$0xf]
  %v41 = vld [vmem:[%s1 + $0x4c] sm:$0xf]
  %v42 = vld [vmem:[%s1 + $0x50] sm:$0xf]
  %v43 = vld [vmem:[%s1 + $0x54] sm:$0xf]
  %v44 = vld [vmem:[%s1 + $0x58] sm:$0xf]
  %v45 = vld [vmem:[%s1 + $0x5c] sm:$0xf]
  %v46 = vld [vmem:[%s1 + $0x60] sm:$0xf]
  %v47 = vld [vmem:[%s1 + $0x64] sm:$0xf]
  %v48 = vld [vmem:[%s1 + $0x68] sm:$0xf]
  %v49 = vld [vmem:[%s1 + $0x6c] sm:$0xf]
  %v50 = vld [vmem:[%s1 + $0x70] sm:$0xf]
  %v51 = vld [vmem:[%s1 + $0x74] sm:$0xf]
  %v52 = vld [vmem:[%s1 + $0x78] sm:$0xf]
  %v53 = vld [vmem:[%s1 + $0x7c] sm:$0xf]
  %v58 = vunpack.c.l.b16 %v18
  %v59 = vunpack.c.h.b16 %v18
  %v60 = vunpack.c.l.b16 %v19
  %v61 = vunpack.c.h.b16 %v19
  %v62 = vunpack.c.l.b16 %v20
  %v63 = vunpack.c.h.b16 %v20
  %v64 = vunpack.c.l.b16 %v21
  %v65 = vunpack.c.h.b16 %v21
  %v66 = vpack.c.b16 %v60, %v58
  %v67 = vpack.c.b16 %v61, %v59
  %v68 = vpack.c.b16 %v64, %v62
  %v69 = vpack.c.b16 %v65, %v63
  %v106 = vunpack.c.l.b16 %v22
  %v107 = vunpack.c.l.b16 %v23
  %v108 = vunpack.c.l.b16 %v24
  %v109 = vunpack.c.l.b16 %v25
  %v110 = vunpack.c.l.b16 %v26
  %v111 = vunpack.c.l.b16 %v27
  %v112 = vunpack.c.l.b16 %v28
  %v113 = vunpack.c.l.b16 %v29
  %v114 = vunpack.c.l.b16 %v30
  %v115 = vunpack.c.l.b16 %v31
  %v116 = vunpack.c.l.b16 %v32
  %v117 = vunpack.c.l.b16 %v33
  %v118 = vunpack.c.l.b16 %v34
  %v119 = vunpack.c.l.b16 %v35
  %v120 = vunpack.c.l.b16 %v36
  %v121 = vunpack.c.l.b16 %v37
  %v122 = vunpack.c.l.b16 %v38
  %v123 = vunpack.c.l.b16 %v39
  %v124 = vunpack.c.l.b16 %v40
  %v125 = vunpack.c.l.b16 %v41
  %v126 = vunpack.c.l.b16 %v42
  %v127 = vunpack.c.l.b16 %v43
  %v128 = vunpack.c.l.b16 %v44
  %v129 = vunpack.c.l.b16 %v45
  %v130 = vunpack.c.l.b16 %v46
  %v131 = vunpack.c.l.b16 %v47
  %v132 = vunpack.c.l.b16 %v48
  %v133 = vunpack.c.l.b16 %v49
  %v134 = vunpack.c.l.b16 %v50
  %v135 = vunpack.c.l.b16 %v51
  %v136 = vunpack.c.l.b16 %v52
  %v137 = vunpack.c.l.b16 %v53
  %v138 = vpack.c.b16 %v107, %v106
  %v139 = vpack.c.b16 %v109, %v108
  %v140 = vpack.c.b16 %v111, %v110
  %v141 = vpack.c.b16 %v113, %v112
  %v142 = vpack.c.b16 %v115, %v114
  %v143 = vpack.c.b16 %v117, %v116
  %v144 = vpack.c.b16 %v119, %v118
  %v145 = vpack.c.b16 %v121, %v120
  %v146 = vpack.c.b16 %v123, %v122
  %v147 = vpack.c.b16 %v125, %v124
  %v148 = vpack.c.b16 %v127, %v126
  %v149 = vpack.c.b16 %v129, %v128
  %v150 = vpack.c.b16 %v131, %v130
  %v151 = vpack.c.b16 %v133, %v132
  %v152 = vpack.c.b16 %v135, %v134
  %v153 = vpack.c.b16 %v137, %v136
  %170 = vmatprep.subr.bf16.mxu0 0
  %171 = vmatpush1.bf16.msra.mxu0 %v138
  %172 = vmatprep.subr.bf16.mxu0 0
  %173 = vmatpush1.bf16.msra.mxu0 %v139
  %174 = vmatprep.subr.bf16.mxu0 0
  %175 = vmatpush1.bf16.msra.mxu0 %v140
  %176 = vmatprep.subr.bf16.mxu0 0
  %177 = vmatpush1.bf16.msra.mxu0 %v141
  %178 = vmatprep.subr.bf16.mxu0 0
  %179 = vmatpush1.bf16.msra.mxu0 %v142
  %180 = vmatprep.subr.bf16.mxu0 0
  %181 = vmatpush1.bf16.msra.mxu0 %v143
  %182 = vmatprep.subr.bf16.mxu0 0
  %183 = vmatpush1.bf16.msra.mxu0 %v144
  %184 = vmatprep.subr.bf16.mxu0 0
  %185 = vmatpush1.bf16.msra.mxu0 %v145
  %186 = vmatprep.subr.bf16.mxu0 0
  %187 = vmatpush1.bf16.msra.mxu0 %v146
  %188 = vmatprep.subr.bf16.mxu0 0
  %189 = vmatpush1.bf16.msra.mxu0 %v147
  %190 = vmatprep.subr.bf16.mxu0 0
  %191 = vmatpush1.bf16.msra.mxu0 %v148
  %192 = vmatprep.subr.bf16.mxu0 0
  %193 = vmatpush1.bf16.msra.mxu0 %v149
  %194 = vmatprep.subr.bf16.mxu0 0
  %195 = vmatpush1.bf16.msra.mxu0 %v150
  %196 = vmatprep.subr.bf16.mxu0 0
  %197 = vmatpush1.bf16.msra.mxu0 %v151
  %198 = vmatprep.subr.bf16.mxu0 0
  %199 = vmatpush1.bf16.msra.mxu0 %v152
  %200 = vmatprep.subr.bf16.mxu0 0
  %201 = vmatpush1.bf16.msra.mxu0 %v153
  %202 = vmatprep.mubr.bf16.mxu0 %v67
  %203 = vmatmul.mubr.bf16.gmra.mrb[0].mxu0 %v66
  %v204 = vpop.f32.mrb[0].mxu0
  %v205 = vadd.f32 0.0, %v204
  %v206 = vpop.f32.mrb[0].mxu0
  %v207 = vpop.f32.mrb[0].mxu0
  %v208 = vadd.f32 0.0, %v207
  %v209 = vpop.f32.mrb[0].mxu0
  %210 = vmatprep.mubr.bf16.mxu0 %v69
  %211 = vmatmul.mubr.bf16.gmra.mrb[0].mxu0 %v68
  %v212 = vpop.f32.mrb[0].mxu0
  %v213 = vadd.f32 0.0, %v212
  %v214 = vpop.f32.mrb[0].mxu0
  %v215 = vpop.f32.mrb[0].mxu0
  %v216 = vadd.f32 0.0, %v215
  %v217 = vpop.f32.mrb[0].mxu0
  %218 = vdwg.mxu0
  %219 = vadd.xlane.f32.xlu0 %v205
  %v220 = vpop.xlane.xlu0 %219
  %221 = vadd.xlane.f32.xlu0 %v208
  %v222 = vpop.xlane.xlu0 %221
  %223 = vadd.xlane.f32.xlu0 %v213
  %v224 = vpop.xlane.xlu0 %223
  %225 = vadd.xlane.f32.xlu0 %v216
  %v226 = vpop.xlane.xlu0 %225
  %v227 = vmul.f32 %v220, 0.0078125
  %v228 = vmul.f32 %v222, 0.0078125
  %v229 = vmul.f32 %v224, 0.0078125
  %v230 = vmul.f32 %v226, 0.0078125
  %v231 = vmul.f32 %v205, %v205
  %v232 = vmul.f32 %v208, %v208
  %v233 = vmul.f32 %v213, %v213
  %v234 = vmul.f32 %v216, %v216
  %235 = vadd.xlane.f32.xlu0 %v231
  %v236 = vpop.xlane.xlu0 %235
  %237 = vadd.xlane.f32.xlu0 %v232
  %v238 = vpop.xlane.xlu0 %237
  %239 = vadd.xlane.f32.xlu0 %v233
  %v240 = vpop.xlane.xlu0 %239
  %241 = vadd.xlane.f32.xlu0 %v234
  %v242 = vpop.xlane.xlu0 %241
  %v243 = vmul.f32 %v236, 0.0078125
  %v244 = vmul.f32 %v238, 0.0078125
  %v245 = vmul.f32 %v240, 0.0078125
  %v246 = vmul.f32 %v242, 0.0078125
  %v247 = vmul.f32 %v227, %v227
  %v248 = vmul.f32 %v228, %v228
  %v249 = vmul.f32 %v229, %v229
  %v250 = vmul.f32 %v230, %v230
  %v251 = vsub.f32 %v243, %v247
  %v252 = vsub.f32 %v244, %v248
  %v253 = vsub.f32 %v245, %v249
  %v254 = vsub.f32 %v246, %v250
  %v255 = vmax.f32 %v251, 0.0
  %v256 = vmax.f32 %v252, 0.0
  %v257 = vmax.f32 %v253, 0.0
  %v258 = vmax.f32 %v254, 0.0
  %v259 = vadd.f32 %v255, 1e-05
  %v260 = vadd.f32 %v256, 1e-05
  %v261 = vadd.f32 %v257, 1e-05
  %v262 = vadd.f32 %v258, 1e-05
  %v263 = vrsqrt.pop %v259
  %v264 = vrsqrt.pop %v260
  %v265 = vrsqrt.pop %v261
  %v266 = vrsqrt.pop %v262
  %v267 = vld [vmem:[%s2] sm:$0xff]
  %v268 = vld [vmem:[%s2 + $0x8] sm:$0xff]
  %v269 = vld [vmem:[%s2 + $0x10] sm:$0xff]
  %v270 = vld [vmem:[%s2 + $0x18] sm:$0xff]
  %v271 = vmul.f32 %v263, %v267
  %v272 = vmul.f32 %v264, %v268
  %v273 = vmul.f32 %v265, %v269
  %v274 = vmul.f32 %v266, %v270
  %v275 = vld [vmem:[%s3] sm:$0xff]
  %v276 = vld [vmem:[%s3 + $0x8] sm:$0xff]
  %v277 = vld [vmem:[%s3 + $0x10] sm:$0xff]
  %v278 = vld [vmem:[%s3 + $0x18] sm:$0xff]
  %v279 = vmul.f32 %v227, %v271
  %v280 = vmul.f32 %v228, %v272
  %v281 = vmul.f32 %v229, %v273
  %v282 = vmul.f32 %v230, %v274
  %v283 = vsub.f32 %v275, %v279
  %v284 = vsub.f32 %v276, %v280
  %v285 = vsub.f32 %v277, %v281
  %v286 = vsub.f32 %v278, %v282
  %288 = vset.pattern.permute.xlu0 0
  %289 = vperm.xlu0 %288, %v271
  %v290 = vpop.permute.xlu0 %289
  %293 = vset.pattern.permute.xlu0 0
  %294 = vperm.xlu0 %293, %v272
  %v295 = vpop.permute.xlu0 %294
  %298 = vset.pattern.permute.xlu0 0
  %299 = vperm.xlu0 %298, %v273
  %v300 = vpop.permute.xlu0 %299
  %303 = vset.pattern.permute.xlu0 0
  %304 = vperm.xlu0 %303, %v274
  %v305 = vpop.permute.xlu0 %304
  %v307 = vmul.f32 %v205, %v290
  %v308 = vmul.f32 %v208, %v295
  %v309 = vmul.f32 %v213, %v300
  %v310 = vmul.f32 %v216, %v305
  %312 = vset.pattern.permute.xlu0 0
  %313 = vperm.xlu0 %312, %v283
  %v314 = vpop.permute.xlu0 %313
  %317 = vset.pattern.permute.xlu0 0
  %318 = vperm.xlu0 %317, %v284
  %v319 = vpop.permute.xlu0 %318
  %322 = vset.pattern.permute.xlu0 0
  %323 = vperm.xlu0 %322, %v285
  %v324 = vpop.permute.xlu0 %323
  %327 = vset.pattern.permute.xlu0 0
  %328 = vperm.xlu0 %327, %v286
  %v329 = vpop.permute.xlu0 %328
  %v331 = vadd.f32 %v307, %v314
  %v332 = vadd.f32 %v308, %v319
  %v333 = vadd.f32 %v309, %v324
  %v334 = vadd.f32 %v310, %v329
  %vm335 = vcmp.ge.f32.partialorder %v331, 0.0
  %vm336 = vcmp.ge.f32.partialorder %v332, 0.0
  %vm337 = vcmp.ge.f32.partialorder %v333, 0.0
  %vm338 = vcmp.ge.f32.partialorder %v334, 0.0
  %v339 = vmul.f32 %v331, 0.2
  %v340 = vmul.f32 %v332, 0.2
  %v341 = vmul.f32 %v333, 0.2
  %v342 = vmul.f32 %v334, 0.2
  %v343 = vsel %vm335, %v331, %v339
  %v344 = vsel %vm336, %v332, %v340
  %v345 = vsel %vm337, %v333, %v341
  %v346 = vsel %vm338, %v334, %v342
  %v347 = vpack.c.bf16 %v344, %v343
  %v348 = vpack.c.bf16 %v346, %v345
  %v351 = vunpack.c.l.b16 %v347
  %v352 = vunpack.c.h.b16 %v347
  %v353 = vunpack.c.l.b16 %v348
  %v354 = vunpack.c.h.b16 %v348
  %v355 = vpack.c.b16 %v351, %v351
  %v356 = vpack.c.b16 %v352, %v352
  %v357 = vpack.c.b16 %v353, %v353
  %v358 = vpack.c.b16 %v354, %v354
  %363 = vst [vmem:[%s4] sm:$0xf] %v355
  %364 = vst [vmem:[%s4 + $0x4] sm:$0xf] %v356
  %365 = vst [vmem:[%s4 + $0x8] sm:$0xf] %v357
  %366 = vst [vmem:[%s4 + $0xc] sm:$0xf] %v358
  // Predicated region
  $region18: #{_lambda_.7} parent=0 // pred_check
    _
  $region19: #{_lambda_.7} parent=0 // pred_check_branch
    %368 = sbr.rel (0) target = $region21
  $region20: #{_lambda_.7} parent=0 // pred_region
    _
  $region21: #{_lambda_.7} parent=0 // pred_fallthru
    _
  // Predicated region
  $region22: #{_lambda_.7} parent=0 // pred_check
    _
  $region23: #{_lambda_.7} parent=0 // pred_check_branch
    %370 = sbr.rel (0) target = $region25
  $region24: #{_lambda_.7} parent=0 // pred_region
    _
  $region25: #{_lambda_.7} parent=0 // pred_fallthru
    _

// kernel: _lambda_.8
$region0: #{_lambda_.8}
  #allocation0 [shape = 'u32[]', space=smem, size = 0x4, offset = 0x4, fixed_abs, tag = 'smem constant byte address 0x4 - core index']
  #allocation1 [shape = 'u32[144,128]{1,0:T(1,128)}', space=vmem, size = 0x12000, scoped, tag = 'internal scratch']
  %s0 = inlined_call_operand.vmem [shape: bf16[64,512], index: 0, kind: input, shape index: {}]
  %s1 = inlined_call_operand.vmem [shape: bf16[512,128], index: 1, kind: input, shape index: {}]
  %s2 = inlined_call_operand.vmem [shape: f32[64,1], index: 2, kind: input, shape index: {}]
  %s3 = inlined_call_operand.vmem [shape: f32[64,1], index: 3, kind: input, shape index: {}]
  %s4 = inlined_call_operand.vmem [shape: bf16[64,128], index: 4, kind: output, shape index: {}]
  %s5 = sld [smem:[#allocation0]]
  $region26: #{_lambda_.8} parent=0
    _
  %s7 = ssub.s32 1, %s5
  %s8 = scalar_select 0, %s7, %s5
  // Predicated region
  $region2: #{_lambda_.8} parent=0 // pred_check
    _
  $region3: #{_lambda_.8} parent=0 // pred_check_branch
    %10 = sbr.rel (0) target = $region5
  $region4: #{_lambda_.8} parent=0 // pred_region
    _
  $region5: #{_lambda_.8} parent=0 // pred_fallthru
    _
  // Predicated region
  $region6: #{_lambda_.8} parent=0 // pred_check
    _
  $region7: #{_lambda_.8} parent=0 // pred_check_branch
    %12 = sbr.rel (0) target = $region9
  $region8: #{_lambda_.8} parent=0 // pred_region
    _
  $region9: #{_lambda_.8} parent=0 // pred_fallthru
    _
  // Predicated region
  $region10: #{_lambda_.8} parent=0 // pred_check
    _
  $region11: #{_lambda_.8} parent=0 // pred_check_branch
    %14 = sbr.rel (0) target = $region13
  $region12: #{_lambda_.8} parent=0 // pred_region
    _
  $region13: #{_lambda_.8} parent=0 // pred_fallthru
    _
  // Predicated region
  $region14: #{_lambda_.8} parent=0 // pred_check
    _
  $region15: #{_lambda_.8} parent=0 // pred_check_branch
    %16 = sbr.rel (0) target = $region17
  $region16: #{_lambda_.8} parent=0 // pred_region
    _
  $region17: #{_lambda_.8} parent=0 // pred_fallthru
    _
  %v18 = vld [vmem:[%s0] sm:$0xff]
  %v19 = vld [vmem:[%s0 + $0x8] sm:$0xff]
  %v20 = vld [vmem:[%s0 + $0x10] sm:$0xff]
  %v21 = vld [vmem:[%s0 + $0x18] sm:$0xff]
  %v22 = vld [vmem:[%s0 + $0x20] sm:$0xff]
  %v23 = vld [vmem:[%s0 + $0x28] sm:$0xff]
  %v24 = vld [vmem:[%s0 + $0x30] sm:$0xff]
  %v25 = vld [vmem:[%s0 + $0x38] sm:$0xff]
  %v26 = vld [vmem:[%s0 + $0x40] sm:$0xff]
  %v27 = vld [vmem:[%s0 + $0x48] sm:$0xff]
  %v28 = vld [vmem:[%s0 + $0x50] sm:$0xff]
  %v29 = vld [vmem:[%s0 + $0x58] sm:$0xff]
  %v30 = vld [vmem:[%s0 + $0x60] sm:$0xff]
  %v31 = vld [vmem:[%s0 + $0x68] sm:$0xff]
  %v32 = vld [vmem:[%s0 + $0x70] sm:$0xff]
  %v33 = vld [vmem:[%s0 + $0x78] sm:$0xff]
  %v34 = vld [vmem:[%s1] sm:$0xf]
  %v35 = vld [vmem:[%s1 + $0x4] sm:$0xf]
  %v36 = vld [vmem:[%s1 + $0x8] sm:$0xf]
  %v37 = vld [vmem:[%s1 + $0xc] sm:$0xf]
  %v38 = vld [vmem:[%s1 + $0x10] sm:$0xf]
  %v39 = vld [vmem:[%s1 + $0x14] sm:$0xf]
  %v40 = vld [vmem:[%s1 + $0x18] sm:$0xf]
  %v41 = vld [vmem:[%s1 + $0x1c] sm:$0xf]
  %v42 = vld [vmem:[%s1 + $0x20] sm:$0xf]
  %v43 = vld [vmem:[%s1 + $0x24] sm:$0xf]
  %v44 = vld [vmem:[%s1 + $0x28] sm:$0xf]
  %v45 = vld [vmem:[%s1 + $0x2c] sm:$0xf]
  %v46 = vld [vmem:[%s1 + $0x30] sm:$0xf]
  %v47 = vld [vmem:[%s1 + $0x34] sm:$0xf]
  %v48 = vld [vmem:[%s1 + $0x38] sm:$0xf]
  %v49 = vld [vmem:[%s1 + $0x3c] sm:$0xf]
  %v50 = vld [vmem:[%s1 + $0x40] sm:$0xf]
  %v51 = vld [vmem:[%s1 + $0x44] sm:$0xf]
  %v52 = vld [vmem:[%s1 + $0x48] sm:$0xf]
  %v53 = vld [vmem:[%s1 + $0x4c] sm:$0xf]
  %v54 = vld [vmem:[%s1 + $0x50] sm:$0xf]
  %v55 = vld [vmem:[%s1 + $0x54] sm:$0xf]
  %v56 = vld [vmem:[%s1 + $0x58] sm:$0xf]
  %v57 = vld [vmem:[%s1 + $0x5c] sm:$0xf]
  %v58 = vld [vmem:[%s1 + $0x60] sm:$0xf]
  %v59 = vld [vmem:[%s1 + $0x64] sm:$0xf]
  %v60 = vld [vmem:[%s1 + $0x68] sm:$0xf]
  %v61 = vld [vmem:[%s1 + $0x6c] sm:$0xf]
  %v62 = vld [vmem:[%s1 + $0x70] sm:$0xf]
  %v63 = vld [vmem:[%s1 + $0x74] sm:$0xf]
  %v64 = vld [vmem:[%s1 + $0x78] sm:$0xf]
  %v65 = vld [vmem:[%s1 + $0x7c] sm:$0xf]
  %v66 = vld [vmem:[%s1 + $0x80] sm:$0xf]
  %v67 = vld [vmem:[%s1 + $0x84] sm:$0xf]
  %v68 = vld [vmem:[%s1 + $0x88] sm:$0xf]
  %v69 = vld [vmem:[%s1 + $0x8c] sm:$0xf]
  %v70 = vld [vmem:[%s1 + $0x90] sm:$0xf]
  %v71 = vld [vmem:[%s1 + $0x94] sm:$0xf]
  %v72 = vld [vmem:[%s1 + $0x98] sm:$0xf]
  %v73 = vld [vmem:[%s1 + $0x9c] sm:$0xf]
  %v74 = vld [vmem:[%s1 + $0xa0] sm:$0xf]
  %v75 = vld [vmem:[%s1 + $0xa4] sm:$0xf]
  %v76 = vld [vmem:[%s1 + $0xa8] sm:$0xf]
  %v77 = vld [vmem:[%s1 + $0xac] sm:$0xf]
  %v78 = vld [vmem:[%s1 + $0xb0] sm:$0xf]
  %v79 = vld [vmem:[%s1 + $0xb4] sm:$0xf]
  %v80 = vld [vmem:[%s1 + $0xb8] sm:$0xf]
  %v81 = vld [vmem:[%s1 + $0xbc] sm:$0xf]
  %v82 = vld [vmem:[%s1 + $0xc0] sm:$0xf]
  %v83 = vld [vmem:[%s1 + $0xc4] sm:$0xf]
  %v84 = vld [vmem:[%s1 + $0xc8] sm:$0xf]
  %v85 = vld [vmem:[%s1 + $0xcc] sm:$0xf]
  %v86 = vld [vmem:[%s1 + $0xd0] sm:$0xf]
  %v87 = vld [vmem:[%s1 + $0xd4] sm:$0xf]
  %v88 = vld [vmem:[%s1 + $0xd8] sm:$0xf]
  %v89 = vld [vmem:[%s1 + $0xdc] sm:$0xf]
  %v90 = vld [vmem:[%s1 + $0xe0] sm:$0xf]
  %v91 = vld [vmem:[%s1 + $0xe4] sm:$0xf]
  %v92 = vld [vmem:[%s1 + $0xe8] sm:$0xf]
  %v93 = vld [vmem:[%s1 + $0xec] sm:$0xf]
  %v94 = vld [vmem:[%s1 + $0xf0] sm:$0xf]
  %v95 = vld [vmem:[%s1 + $0xf4] sm:$0xf]
  %v96 = vld [vmem:[%s1 + $0xf8] sm:$0xf]
  %v97 = vld [vmem:[%s1 + $0xfc] sm:$0xf]
  %v114 = vunpack.c.l.b16 %v18
  %v115 = vunpack.c.h.b16 %v18
  %v116 = vunpack.c.l.b16 %v19
  %v117 = vunpack.c.h.b16 %v19
  %v118 = vunpack.c.l.b16 %v20
  %v119 = vunpack.c.h.b16 %v20
  %v120 = vunpack.c.l.b16 %v21
  %v121 = vunpack.c.h.b16 %v21
  %v122 = vunpack.c.l.b16 %v22
  %v123 = vunpack.c.h.b16 %v22
  %v124 = vunpack.c.l.b16 %v23
  %v125 = vunpack.c.h.b16 %v23
  %v126 = vunpack.c.l.b16 %v24
  %v127 = vunpack.c.h.b16 %v24
  %v128 = vunpack.c.l.b16 %v25
  %v129 = vunpack.c.h.b16 %v25
  %v130 = vunpack.c.l.b16 %v26
  %v131 = vunpack.c.h.b16 %v26
  %v132 = vunpack.c.l.b16 %v27
  %v133 = vunpack.c.h.b16 %v27
  %v134 = vunpack.c.l.b16 %v28
  %v135 = vunpack.c.h.b16 %v28
  %v136 = vunpack.c.l.b16 %v29
  %v137 = vunpack.c.h.b16 %v29
  %v138 = vunpack.c.l.b16 %v30
  %v139 = vunpack.c.h.b16 %v30
  %v140 = vunpack.c.l.b16 %v31
  %v141 = vunpack.c.h.b16 %v31
  %v142 = vunpack.c.l.b16 %v32
  %v143 = vunpack.c.h.b16 %v32
  %v144 = vunpack.c.l.b16 %v33
  %v145 = vunpack.c.h.b16 %v33
  %v146 = vpack.c.b16 %v118, %v114
  %v147 = vpack.c.b16 %v119, %v115
  %v148 = vpack.c.b16 %v120, %v116
  %v149 = vpack.c.b16 %v121, %v117
  %v150 = vpack.c.b16 %v126, %v122
  %v151 = vpack.c.b16 %v127, %v123
  %v152 = vpack.c.b16 %v128, %v124
  %v153 = vpack.c.b16 %v129, %v125
  %v154 = vpack.c.b16 %v134, %v130
  %v155 = vpack.c.b16 %v135, %v131
  %v156 = vpack.c.b16 %v136, %v132
  %v157 = vpack.c.b16 %v137, %v133
  %v158 = vpack.c.b16 %v142, %v138
  %v159 = vpack.c.b16 %v143, %v139
  %v160 = vpack.c.b16 %v144, %v140
  %v161 = vpack.c.b16 %v145, %v141
  %v242 = vunpack.c.l.b16 %v34
  %v243 = vunpack.c.l.b16 %v35
  %v244 = vunpack.c.l.b16 %v36
  %v245 = vunpack.c.l.b16 %v37
  %v246 = vunpack.c.l.b16 %v38
  %v247 = vunpack.c.l.b16 %v39
  %v248 = vunpack.c.l.b16 %v40
  %v249 = vunpack.c.l.b16 %v41
  %v250 = vunpack.c.l.b16 %v42
  %v251 = vunpack.c.l.b16 %v43
  %v252 = vunpack.c.l.b16 %v44
  %v253 = vunpack.c.l.b16 %v45
  %v254 = vunpack.c.l.b16 %v46
  %v255 = vunpack.c.l.b16 %v47
  %v256 = vunpack.c.l.b16 %v48
  %v257 = vunpack.c.l.b16 %v49
  %v258 = vunpack.c.l.b16 %v50
  %v259 = vunpack.c.l.b16 %v51
  %v260 = vunpack.c.l.b16 %v52
  %v261 = vunpack.c.l.b16 %v53
  %v262 = vunpack.c.l.b16 %v54
  %v263 = vunpack.c.l.b16 %v55
  %v264 = vunpack.c.l.b16 %v56
  %v265 = vunpack.c.l.b16 %v57
  %v266 = vunpack.c.l.b16 %v58
  %v267 = vunpack.c.l.b16 %v59
  %v268 = vunpack.c.l.b16 %v60
  %v269 = vunpack.c.l.b16 %v61
  %v270 = vunpack.c.l.b16 %v62
  %v271 = vunpack.c.l.b16 %v63
  %v272 = vunpack.c.l.b16 %v64
  %v273 = vunpack.c.l.b16 %v65
  %v274 = vunpack.c.l.b16 %v66
  %v275 = vunpack.c.l.b16 %v67
  %v276 = vunpack.c.l.b16 %v68
  %v277 = vunpack.c.l.b16 %v69
  %v278 = vunpack.c.l.b16 %v70
  %v279 = vunpack.c.l.b16 %v71
  %v280 = vunpack.c.l.b16 %v72
  %v281 = vunpack.c.l.b16 %v73
  %v282 = vunpack.c.l.b16 %v74
  %v283 = vunpack.c.l.b16 %v75
  %v284 = vunpack.c.l.b16 %v76
  %v285 = vunpack.c.l.b16 %v77
  %v286 = vunpack.c.l.b16 %v78
  %v287 = vunpack.c.l.b16 %v79
  %v288 = vunpack.c.l.b16 %v80
  %v289 = vunpack.c.l.b16 %v81
  %v290 = vunpack.c.l.b16 %v82
  %v291 = vunpack.c.l.b16 %v83
  %v292 = vunpack.c.l.b16 %v84
  %v293 = vunpack.c.l.b16 %v85
  %v294 = vunpack.c.l.b16 %v86
  %v295 = vunpack.c.l.b16 %v87
  %v296 = vunpack.c.l.b16 %v88
  %v297 = vunpack.c.l.b16 %v89
  %v298 = vunpack.c.l.b16 %v90
  %v299 = vunpack.c.l.b16 %v91
  %v300 = vunpack.c.l.b16 %v92
  %v301 = vunpack.c.l.b16 %v93
  %v302 = vunpack.c.l.b16 %v94
  %v303 = vunpack.c.l.b16 %v95
  %v304 = vunpack.c.l.b16 %v96
  %v305 = vunpack.c.l.b16 %v97
  %v306 = vpack.c.b16 %v243, %v242
  %v307 = vpack.c.b16 %v245, %v244
  %v308 = vpack.c.b16 %v247, %v246
  %v309 = vpack.c.b16 %v249, %v248
  %v310 = vpack.c.b16 %v251, %v250
  %v311 = vpack.c.b16 %v253, %v252
  %v312 = vpack.c.b16 %v255, %v254
  %v313 = vpack.c.b16 %v257, %v256
  %v314 = vpack.c.b16 %v259, %v258
  %v315 = vpack.c.b16 %v261, %v260
  %v316 = vpack.c.b16 %v263, %v262
  %v317 = vpack.c.b16 %v265, %v264
  %v318 = vpack.c.b16 %v267, %v266
  %v319 = vpack.c.b16 %v269, %v268
  %v320 = vpack.c.b16 %v271, %v270
  %v321 = vpack.c.b16 %v273, %v272
  %v322 = vpack.c.b16 %v275, %v274
  %v323 = vpack.c.b16 %v277, %v276
  %v324 = vpack.c.b16 %v279, %v278
  %v325 = vpack.c.b16 %v281, %v280
  %v326 = vpack.c.b16 %v283, %v282
  %v327 = vpack.c.b16 %v285, %v284
  %v328 = vpack.c.b16 %v287, %v286
  %v329 = vpack.c.b16 %v289, %v288
  %v330 = vpack.c.b16 %v291, %v290
  %v331 = vpack.c.b16 %v293, %v292
  %v332 = vpack.c.b16 %v295, %v294
  %v333 = vpack.c.b16 %v297, %v296
  %v334 = vpack.c.b16 %v299, %v298
  %v335 = vpack.c.b16 %v301, %v300
  %v336 = vpack.c.b16 %v303, %v302
  %v337 = vpack.c.b16 %v305, %v304
  %370 = vmatprep.subr.bf16.mxu0 0
  %371 = vmatpush1.bf16.msra.mxu0 %v306
  %372 = vmatprep.subr.bf16.mxu0 0
  %373 = vmatpush1.bf16.msra.mxu0 %v307
  %374 = vmatprep.subr.bf16.mxu0 0
  %375 = vmatpush1.bf16.msra.mxu0 %v308
  %376 = vmatprep.subr.bf16.mxu0 0
  %377 = vmatpush1.bf16.msra.mxu0 %v309
  %378 = vmatprep.subr.bf16.mxu0 0
  %379 = vmatpush1.bf16.msra.mxu0 %v310
  %380 = vmatprep.subr.bf16.mxu0 0
  %381 = vmatpush1.bf16.msra.mxu0 %v311
  %382 = vmatprep.subr.bf16.mxu0 0
  %383 = vmatpush1.bf16.msra.mxu0 %v312
  %384 = vmatprep.subr.bf16.mxu0 0
  %385 = vmatpush1.bf16.msra.mxu0 %v313
  %386 = vmatprep.subr.bf16.mxu0 0
  %387 = vmatpush1.bf16.msra.mxu0 %v314
  %388 = vmatprep.subr.bf16.mxu0 0
  %389 = vmatpush1.bf16.msra.mxu0 %v315
  %390 = vmatprep.subr.bf16.mxu0 0
  %391 = vmatpush1.bf16.msra.mxu0 %v316
  %392 = vmatprep.subr.bf16.mxu0 0
  %393 = vmatpush1.bf16.msra.mxu0 %v317
  %394 = vmatprep.subr.bf16.mxu0 0
  %395 = vmatpush1.bf16.msra.mxu0 %v318
  %396 = vmatprep.subr.bf16.mxu0 0
  %397 = vmatpush1.bf16.msra.mxu0 %v319
  %398 = vmatprep.subr.bf16.mxu0 0
  %399 = vmatpush1.bf16.msra.mxu0 %v320
  %400 = vmatprep.subr.bf16.mxu0 0
  %401 = vmatpush1.bf16.msra.mxu0 %v321
  %402 = vmatprep.mubr.bf16.mxu0 %v147
  %403 = vmatmul.mubr.bf16.gmra.mrb[0].mxu0 %v146
  %v404 = vpop.f32.mrb[0].mxu0
  %v405 = vadd.f32 0.0, %v404
  %v406 = vpop.f32.mrb[0].mxu0
  %v407 = vpop.f32.mrb[0].mxu0
  %v408 = vadd.f32 0.0, %v407
  %v409 = vpop.f32.mrb[0].mxu0
  %410 = vmatprep.mubr.bf16.mxu0 %v151
  %411 = vmatmul.mubr.bf16.gmra.mrb[0].mxu0 %v150
  %v412 = vpop.f32.mrb[0].mxu0
  %v413 = vadd.f32 0.0, %v412
  %v414 = vpop.f32.mrb[0].mxu0
  %v415 = vpop.f32.mrb[0].mxu0
  %v416 = vadd.f32 0.0, %v415
  %v417 = vpop.f32.mrb[0].mxu0
  %418 = vmatprep.mubr.bf16.mxu0 %v155
  %419 = vmatmul.mubr.bf16.gmra.mrb[0].mxu0 %v154
  %v420 = vpop.f32.mrb[0].mxu0
  %v421 = vadd.f32 0.0, %v420
  %v422 = vpop.f32.mrb[0].mxu0
  %v423 = vpop.f32.mrb[0].mxu0
  %v424 = vadd.f32 0.0, %v423
  %v425 = vpop.f32.mrb[0].mxu0
  %426 = vmatprep.mubr.bf16.mxu0 %v159
  %427 = vmatmul.mubr.bf16.gmra.mrb[0].mxu0 %v158
  %v428 = vpop.f32.mrb[0].mxu0
  %v429 = vadd.f32 0.0, %v428
  %v430 = vpop.f32.mrb[0].mxu0
  %v431 = vpop.f32.mrb[0].mxu0
  %v432 = vadd.f32 0.0, %v431
  %v433 = vpop.f32.mrb[0].mxu0
  %434 = vdwg.mxu0
  %435 = vmatprep.subr.bf16.mxu0 0
  %436 = vmatpush1.bf16.msra.mxu0 %v322
  %437 = vmatprep.subr.bf16.mxu0 0
  %438 = vmatpush1.bf16.msra.mxu0 %v323
  %439 = vmatprep.subr.bf16.mxu0 0
  %440 = vmatpush1.bf16.msra.mxu0 %v324
  %441 = vmatprep.subr.bf16.mxu0 0
  %442 = vmatpush1.bf16.msra.mxu0 %v325
  %443 = vmatprep.subr.bf16.mxu0 0
  %444 = vmatpush1.bf16.msra.mxu0 %v326
  %445 = vmatprep.subr.bf16.mxu0 0
  %446 = vmatpush1.bf16.msra.mxu0 %v327
  %447 = vmatprep.subr.bf16.mxu0 0
  %448 = vmatpush1.bf16.msra.mxu0 %v328
  %449 = vmatprep.subr.bf16.mxu0 0
  %450 = vmatpush1.bf16.msra.mxu0 %v329
  %451 = vmatprep.subr.bf16.mxu0 0
  %452 = vmatpush1.bf16.msra.mxu0 %v330
  %453 = vmatprep.subr.bf16.mxu0 0
  %454 = vmatpush1.bf16.msra.mxu0 %v331
  %455 = vmatprep.subr.bf16.mxu0 0
  %456 = vmatpush1.bf16.msra.mxu0 %v332
  %457 = vmatprep.subr.bf16.mxu0 0
  %458 = vmatpush1.bf16.msra.mxu0 %v333
  %459 = vmatprep.subr.bf16.mxu0 0
  %460 = vmatpush1.bf16.msra.mxu0 %v334
  %461 = vmatprep.subr.bf16.mxu0 0
  %462 = vmatpush1.bf16.msra.mxu0 %v335
  %463 = vmatprep.subr.bf16.mxu0 0
  %464 = vmatpush1.bf16.msra.mxu0 %v336
  %465 = vmatprep.subr.bf16.mxu0 0
  %466 = vmatpush1.bf16.msra.mxu0 %v337
  %467 = vmatprep.mubr.bf16.mxu0 %v149
  %468 = vmatmul.mubr.bf16.gmra.mrb[0].mxu0 %v148
  %v469 = vpop.f32.mrb[0].mxu0
  %v470 = vadd.f32 %v405, %v469
  %v471 = vpop.f32.mrb[0].mxu0
  %v472 = vpop.f32.mrb[0].mxu0
  %v473 = vadd.f32 %v408, %v472
  %v474 = vpop.f32.mrb[0].mxu0
  %475 = vmatprep.mubr.bf16.mxu0 %v153
  %476 = vmatmul.mubr.bf16.gmra.mrb[0].mxu0 %v152
  %v477 = vpop.f32.mrb[0].mxu0
  %v478 = vadd.f32 %v413, %v477
  %v479 = vpop.f32.mrb[0].mxu0
  %v480 = vpop.f32.mrb[0].mxu0
  %v481 = vadd.f32 %v416, %v480
  %v482 = vpop.f32.mrb[0].mxu0
  %483 = vmatprep.mubr.bf16.mxu0 %v157
  %484 = vmatmul.mubr.bf16.gmra.mrb[0].mxu0 %v156
  %v485 = vpop.f32.mrb[0].mxu0
  %v486 = vadd.f32 %v421, %v485
  %v487 = vpop.f32.mrb[0].mxu0
  %v488 = vpop.f32.mrb[0].mxu0
  %v489 = vadd.f32 %v424, %v488
  %v490 = vpop.f32.mrb[0].mxu0
  %491 = vmatprep.mubr.bf16.mxu0 %v161
  %492 = vmatmul.mubr.bf16.gmra.mrb[0].mxu0 %v160
  %v493 = vpop.f32.mrb[0].mxu0
  %v494 = vadd.f32 %v429, %v493
  %v495 = vpop.f32.mrb[0].mxu0
  %v496 = vpop.f32.mrb[0].mxu0
  %v497 = vadd.f32 %v432, %v496
  %v498 = vpop.f32.mrb[0].mxu0
  %499 = vdwg.mxu0
  %500 = vadd.xlane.f32.xlu0 %v470
  %v501 = vpop.xlane.xlu0 %500
  %502 = vadd.xlane.f32.xlu0 %v473
  %v503 = vpop.xlane.xlu0 %502
  %504 = vadd.xlane.f32.xlu0 %v478
  %v505 = vpop.xlane.xlu0 %504
  %506 = vadd.xlane.f32.xlu0 %v481
  %v507 = vpop.xlane.xlu0 %506
  %508 = vadd.xlane.f32.xlu0 %v486
  %v509 = vpop.xlane.xlu0 %508
  %510 = vadd.xlane.f32.xlu0 %v489
  %v511 = vpop.xlane.xlu0 %510
  %512 = vadd.xlane.f32.xlu0 %v494
  %v513 = vpop.xlane.xlu0 %512
  %514 = vadd.xlane.f32.xlu0 %v497
  %v515 = vpop.xlane.xlu0 %514
  %v516 = vmul.f32 %v501, 0.010204081
  %v517 = vmul.f32 %v503, 0.010204081
  %v518 = vmul.f32 %v505, 0.010204081
  %v519 = vmul.f32 %v507, 0.010204081
  %v520 = vmul.f32 %v509, 0.010204081
  %v521 = vmul.f32 %v511, 0.010204081
  %v522 = vmul.f32 %v513, 0.010204081
  %v523 = vmul.f32 %v515, 0.010204081
  %v524 = vmul.f32 %v470, %v470
  %v525 = vmul.f32 %v473, %v473
  %v526 = vmul.f32 %v478, %v478
  %v527 = vmul.f32 %v481, %v481
  %v528 = vmul.f32 %v486, %v486
  %v529 = vmul.f32 %v489, %v489
  %v530 = vmul.f32 %v494, %v494
  %v531 = vmul.f32 %v497, %v497
  %532 = vadd.xlane.f32.xlu0 %v524
  %v533 = vpop.xlane.xlu0 %532
  %534 = vadd.xlane.f32.xlu0 %v525
  %v535 = vpop.xlane.xlu0 %534
  %536 = vadd.xlane.f32.xlu0 %v526
  %v537 = vpop.xlane.xlu0 %536
  %538 = vadd.xlane.f32.xlu0 %v527
  %v539 = vpop.xlane.xlu0 %538
  %540 = vadd.xlane.f32.xlu0 %v528
  %v541 = vpop.xlane.xlu0 %540
  %542 = vadd.xlane.f32.xlu0 %v529
  %v543 = vpop.xlane.xlu0 %542
  %544 = vadd.xlane.f32.xlu0 %v530
  %v545 = vpop.xlane.xlu0 %544
  %546 = vadd.xlane.f32.xlu0 %v531
  %v547 = vpop.xlane.xlu0 %546
  %v548 = vmul.f32 %v533, 0.010204081
  %v549 = vmul.f32 %v535, 0.010204081
  %v550 = vmul.f32 %v537, 0.010204081
  %v551 = vmul.f32 %v539, 0.010204081
  %v552 = vmul.f32 %v541, 0.010204081
  %v553 = vmul.f32 %v543, 0.010204081
  %v554 = vmul.f32 %v545, 0.010204081
  %v555 = vmul.f32 %v547, 0.010204081
  %v556 = vmul.f32 %v516, %v516
  %v557 = vmul.f32 %v517, %v517
  %v558 = vmul.f32 %v518, %v518
  %v559 = vmul.f32 %v519, %v519
  %v560 = vmul.f32 %v520, %v520
  %v561 = vmul.f32 %v521, %v521
  %v562 = vmul.f32 %v522, %v522
  %v563 = vmul.f32 %v523, %v523
  %v564 = vsub.f32 %v548, %v556
  %v565 = vsub.f32 %v549, %v557
  %v566 = vsub.f32 %v550, %v558
  %v567 = vsub.f32 %v551, %v559
  %v568 = vsub.f32 %v552, %v560
  %v569 = vsub.f32 %v553, %v561
  %v570 = vsub.f32 %v554, %v562
  %v571 = vsub.f32 %v555, %v563
  %v572 = vmax.f32 %v564, 0.0
  %v573 = vmax.f32 %v565, 0.0
  %v574 = vmax.f32 %v566, 0.0
  %v575 = vmax.f32 %v567, 0.0
  %v576 = vmax.f32 %v568, 0.0
  %v577 = vmax.f32 %v569, 0.0
  %v578 = vmax.f32 %v570, 0.0
  %v579 = vmax.f32 %v571, 0.0
  %v580 = vadd.f32 %v572, 1e-05
  %v581 = vadd.f32 %v573, 1e-05
  %v582 = vadd.f32 %v574, 1e-05
  %v583 = vadd.f32 %v575, 1e-05
  %v584 = vadd.f32 %v576, 1e-05
  %v585 = vadd.f32 %v577, 1e-05
  %v586 = vadd.f32 %v578, 1e-05
  %v587 = vadd.f32 %v579, 1e-05
  %v588 = vrsqrt.pop %v580
  %v589 = vrsqrt.pop %v581
  %v590 = vrsqrt.pop %v582
  %v591 = vrsqrt.pop %v583
  %v592 = vrsqrt.pop %v584
  %v593 = vrsqrt.pop %v585
  %v594 = vrsqrt.pop %v586
  %v595 = vrsqrt.pop %v587
  %v596 = vld [vmem:[%s2] sm:$0xff]
  %v597 = vld [vmem:[%s2 + $0x8] sm:$0xff]
  %v598 = vld [vmem:[%s2 + $0x10] sm:$0xff]
  %v599 = vld [vmem:[%s2 + $0x18] sm:$0xff]
  %v600 = vld [vmem:[%s2 + $0x20] sm:$0xff]
  %v601 = vld [vmem:[%s2 + $0x28] sm:$0xff]
  %v602 = vld [vmem:[%s2 + $0x30] sm:$0xff]
  %v603 = vld [vmem:[%s2 + $0x38] sm:$0xff]
  %v604 = vmul.f32 %v588, %v596
  %v605 = vmul.f32 %v589, %v597
  %v606 = vmul.f32 %v590, %v598
  %v607 = vmul.f32 %v591, %v599
  %v608 = vmul.f32 %v592, %v600
  %v609 = vmul.f32 %v593, %v601
  %v610 = vmul.f32 %v594, %v602
  %v611 = vmul.f32 %v595, %v603
  %v612 = vld [vmem:[%s3] sm:$0xff]
  %v613 = vld [vmem:[%s3 + $0x8] sm:$0xff]
  %v614 = vld [vmem:[%s3 + $0x10] sm:$0xff]
  %v615 = vld [vmem:[%s3 + $0x18] sm:$0xff]
  %v616 = vld [vmem:[%s3 + $0x20] sm:$0xff]
  %v617 = vld [vmem:[%s3 + $0x28] sm:$0xff]
  %v618 = vld [vmem:[%s3 + $0x30] sm:$0xff]
  %v619 = vld [vmem:[%s3 + $0x38] sm:$0xff]
  %v620 = vmul.f32 %v516, %v604
  %v621 = vmul.f32 %v517, %v605
  %v622 = vmul.f32 %v518, %v606
  %v623 = vmul.f32 %v519, %v607
  %v624 = vmul.f32 %v520, %v608
  %v625 = vmul.f32 %v521, %v609
  %v626 = vmul.f32 %v522, %v610
  %v627 = vmul.f32 %v523, %v611
  %v628 = vsub.f32 %v612, %v620
  %v629 = vsub.f32 %v613, %v621
  %v630 = vsub.f32 %v614, %v622
  %v631 = vsub.f32 %v615, %v623
  %v632 = vsub.f32 %v616, %v624
  %v633 = vsub.f32 %v617, %v625
  %v634 = vsub.f32 %v618, %v626
  %v635 = vsub.f32 %v619, %v627
  %637 = vset.pattern.permute.xlu0 0
  %638 = vperm.xlu0 %637, %v604
  %v639 = vpop.permute.xlu0 %638
  %642 = vset.pattern.permute.xlu0 0
  %643 = vperm.xlu0 %642, %v605
  %v644 = vpop.permute.xlu0 %643
  %647 = vset.pattern.permute.xlu0 0
  %648 = vperm.xlu0 %647, %v606
  %v649 = vpop.permute.xlu0 %648
  %652 = vset.pattern.permute.xlu0 0
  %653 = vperm.xlu0 %652, %v607
  %v654 = vpop.permute.xlu0 %653
  %657 = vset.pattern.permute.xlu0 0
  %658 = vperm.xlu0 %657, %v608
  %v659 = vpop.permute.xlu0 %658
  %662 = vset.pattern.permute.xlu0 0
  %663 = vperm.xlu0 %662, %v609
  %v664 = vpop.permute.xlu0 %663
  %667 = vset.pattern.permute.xlu0 0
  %668 = vperm.xlu0 %667, %v610
  %v669 = vpop.permute.xlu0 %668
  %672 = vset.pattern.permute.xlu0 0
  %673 = vperm.xlu0 %672, %v611
  %v674 = vpop.permute.xlu0 %673
  %v676 = vmul.f32 %v470, %v639
  %v677 = vmul.f32 %v473, %v644
  %v678 = vmul.f32 %v478, %v649
  %v679 = vmul.f32 %v481, %v654
  %v680 = vmul.f32 %v486, %v659
  %v681 = vmul.f32 %v489, %v664
  %v682 = vmul.f32 %v494, %v669
  %v683 = vmul.f32 %v497, %v674
  %685 = vset.pattern.permute.xlu0 0
  %686 = vperm.xlu0 %685, %v628
  %v687 = vpop.permute.xlu0 %686
  %690 = vset.pattern.permute.xlu0 0
  %691 = vperm.xlu0 %690, %v629
  %v692 = vpop.permute.xlu0 %691
  %695 = vset.pattern.permute.xlu0 0
  %696 = vperm.xlu0 %695, %v630
  %v697 = vpop.permute.xlu0 %696
  %700 = vset.pattern.permute.xlu0 0
  %701 = vperm.xlu0 %700, %v631
  %v702 = vpop.permute.xlu0 %701
  %705 = vset.pattern.permute.xlu0 0
  %706 = vperm.xlu0 %705, %v632
  %v707 = vpop.permute.xlu0 %706
  %710 = vset.pattern.permute.xlu0 0
  %711 = vperm.xlu0 %710, %v633
  %v712 = vpop.permute.xlu0 %711
  %715 = vset.pattern.permute.xlu0 0
  %716 = vperm.xlu0 %715, %v634
  %v717 = vpop.permute.xlu0 %716
  %720 = vset.pattern.permute.xlu0 0
  %721 = vperm.xlu0 %720, %v635
  %v722 = vpop.permute.xlu0 %721
  %v724 = vadd.f32 %v676, %v687
  %v725 = vadd.f32 %v677, %v692
  %v726 = vadd.f32 %v678, %v697
  %v727 = vadd.f32 %v679, %v702
  %v728 = vadd.f32 %v680, %v707
  %v729 = vadd.f32 %v681, %v712
  %v730 = vadd.f32 %v682, %v717
  %v731 = vadd.f32 %v683, %v722
  %vm732 = vcmp.ge.f32.partialorder %v724, 0.0
  %vm733 = vcmp.ge.f32.partialorder %v725, 0.0
  %vm734 = vcmp.ge.f32.partialorder %v726, 0.0
  %vm735 = vcmp.ge.f32.partialorder %v727, 0.0
  %vm736 = vcmp.ge.f32.partialorder %v728, 0.0
  %vm737 = vcmp.ge.f32.partialorder %v729, 0.0
  %vm738 = vcmp.ge.f32.partialorder %v730, 0.0
  %vm739 = vcmp.ge.f32.partialorder %v731, 0.0
  %v740 = vmul.f32 %v724, 0.2
  %v741 = vmul.f32 %v725, 0.2
  %v742 = vmul.f32 %v726, 0.2
  %v743 = vmul.f32 %v727, 0.2
  %v744 = vmul.f32 %v728, 0.2
  %v745 = vmul.f32 %v729, 0.2
  %v746 = vmul.f32 %v730, 0.2
  %v747 = vmul.f32 %v731, 0.2
  %v748 = vsel %vm732, %v724, %v740
  %v749 = vsel %vm733, %v725, %v741
  %v750 = vsel %vm734, %v726, %v742
  %v751 = vsel %vm735, %v727, %v743
  %v752 = vsel %vm736, %v728, %v744
  %v753 = vsel %vm737, %v729, %v745
  %v754 = vsel %vm738, %v730, %v746
  %v755 = vsel %vm739, %v731, %v747
  %v756 = vpack.c.bf16 %v749, %v748
  %v757 = vpack.c.bf16 %v751, %v750
  %v758 = vpack.c.bf16 %v753, %v752
  %v759 = vpack.c.bf16 %v755, %v754
  %v764 = vunpack.c.l.b16 %v756
  %v765 = vunpack.c.h.b16 %v756
  %v766 = vunpack.c.l.b16 %v757
  %v767 = vunpack.c.h.b16 %v757
  %v768 = vunpack.c.l.b16 %v758
  %v769 = vunpack.c.h.b16 %v758
  %v770 = vunpack.c.l.b16 %v759
  %v771 = vunpack.c.h.b16 %v759
  %v772 = vpack.c.b16 %v764, %v764
  %v773 = vpack.c.b16 %v765, %v765
  %v774 = vpack.c.b16 %v766, %v766
  %v775 = vpack.c.b16 %v767, %v767
  %v776 = vpack.c.b16 %v768, %v768
  %v777 = vpack.c.b16 %v769, %v769
  %v778 = vpack.c.b16 %v770, %v770
  %v779 = vpack.c.b16 %v771, %v771
  %788 = vst [vmem:[%s4] sm:$0xf] %v772
  %789 = vst [vmem:[%s4 + $0x4] sm:$0xf] %v773
  %790 = vst [vmem:[%s4 + $0x8] sm:$0xf] %v774
  %791 = vst [vmem:[%s4 + $0xc] sm:$0xf] %v775
  %792 = vst [vmem:[%s4 + $0x10] sm:$0xf] %v776
  %793 = vst [vmem:[%s4 + $0x14] sm:$0xf] %v777
  %794 = vst [vmem:[%s4 + $0x18] sm:$0xf] %v778
  %795 = vst [vmem:[%s4 + $0x1c] sm:$0xf] %v779
  // Predicated region
  $region18: #{_lambda_.8} parent=0 // pred_check
    _
  $region19: #{_lambda_.8} parent=0 // pred_check_branch
    %797 = sbr.rel (0) target = $region21
  $region20: #{_lambda_.8} parent=0 // pred_region
    _
  $region21: #{_lambda_.8} parent=0 // pred_fallthru
    _
  // Predicated region
  $region22: #{_lambda_.8} parent=0 // pred_check
    _
  $region23: #{_lambda_.8} parent=0 // pred_check_branch
    %799 = sbr.rel (0) target = $region25
  $region24: #{_lambda_.8} parent=0 // pred_region
    _
  $region25: #{_lambda_.8} parent=0 // pred_fallthru
    _

// kernel: _lambda_.9
$region0: #{_lambda_.9}
  #allocation0 [shape = 'u32[]', space=smem, size = 0x4, offset = 0x4, fixed_abs, tag = 'smem constant byte address 0x4 - core index']
  #allocation1 [shape = 'u32[144,128]{1,0:T(1,128)}', space=vmem, size = 0x12000, scoped, tag = 'internal scratch']
  %s0 = inlined_call_operand.vmem [shape: bf16[8,1024], index: 0, kind: input, shape index: {}]
  %s1 = inlined_call_operand.vmem [shape: bf16[1024,128], index: 1, kind: input, shape index: {}]
  %s2 = inlined_call_operand.vmem [shape: f32[8,1], index: 2, kind: input, shape index: {}]
  %s3 = inlined_call_operand.vmem [shape: f32[8,128], index: 3, kind: output, shape index: {}]
  %s4 = sld [smem:[#allocation0]]
  $region22: #{_lambda_.9} parent=0
    _
  %s6 = ssub.s32 1, %s4
  %s7 = scalar_select 0, %s6, %s4
  // Predicated region
  $region2: #{_lambda_.9} parent=0 // pred_check
    _
  $region3: #{_lambda_.9} parent=0 // pred_check_branch
    %9 = sbr.rel (0) target = $region5
  $region4: #{_lambda_.9} parent=0 // pred_region
    _
  $region5: #{_lambda_.9} parent=0 // pred_fallthru
    _
  // Predicated region
  $region6: #{_lambda_.9} parent=0 // pred_check
    _
  $region7: #{_lambda_.9} parent=0 // pred_check_branch
    %11 = sbr.rel (0) target = $region9
  $region8: #{_lambda_.9} parent=0 // pred_region
    _
  $region9: #{_lambda_.9} parent=0 // pred_fallthru
    _
  // Predicated region
  $region10: #{_lambda_.9} parent=0 // pred_check
    _
  $region11: #{_lambda_.9} parent=0 // pred_check_branch
    %13 = sbr.rel (0) target = $region13
  $region12: #{_lambda_.9} parent=0 // pred_region
    _
  $region13: #{_lambda_.9} parent=0 // pred_fallthru
    _
  %v15 = vld [vmem:[%s0] sm:$0xff]
  %v16 = vld [vmem:[%s0 + $0x8] sm:$0xff]
  %v17 = vld [vmem:[%s0 + $0x10] sm:$0xff]
  %v18 = vld [vmem:[%s0 + $0x18] sm:$0xff]
  %v19 = vld [vmem:[%s1] sm:$0xf]
  %v20 = vld [vmem:[%s1 + $0x4] sm:$0xf]
  %v21 = vld [vmem:[%s1 + $0x8] sm:$0xf]
  %v22 = vld [vmem:[%s1 + $0xc] sm:$0xf]
  %v23 = vld [vmem:[%s1 + $0x10] sm:$0xf]
  %v24 = vld [vmem:[%s1 + $0x14] sm:$0xf]
  %v25 = vld [vmem:[%s1 + $0x18] sm:$0xf]
  %v26 = vld [vmem:[%s1 + $0x1c] sm:$0xf]
  %v27 = vld [vmem:[%s1 + $0x20] sm:$0xf]
  %v28 = vld [vmem:[%s1 + $0x24] sm:$0xf]
  %v29 = vld [vmem:[%s1 + $0x28] sm:$0xf]
  %v30 = vld [vmem:[%s1 + $0x2c] sm:$0xf]
  %v31 = vld [vmem:[%s1 + $0x30] sm:$0xf]
  %v32 = vld [vmem:[%s1 + $0x34] sm:$0xf]
  %v33 = vld [vmem:[%s1 + $0x38] sm:$0xf]
  %v34 = vld [vmem:[%s1 + $0x3c] sm:$0xf]
  %v35 = vld [vmem:[%s1 + $0x40] sm:$0xf]
  %v36 = vld [vmem:[%s1 + $0x44] sm:$0xf]
  %v37 = vld [vmem:[%s1 + $0x48] sm:$0xf]
  %v38 = vld [vmem:[%s1 + $0x4c] sm:$0xf]
  %v39 = vld [vmem:[%s1 + $0x50] sm:$0xf]
  %v40 = vld [vmem:[%s1 + $0x54] sm:$0xf]
  %v41 = vld [vmem:[%s1 + $0x58] sm:$0xf]
  %v42 = vld [vmem:[%s1 + $0x5c] sm:$0xf]
  %v43 = vld [vmem:[%s1 + $0x60] sm:$0xf]
  %v44 = vld [vmem:[%s1 + $0x64] sm:$0xf]
  %v45 = vld [vmem:[%s1 + $0x68] sm:$0xf]
  %v46 = vld [vmem:[%s1 + $0x6c] sm:$0xf]
  %v47 = vld [vmem:[%s1 + $0x70] sm:$0xf]
  %v48 = vld [vmem:[%s1 + $0x74] sm:$0xf]
  %v49 = vld [vmem:[%s1 + $0x78] sm:$0xf]
  %v50 = vld [vmem:[%s1 + $0x7c] sm:$0xf]
  %v51 = vld [vmem:[%s1 + $0x80] sm:$0xf]
  %v52 = vld [vmem:[%s1 + $0x84] sm:$0xf]
  %v53 = vld [vmem:[%s1 + $0x88] sm:$0xf]
  %v54 = vld [vmem:[%s1 + $0x8c] sm:$0xf]
  %v55 = vld [vmem:[%s1 + $0x90] sm:$0xf]
  %v56 = vld [vmem:[%s1 + $0x94] sm:$0xf]
  %v57 = vld [vmem:[%s1 + $0x98] sm:$0xf]
  %v58 = vld [vmem:[%s1 + $0x9c] sm:$0xf]
  %v59 = vld [vmem:[%s1 + $0xa0] sm:$0xf]
  %v60 = vld [vmem:[%s1 + $0xa4] sm:$0xf]
  %v61 = vld [vmem:[%s1 + $0xa8] sm:$0xf]
  %v62 = vld [vmem:[%s1 + $0xac] sm:$0xf]
  %v63 = vld [vmem:[%s1 + $0xb0] sm:$0xf]
  %v64 = vld [vmem:[%s1 + $0xb4] sm:$0xf]
  %v65 = vld [vmem:[%s1 + $0xb8] sm:$0xf]
  %v66 = vld [vmem:[%s1 + $0xbc] sm:$0xf]
  %v67 = vld [vmem:[%s1 + $0xc0] sm:$0xf]
  %v68 = vld [vmem:[%s1 + $0xc4] sm:$0xf]
  %v69 = vld [vmem:[%s1 + $0xc8] sm:$0xf]
  %v70 = vld [vmem:[%s1 + $0xcc] sm:$0xf]
  %v71 = vld [vmem:[%s1 + $0xd0] sm:$0xf]
  %v72 = vld [vmem:[%s1 + $0xd4] sm:$0xf]
  %v73 = vld [vmem:[%s1 + $0xd8] sm:$0xf]
  %v74 = vld [vmem:[%s1 + $0xdc] sm:$0xf]
  %v75 = vld [vmem:[%s1 + $0xe0] sm:$0xf]
  %v76 = vld [vmem:[%s1 + $0xe4] sm:$0xf]
  %v77 = vld [vmem:[%s1 + $0xe8] sm:$0xf]
  %v78 = vld [vmem:[%s1 + $0xec] sm:$0xf]
  %v79 = vld [vmem:[%s1 + $0xf0] sm:$0xf]
  %v80 = vld [vmem:[%s1 + $0xf4] sm:$0xf]
  %v81 = vld [vmem:[%s1 + $0xf8] sm:$0xf]
  %v82 = vld [vmem:[%s1 + $0xfc] sm:$0xf]
  %v83 = vld [vmem:[%s1 + $0x100] sm:$0xf]
  %v84 = vld [vmem:[%s1 + $0x104] sm:$0xf]
  %v85 = vld [vmem:[%s1 + $0x108] sm:$0xf]
  %v86 = vld [vmem:[%s1 + $0x10c] sm:$0xf]
  %v87 = vld [vmem:[%s1 + $0x110] sm:$0xf]
  %v88 = vld [vmem:[%s1 + $0x114] sm:$0xf]
  %v89 = vld [vmem:[%s1 + $0x118] sm:$0xf]
  %v90 = vld [vmem:[%s1 + $0x11c] sm:$0xf]
  %v91 = vld [vmem:[%s1 + $0x120] sm:$0xf]
  %v92 = vld [vmem:[%s1 + $0x124] sm:$0xf]
  %v93 = vld [vmem:[%s1 + $0x128] sm:$0xf]
  %v94 = vld [vmem:[%s1 + $0x12c] sm:$0xf]
  %v95 = vld [vmem:[%s1 + $0x130] sm:$0xf]
  %v96 = vld [vmem:[%s1 + $0x134] sm:$0xf]
  %v97 = vld [vmem:[%s1 + $0x138] sm:$0xf]
  %v98 = vld [vmem:[%s1 + $0x13c] sm:$0xf]
  %v99 = vld [vmem:[%s1 + $0x140] sm:$0xf]
  %v100 = vld [vmem:[%s1 + $0x144] sm:$0xf]
  %v101 = vld [vmem:[%s1 + $0x148] sm:$0xf]
  %v102 = vld [vmem:[%s1 + $0x14c] sm:$0xf]
  %v103 = vld [vmem:[%s1 + $0x150] sm:$0xf]
  %v104 = vld [vmem:[%s1 + $0x154] sm:$0xf]
  %v105 = vld [vmem:[%s1 + $0x158] sm:$0xf]
  %v106 = vld [vmem:[%s1 + $0x15c] sm:$0xf]
  %v107 = vld [vmem:[%s1 + $0x160] sm:$0xf]
  %v108 = vld [vmem:[%s1 + $0x164] sm:$0xf]
  %v109 = vld [vmem:[%s1 + $0x168] sm:$0xf]
  %v110 = vld [vmem:[%s1 + $0x16c] sm:$0xf]
  %v111 = vld [vmem:[%s1 + $0x170] sm:$0xf]
  %v112 = vld [vmem:[%s1 + $0x174] sm:$0xf]
  %v113 = vld [vmem:[%s1 + $0x178] sm:$0xf]
  %v114 = vld [vmem:[%s1 + $0x17c] sm:$0xf]
  %v115 = vld [vmem:[%s1 + $0x180] sm:$0xf]
  %v116 = vld [vmem:[%s1 + $0x184] sm:$0xf]
  %v117 = vld [vmem:[%s1 + $0x188] sm:$0xf]
  %v118 = vld [vmem:[%s1 + $0x18c] sm:$0xf]
  %v119 = vld [vmem:[%s1 + $0x190] sm:$0xf]
  %v120 = vld [vmem:[%s1 + $0x194] sm:$0xf]
  %v121 = vld [vmem:[%s1 + $0x198] sm:$0xf]
  %v122 = vld [vmem:[%s1 + $0x19c] sm:$0xf]
  %v123 = vld [vmem:[%s1 + $0x1a0] sm:$0xf]
  %v124 = vld [vmem:[%s1 + $0x1a4] sm:$0xf]
  %v125 = vld [vmem:[%s1 + $0x1a8] sm:$0xf]
  %v126 = vld [vmem:[%s1 + $0x1ac] sm:$0xf]
  %v127 = vld [vmem:[%s1 + $0x1b0] sm:$0xf]
  %v128 = vld [vmem:[%s1 + $0x1b4] sm:$0xf]
  %v129 = vld [vmem:[%s1 + $0x1b8] sm:$0xf]
  %v130 = vld [vmem:[%s1 + $0x1bc] sm:$0xf]
  %v131 = vld [vmem:[%s1 + $0x1c0] sm:$0xf]
  %v132 = vld [vmem:[%s1 + $0x1c4] sm:$0xf]
  %v133 = vld [vmem:[%s1 + $0x1c8] sm:$0xf]
  %v134 = vld [vmem:[%s1 + $0x1cc] sm:$0xf]
  %v135 = vld [vmem:[%s1 + $0x1d0] sm:$0xf]
  %v136 = vld [vmem:[%s1 + $0x1d4] sm:$0xf]
  %v137 = vld [vmem:[%s1 + $0x1d8] sm:$0xf]
  %v138 = vld [vmem:[%s1 + $0x1dc] sm:$0xf]
  %v139 = vld [vmem:[%s1 + $0x1e0] sm:$0xf]
  %v140 = vld [vmem:[%s1 + $0x1e4] sm:$0xf]
  %v141 = vld [vmem:[%s1 + $0x1e8] sm:$0xf]
  %v142 = vld [vmem:[%s1 + $0x1ec] sm:$0xf]
  %v143 = vld [vmem:[%s1 + $0x1f0] sm:$0xf]
  %v144 = vld [vmem:[%s1 + $0x1f4] sm:$0xf]
  %v145 = vld [vmem:[%s1 + $0x1f8] sm:$0xf]
  %v146 = vld [vmem:[%s1 + $0x1fc] sm:$0xf]
  %v147 = vld [vmem:[%s2] sm:$0xff]
  %149 = vset.pattern.permute.xlu0 0
  %150 = vperm.xlu0 %149, %v147
  %v151 = vpop.permute.xlu0 %150
  %v157 = vunpack.c.l.b16 %v15
  %v158 = vunpack.c.h.b16 %v15
  %v159 = vunpack.c.l.b16 %v16
  %v160 = vunpack.c.h.b16 %v16
  %v161 = vunpack.c.l.b16 %v17
  %v162 = vunpack.c.h.b16 %v17
  %v163 = vunpack.c.l.b16 %v18
  %v164 = vunpack.c.h.b16 %v18
  %v165 = vpack.c.b16 %v157, %v157
  %v166 = vpack.c.b16 %v158, %v158
  %v167 = vpack.c.b16 %v159, %v159
  %v168 = vpack.c.b16 %v160, %v160
  %v169 = vpack.c.b16 %v161, %v161
  %v170 = vpack.c.b16 %v162, %v162
  %v171 = vpack.c.b16 %v163, %v163
  %v172 = vpack.c.b16 %v164, %v164
  %v309 = vunpack.c.l.b16 %v19
  %v310 = vunpack.c.l.b16 %v20
  %v311 = vunpack.c.l.b16 %v21
  %v312 = vunpack.c.l.b16 %v22
  %v313 = vunpack.c.l.b16 %v23
  %v314 = vunpack.c.l.b16 %v24
  %v315 = vunpack.c.l.b16 %v25
  %v316 = vunpack.c.l.b16 %v26
  %v317 = vunpack.c.l.b16 %v27
  %v318 = vunpack.c.l.b16 %v28
  %v319 = vunpack.c.l.b16 %v29
  %v320 = vunpack.c.l.b16 %v30
  %v321 = vunpack.c.l.b16 %v31
  %v322 = vunpack.c.l.b16 %v32
  %v323 = vunpack.c.l.b16 %v33
  %v324 = vunpack.c.l.b16 %v34
  %v325 = vunpack.c.l.b16 %v35
  %v326 = vunpack.c.l.b16 %v36
  %v327 = vunpack.c.l.b16 %v37
  %v328 = vunpack.c.l.b16 %v38
  %v329 = vunpack.c.l.b16 %v39
  %v330 = vunpack.c.l.b16 %v40
  %v331 = vunpack.c.l.b16 %v41
  %v332 = vunpack.c.l.b16 %v42
  %v333 = vunpack.c.l.b16 %v43
  %v334 = vunpack.c.l.b16 %v44
  %v335 = vunpack.c.l.b16 %v45
  %v336 = vunpack.c.l.b16 %v46
  %v337 = vunpack.c.l.b16 %v47
  %v338 = vunpack.c.l.b16 %v48
  %v339 = vunpack.c.l.b16 %v49
  %v340 = vunpack.c.l.b16 %v50
  %v341 = vunpack.c.l.b16 %v51
  %v342 = vunpack.c.l.b16 %v52
  %v343 = vunpack.c.l.b16 %v53
  %v344 = vunpack.c.l.b16 %v54
  %v345 = vunpack.c.l.b16 %v55
  %v346 = vunpack.c.l.b16 %v56
  %v347 = vunpack.c.l.b16 %v57
  %v348 = vunpack.c.l.b16 %v58
  %v349 = vunpack.c.l.b16 %v59
  %v350 = vunpack.c.l.b16 %v60
  %v351 = vunpack.c.l.b16 %v61
  %v352 = vunpack.c.l.b16 %v62
  %v353 = vunpack.c.l.b16 %v63
  %v354 = vunpack.c.l.b16 %v64
  %v355 = vunpack.c.l.b16 %v65
  %v356 = vunpack.c.l.b16 %v66
  %v357 = vunpack.c.l.b16 %v67
  %v358 = vunpack.c.l.b16 %v68
  %v359 = vunpack.c.l.b16 %v69
  %v360 = vunpack.c.l.b16 %v70
  %v361 = vunpack.c.l.b16 %v71
  %v362 = vunpack.c.l.b16 %v72
  %v363 = vunpack.c.l.b16 %v73
  %v364 = vunpack.c.l.b16 %v74
  %v365 = vunpack.c.l.b16 %v75
  %v366 = vunpack.c.l.b16 %v76
  %v367 = vunpack.c.l.b16 %v77
  %v368 = vunpack.c.l.b16 %v78
  %v369 = vunpack.c.l.b16 %v79
  %v370 = vunpack.c.l.b16 %v80
  %v371 = vunpack.c.l.b16 %v81
  %v372 = vunpack.c.l.b16 %v82
  %v373 = vunpack.c.l.b16 %v83
  %v374 = vunpack.c.l.b16 %v84
  %v375 = vunpack.c.l.b16 %v85
  %v376 = vunpack.c.l.b16 %v86
  %v377 = vunpack.c.l.b16 %v87
  %v378 = vunpack.c.l.b16 %v88
  %v379 = vunpack.c.l.b16 %v89
  %v380 = vunpack.c.l.b16 %v90
  %v381 = vunpack.c.l.b16 %v91
  %v382 = vunpack.c.l.b16 %v92
  %v383 = vunpack.c.l.b16 %v93
  %v384 = vunpack.c.l.b16 %v94
  %v385 = vunpack.c.l.b16 %v95
  %v386 = vunpack.c.l.b16 %v96
  %v387 = vunpack.c.l.b16 %v97
  %v388 = vunpack.c.l.b16 %v98
  %v389 = vunpack.c.l.b16 %v99
  %v390 = vunpack.c.l.b16 %v100
  %v391 = vunpack.c.l.b16 %v101
  %v392 = vunpack.c.l.b16 %v102
  %v393 = vunpack.c.l.b16 %v103
  %v394 = vunpack.c.l.b16 %v104
  %v395 = vunpack.c.l.b16 %v105
  %v396 = vunpack.c.l.b16 %v106
  %v397 = vunpack.c.l.b16 %v107
  %v398 = vunpack.c.l.b16 %v108
  %v399 = vunpack.c.l.b16 %v109
  %v400 = vunpack.c.l.b16 %v110
  %v401 = vunpack.c.l.b16 %v111
  %v402 = vunpack.c.l.b16 %v112
  %v403 = vunpack.c.l.b16 %v113
  %v404 = vunpack.c.l.b16 %v114
  %v405 = vunpack.c.l.b16 %v115
  %v406 = vunpack.c.l.b16 %v116
  %v407 = vunpack.c.l.b16 %v117
  %v408 = vunpack.c.l.b16 %v118
  %v409 = vunpack.c.l.b16 %v119
  %v410 = vunpack.c.l.b16 %v120
  %v411 = vunpack.c.l.b16 %v121
  %v412 = vunpack.c.l.b16 %v122
  %v413 = vunpack.c.l.b16 %v123
  %v414 = vunpack.c.l.b16 %v124
  %v415 = vunpack.c.l.b16 %v125
  %v416 = vunpack.c.l.b16 %v126
  %v417 = vunpack.c.l.b16 %v127
  %v418 = vunpack.c.l.b16 %v128
  %v419 = vunpack.c.l.b16 %v129
  %v420 = vunpack.c.l.b16 %v130
  %v421 = vunpack.c.l.b16 %v131
  %v422 = vunpack.c.l.b16 %v132
  %v423 = vunpack.c.l.b16 %v133
  %v424 = vunpack.c.l.b16 %v134
  %v425 = vunpack.c.l.b16 %v135
  %v426 = vunpack.c.l.b16 %v136
  %v427 = vunpack.c.l.b16 %v137
  %v428 = vunpack.c.l.b16 %v138
  %v429 = vunpack.c.l.b16 %v139
  %v430 = vunpack.c.l.b16 %v140
  %v431 = vunpack.c.l.b16 %v141
  %v432 = vunpack.c.l.b16 %v142
  %v433 = vunpack.c.l.b16 %v143
  %v434 = vunpack.c.l.b16 %v144
  %v435 = vunpack.c.l.b16 %v145
  %v436 = vunpack.c.l.b16 %v146
  %v437 = vpack.c.b16 %v310, %v309
  %v438 = vpack.c.b16 %v312, %v311
  %v439 = vpack.c.b16 %v314, %v313
  %v440 = vpack.c.b16 %v316, %v315
  %v441 = vpack.c.b16 %v318, %v317
  %v442 = vpack.c.b16 %v320, %v319
  %v443 = vpack.c.b16 %v322, %v321
  %v444 = vpack.c.b16 %v324, %v323
  %v445 = vpack.c.b16 %v326, %v325
  %v446 = vpack.c.b16 %v328, %v327
  %v447 = vpack.c.b16 %v330, %v329
  %v448 = vpack.c.b16 %v332, %v331
  %v449 = vpack.c.b16 %v334, %v333
  %v450 = vpack.c.b16 %v336, %v335
  %v451 = vpack.c.b16 %v338, %v337
  %v452 = vpack.c.b16 %v340, %v339
  %v453 = vpack.c.b16 %v342, %v341
  %v454 = vpack.c.b16 %v344, %v343
  %v455 = vpack.c.b16 %v346, %v345
  %v456 = vpack.c.b16 %v348, %v347
  %v457 = vpack.c.b16 %v350, %v349
  %v458 = vpack.c.b16 %v352, %v351
  %v459 = vpack.c.b16 %v354, %v353
  %v460 = vpack.c.b16 %v356, %v355
  %v461 = vpack.c.b16 %v358, %v357
  %v462 = vpack.c.b16 %v360, %v359
  %v463 = vpack.c.b16 %v362, %v361
  %v464 = vpack.c.b16 %v364, %v363
  %v465 = vpack.c.b16 %v366, %v365
  %v466 = vpack.c.b16 %v368, %v367
  %v467 = vpack.c.b16 %v370, %v369
  %v468 = vpack.c.b16 %v372, %v371
  %v469 = vpack.c.b16 %v374, %v373
  %v470 = vpack.c.b16 %v376, %v375
  %v471 = vpack.c.b16 %v378, %v377
  %v472 = vpack.c.b16 %v380, %v379
  %v473 = vpack.c.b16 %v382, %v381
  %v474 = vpack.c.b16 %v384, %v383
  %v475 = vpack.c.b16 %v386, %v385
  %v476 = vpack.c.b16 %v388, %v387
  %v477 = vpack.c.b16 %v390, %v389
  %v478 = vpack.c.b16 %v392, %v391
  %v479 = vpack.c.b16 %v394, %v393
  %v480 = vpack.c.b16 %v396, %v395
  %v481 = vpack.c.b16 %v398, %v397
  %v482 = vpack.c.b16 %v400, %v399
  %v483 = vpack.c.b16 %v402, %v401
  %v484 = vpack.c.b16 %v404, %v403
  %v485 = vpack.c.b16 %v406, %v405
  %v486 = vpack.c.b16 %v408, %v407
  %v487 = vpack.c.b16 %v410, %v409
  %v488 = vpack.c.b16 %v412, %v411
  %v489 = vpack.c.b16 %v414, %v413
  %v490 = vpack.c.b16 %v416, %v415
  %v491 = vpack.c.b16 %v418, %v417
  %v492 = vpack.c.b16 %v420, %v419
  %v493 = vpack.c.b16 %v422, %v421
  %v494 = vpack.c.b16 %v424, %v423
  %v495 = vpack.c.b16 %v426, %v425
  %v496 = vpack.c.b16 %v428, %v427
  %v497 = vpack.c.b16 %v430, %v429
  %v498 = vpack.c.b16 %v432, %v431
  %v499 = vpack.c.b16 %v434, %v433
  %v500 = vpack.c.b16 %v436, %v435
  %565 = vmatprep.subr.bf16.mxu0 0
  %566 = vmatpush1.bf16.msra.mxu0 %v437
  %567 = vmatprep.subr.bf16.mxu0 0
  %568 = vmatpush1.bf16.msra.mxu0 %v438
  %569 = vmatprep.subr.bf16.mxu0 0
  %570 = vmatpush1.bf16.msra.mxu0 %v439
  %571 = vmatprep.subr.bf16.mxu0 0
  %572 = vmatpush1.bf16.msra.mxu0 %v440
  %573 = vmatprep.subr.bf16.mxu0 0
  %574 = vmatpush1.bf16.msra.mxu0 %v441
  %575 = vmatprep.subr.bf16.mxu0 0
  %576 = vmatpush1.bf16.msra.mxu0 %v442
  %577 = vmatprep.subr.bf16.mxu0 0
  %578 = vmatpush1.bf16.msra.mxu0 %v443
  %579 = vmatprep.subr.bf16.mxu0 0
  %580 = vmatpush1.bf16.msra.mxu0 %v444
  %581 = vmatprep.subr.bf16.mxu0 0
  %582 = vmatpush1.bf16.msra.mxu0 %v445
  %583 = vmatprep.subr.bf16.mxu0 0
  %584 = vmatpush1.bf16.msra.mxu0 %v446
  %585 = vmatprep.subr.bf16.mxu0 0
  %586 = vmatpush1.bf16.msra.mxu0 %v447
  %587 = vmatprep.subr.bf16.mxu0 0
  %588 = vmatpush1.bf16.msra.mxu0 %v448
  %589 = vmatprep.subr.bf16.mxu0 0
  %590 = vmatpush1.bf16.msra.mxu0 %v449
  %591 = vmatprep.subr.bf16.mxu0 0
  %592 = vmatpush1.bf16.msra.mxu0 %v450
  %593 = vmatprep.subr.bf16.mxu0 0
  %594 = vmatpush1.bf16.msra.mxu0 %v451
  %595 = vmatprep.subr.bf16.mxu0 0
  %596 = vmatpush1.bf16.msra.mxu0 %v452
  %597 = vmatprep.mubr.bf16.mxu0 %v166
  %598 = vmatmul.mubr.bf16.gmra.mrb[0].mxu0 %v165
  %v599 = vpop.f32.mrb[0].mxu0
  %v600 = vadd.f32 %v151, %v599
  %v601 = vpop.f32.mrb[0].mxu0
  %v602 = vpop.f32.mrb[0].mxu0
  %v603 = vpop.f32.mrb[0].mxu0
  %604 = vdwg.mxu0
  %605 = vmatprep.subr.bf16.mxu0 0
  %606 = vmatpush1.bf16.msra.mxu0 %v453
  %607 = vmatprep.subr.bf16.mxu0 0
  %608 = vmatpush1.bf16.msra.mxu0 %v454
  %609 = vmatprep.subr.bf16.mxu0 0
  %610 = vmatpush1.bf16.msra.mxu0 %v455
  %611 = vmatprep.subr.bf16.mxu0 0
  %612 = vmatpush1.bf16.msra.mxu0 %v456
  %613 = vmatprep.subr.bf16.mxu0 0
  %614 = vmatpush1.bf16.msra.mxu0 %v457
  %615 = vmatprep.subr.bf16.mxu0 0
  %616 = vmatpush1.bf16.msra.mxu0 %v458
  %617 = vmatprep.subr.bf16.mxu0 0
  %618 = vmatpush1.bf16.msra.mxu0 %v459
  %619 = vmatprep.subr.bf16.mxu0 0
  %620 = vmatpush1.bf16.msra.mxu0 %v460
  %621 = vmatprep.subr.bf16.mxu0 0
  %622 = vmatpush1.bf16.msra.mxu0 %v461
  %623 = vmatprep.subr.bf16.mxu0 0
  %624 = vmatpush1.bf16.msra.mxu0 %v462
  %625 = vmatprep.subr.bf16.mxu0 0
  %626 = vmatpush1.bf16.msra.mxu0 %v463
  %627 = vmatprep.subr.bf16.mxu0 0
  %628 = vmatpush1.bf16.msra.mxu0 %v464
  %629 = vmatprep.subr.bf16.mxu0 0
  %630 = vmatpush1.bf16.msra.mxu0 %v465
  %631 = vmatprep.subr.bf16.mxu0 0
  %632 = vmatpush1.bf16.msra.mxu0 %v466
  %633 = vmatprep.subr.bf16.mxu0 0
  %634 = vmatpush1.bf16.msra.mxu0 %v467
  %635 = vmatprep.subr.bf16.mxu0 0
  %636 = vmatpush1.bf16.msra.mxu0 %v468
  %637 = vmatprep.mubr.bf16.mxu0 %v168
  %638 = vmatmul.mubr.bf16.gmra.mrb[0].mxu0 %v167
  %v639 = vpop.f32.mrb[0].mxu0
  %v640 = vadd.f32 %v600, %v639
  %v641 = vpop.f32.mrb[0].mxu0
  %v642 = vpop.f32.mrb[0].mxu0
  %v643 = vpop.f32.mrb[0].mxu0
  %644 = vdwg.mxu0
  %645 = vmatprep.subr.bf16.mxu0 0
  %646 = vmatpush1.bf16.msra.mxu0 %v469
  %647 = vmatprep.subr.bf16.mxu0 0
  %648 = vmatpush1.bf16.msra.mxu0 %v470
  %649 = vmatprep.subr.bf16.mxu0 0
  %650 = vmatpush1.bf16.msra.mxu0 %v471
  %651 = vmatprep.subr.bf16.mxu0 0
  %652 = vmatpush1.bf16.msra.mxu0 %v472
  %653 = vmatprep.subr.bf16.mxu0 0
  %654 = vmatpush1.bf16.msra.mxu0 %v473
  %655 = vmatprep.subr.bf16.mxu0 0
  %656 = vmatpush1.bf16.msra.mxu0 %v474
  %657 = vmatprep.subr.bf16.mxu0 0
  %658 = vmatpush1.bf16.msra.mxu0 %v475
  %659 = vmatprep.subr.bf16.mxu0 0
  %660 = vmatpush1.bf16.msra.mxu0 %v476
  %661 = vmatprep.subr.bf16.mxu0 0
  %662 = vmatpush1.bf16.msra.mxu0 %v477
  %663 = vmatprep.subr.bf16.mxu0 0
  %664 = vmatpush1.bf16.msra.mxu0 %v478
  %665 = vmatprep.subr.bf16.mxu0 0
  %666 = vmatpush1.bf16.msra.mxu0 %v479
  %667 = vmatprep.subr.bf16.mxu0 0
  %668 = vmatpush1.bf16.msra.mxu0 %v480
  %669 = vmatprep.subr.bf16.mxu0 0
  %670 = vmatpush1.bf16.msra.mxu0 %v481
  %671 = vmatprep.subr.bf16.mxu0 0
  %672 = vmatpush1.bf16.msra.mxu0 %v482
  %673 = vmatprep.subr.bf16.mxu0 0
  %674 = vmatpush1.bf16.msra.mxu0 %v483
  %675 = vmatprep.subr.bf16.mxu0 0
  %676 = vmatpush1.bf16.msra.mxu0 %v484
  %677 = vmatprep.mubr.bf16.mxu0 %v170
  %678 = vmatmul.mubr.bf16.gmra.mrb[0].mxu0 %v169
  %v679 = vpop.f32.mrb[0].mxu0
  %v680 = vadd.f32 %v640, %v679
  %v681 = vpop.f32.mrb[0].mxu0
  %v682 = vpop.f32.mrb[0].mxu0
  %v683 = vpop.f32.mrb[0].mxu0
  %684 = vdwg.mxu0
  %685 = vmatprep.subr.bf16.mxu0 0
  %686 = vmatpush1.bf16.msra.mxu0 %v485
  %687 = vmatprep.subr.bf16.mxu0 0
  %688 = vmatpush1.bf16.msra.mxu0 %v486
  %689 = vmatprep.subr.bf16.mxu0 0
  %690 = vmatpush1.bf16.msra.mxu0 %v487
  %691 = vmatprep.subr.bf16.mxu0 0
  %692 = vmatpush1.bf16.msra.mxu0 %v488
  %693 = vmatprep.subr.bf16.mxu0 0
  %694 = vmatpush1.bf16.msra.mxu0 %v489
  %695 = vmatprep.subr.bf16.mxu0 0
  %696 = vmatpush1.bf16.msra.mxu0 %v490
  %697 = vmatprep.subr.bf16.mxu0 0
  %698 = vmatpush1.bf16.msra.mxu0 %v491
  %699 = vmatprep.subr.bf16.mxu0 0
  %700 = vmatpush1.bf16.msra.mxu0 %v492
  %701 = vmatprep.subr.bf16.mxu0 0
  %702 = vmatpush1.bf16.msra.mxu0 %v493
  %703 = vmatprep.subr.bf16.mxu0 0
  %704 = vmatpush1.bf16.msra.mxu0 %v494
  %705 = vmatprep.subr.bf16.mxu0 0
  %706 = vmatpush1.bf16.msra.mxu0 %v495
  %707 = vmatprep.subr.bf16.mxu0 0
  %708 = vmatpush1.bf16.msra.mxu0 %v496
  %709 = vmatprep.subr.bf16.mxu0 0
  %710 = vmatpush1.bf16.msra.mxu0 %v497
  %711 = vmatprep.subr.bf16.mxu0 0
  %712 = vmatpush1.bf16.msra.mxu0 %v498
  %713 = vmatprep.subr.bf16.mxu0 0
  %714 = vmatpush1.bf16.msra.mxu0 %v499
  %715 = vmatprep.subr.bf16.mxu0 0
  %716 = vmatpush1.bf16.msra.mxu0 %v500
  %717 = vmatprep.mubr.bf16.mxu0 %v172
  %718 = vmatmul.mubr.bf16.gmra.mrb[0].mxu0 %v171
  %v719 = vpop.f32.mrb[0].mxu0
  %v720 = vadd.f32 %v680, %v719
  %v721 = vpop.f32.mrb[0].mxu0
  %v722 = vpop.f32.mrb[0].mxu0
  %v723 = vpop.f32.mrb[0].mxu0
  %724 = vdwg.mxu0
  %725 = vst [vmem:[%s3] sm:$0xff] %v720
  // Predicated region
  $region14: #{_lambda_.9} parent=0 // pred_check
    _
  $region15: #{_lambda_.9} parent=0 // pred_check_branch
    %727 = sbr.rel (0) target = $region17
  $region16: #{_lambda_.9} parent=0 // pred_region
    _
  $region17: #{_lambda_.9} parent=0 // pred_fallthru
    _
  // Predicated region
  $region18: #{_lambda_.9} parent=0 // pred_check
    _
  $region19: #{_lambda_.9} parent=0 // pred_check_branch
    %729 = sbr.rel (0) target = $region21
  $region20: #{_lambda_.9} parent=0 // pred_region
    _
  $region21: #{_lambda_.9} parent=0 // pred_fallthru
    _

</llo_original>
